<compile_context>
chip_gen: v6e
topology: v6e:2x2x1
jax: 0.10.0
libtpu: 0.0.40
codegen_flags: <defaults>
</compile_context>

<pallas_src>
import functools

import jax
import jax.numpy as jnp
from jax.experimental import pallas as pl
from jax.experimental.pallas import tpu as pltpu

LANE = 128  # lane-dense padded width for all tiny output heads


def _mosaic_params(*sem):
    # Explicit scoped-VMEM limit: safe on v5e/v6e (128 MiB phys) and v7x (64 MiB phys).
    return pltpu.CompilerParams(
        dimension_semantics=sem,
        vmem_limit_bytes=32 * 1024 * 1024,
    )


# ----------------------------------------------------------------------------
# Conv 3x3 (same padding) without materialized im2col.
#
# Layout trick: the padded image (Hp, Wp, C) is flattened to (Hp*Wp, C) and extended
# with Wp+1 zero rows on both ends.  For flattened padded output index p, tap
# (kh, kw) reads row  p + (kh-1)*Wp + (kw-1)  — a constant offset per tap, so each
# tap is one static slice + one MXU matmul accumulated in f32.  Border outputs are
# garbage and get discarded when the valid H x W region is sliced out afterwards.
# ----------------------------------------------------------------------------
def _conv3x3_relu_kernel(x_ref, w_ref, b_ref, o_ref, *, rows, wp, cin):
    pad0 = wp + 1
    acc = None
    for t in range(9):
        kh, kw = t // 3, t % 3
        d = (kh - 1) * wp + (kw - 1)
        lhs = x_ref[pl.ds(pad0 + d, rows), :].astype(jnp.bfloat16)
        wt = w_ref[pl.ds(t * cin, cin), :].astype(jnp.bfloat16)
        p = jnp.dot(lhs, wt, preferred_element_type=jnp.float32)
        acc = p if acc is None else acc + p
    o_ref[...] = jnp.maximum(acc + b_ref[...], 0.0)


def _rpn_fused_kernel(x_ref, w_ref, b_ref, wh_ref, bh_ref, o_ref, *, rows, wp, cf):
    # conv3x3 -> ReLU (mid kept in VMEM/vregs) -> fused [score|loc] 1x1 heads (padded
    # to LANE columns, single lane-dense store).
    pad0 = wp + 1
    acc = None
    for t in range(9):
        kh, kw = t // 3, t % 3
        d = (kh - 1) * wp + (kw - 1)
        lhs = x_ref[pl.ds(pad0 + d, rows), :].astype(jnp.bfloat16)
        wt = w_ref[pl.ds(t * cf, cf), :].astype(jnp.bfloat16)
        p = jnp.dot(lhs, wt, preferred_element_type=jnp.float32)
        acc = p if acc is None else acc + p
    mid = jnp.maximum(acc + b_ref[...], 0.0)
    out = jnp.dot(mid.astype(jnp.bfloat16), wh_ref[...].astype(jnp.bfloat16),
                  preferred_element_type=jnp.float32) + bh_ref[...]
    o_ref[...] = out


def _conv_layout(x_nhwc):
    """(N,H,W,C) -> zero-extended flattened padded layout (N, Hp*Wp + 2*(Wp+1), C)."""
    N, H, W, C = x_nhwc.shape
    Hp, Wp = H + 2, W + 2
    xp = jnp.pad(x_nhwc, ((0, 0), (1, 1), (1, 1), (0, 0)))
    flat = xp.reshape(N, Hp * Wp, C)
    pad0 = Wp + 1
    big = jnp.pad(flat, ((0, 0), (pad0, pad0), (0, 0)))
    return big, Hp, Wp


def _conv_valid(out, Hp, Wp):
    """(N, Hp*Wp, C) conv output on the padded grid -> valid (N, H, W, C)."""
    N = out.shape[0]
    return out.reshape(N, Hp, Wp, out.shape[-1])[:, 1:Hp - 1, 1:Wp - 1, :]


def pallas_conv3x3_relu(x_nhwc, w, b):
    # TODO(synk): for large feature maps, additionally band the per-image rows with a
    # halo'd index_map; grid over N is enough at these sizes and shards across TCs.
    N, H, W, Cin = x_nhwc.shape
    Cout = w.shape[1]
    big, Hp, Wp = _conv_layout(x_nhwc)
    rows = Hp * Wp
    hbig = big.shape[1]
    out = pl.pallas_call(
        functools.partial(_conv3x3_relu_kernel, rows=rows, wp=Wp, cin=Cin),
        out_shape=jax.ShapeDtypeStruct((N, rows, Cout), jnp.float32),
        grid=(N,),
        in_specs=[
            pl.BlockSpec((None, hbig, Cin), lambda n: (n, 0, 0)),
            pl.BlockSpec((9 * Cin, Cout), lambda n: (0, 0)),
            pl.BlockSpec((1, Cout), lambda n: (0, 0)),
        ],
        out_specs=pl.BlockSpec((None, rows, Cout), lambda n: (n, 0, 0)),
        compiler_params=_mosaic_params("parallel"),
    )(big, w, b)
    return _conv_valid(out, Hp, Wp)


def pallas_rpn_conv_heads(feature, w_rpn, b_rpn, w_heads, b_heads):
    N, H, W, Cf = feature.shape
    big, Hp, Wp = _conv_layout(feature)
    rows = Hp * Wp
    hbig = big.shape[1]
    out = pl.pallas_call(
        functools.partial(_rpn_fused_kernel, rows=rows, wp=Wp, cf=Cf),
        out_shape=jax.ShapeDtypeStruct((N, rows, LANE), jnp.float32),
        grid=(N,),
        in_specs=[
            pl.BlockSpec((None, hbig, Cf), lambda n: (n, 0, 0)),
            pl.BlockSpec((9 * Cf, Cf), lambda n: (0, 0)),
            pl.BlockSpec((1, Cf), lambda n: (0, 0)),
            pl.BlockSpec((Cf, LANE), lambda n: (0, 0)),
            pl.BlockSpec((1, LANE), lambda n: (0, 0)),
        ],
        out_specs=pl.BlockSpec((None, rows, LANE), lambda n: (n, 0, 0)),
        compiler_params=_mosaic_params("parallel"),
    )(big, w_rpn, b_rpn, w_heads, b_heads)
    return _conv_valid(out, Hp, Wp)     # (N, H, W, LANE)


# ----------------------------------------------------------------------------
# Lane-dense box decode: boxes in transposed (4, Rpad) layout, constants baked in.
# ----------------------------------------------------------------------------
def _decode_kernel(base_ref, loc_ref, out_ref, *, std, mean, clamp_y, clamp_x):
    y1 = base_ref[0:1, :]
    x1 = base_ref[1:2, :]
    y2 = base_ref[2:3, :]
    x2 = base_ref[3:4, :]
    dy = loc_ref[0:1, :] * std[0] + mean[0]
    dx = loc_ref[1:2, :] * std[1] + mean[1]
    dh = loc_ref[2:3, :] * std[2] + mean[2]
    dw = loc_ref[3:4, :] * std[3] + mean[3]
    h = y2 - y1
    w = x2 - x1
    cy = y1 + 0.5 * h
    cx = x1 + 0.5 * w
    ncy = dy * h + cy
    ncx = dx * w + cx
    nh = jnp.exp(dh) * h
    nw = jnp.exp(dw) * w
    # Lane-dense row stores (full 128-lane width per store).
    out_ref[0:1, :] = jnp.clip(ncy - 0.5 * nh, 0.0, clamp_y)
    out_ref[1:2, :] = jnp.clip(ncx - 0.5 * nw, 0.0, clamp_x)
    out_ref[2:3, :] = jnp.clip(ncy + 0.5 * nh, 0.0, clamp_y)
    out_ref[3:4, :] = jnp.clip(ncx + 0.5 * nw, 0.0, clamp_x)


def pallas_decode_boxes(base, loc, std, mean, clamp_y, clamp_x):
    R = base.shape[0]
    TC = 512
    Rpad = ((R + TC - 1) // TC) * TC
    baseT = jnp.zeros((4, Rpad), jnp.float32).at[:, :R].set(base.T)
    locT = jnp.zeros((4, Rpad), jnp.float32).at[:, :R].set(loc.T)
    kern = functools.partial(
        _decode_kernel,
        std=tuple(float(s) for s in std),
        mean=tuple(float(m) for m in mean),
        clamp_y=float(clamp_y), clamp_x=float(clamp_x))
    outT = pl.pallas_call(
        kern,
        out_shape=jax.ShapeDtypeStruct((4, Rpad), jnp.float32),
        grid=(Rpad // TC,),
        in_specs=[
            pl.BlockSpec((4, TC), lambda i: (0, i)),
            pl.BlockSpec((4, TC), lambda i: (0, i)),
        ],
        out_specs=pl.BlockSpec((4, TC), lambda i: (0, i)),
        compiler_params=_mosaic_params("parallel"),
    )(baseT, locT)
    return outT[:, :R].T


# ----------------------------------------------------------------------------
# Fused detection head: fc -> ReLU -> concatenated [loc|score] heads (padded to 128
# lanes) -> masked softmax over the score columns, all in one kernel / one store.
# ----------------------------------------------------------------------------
def _head_kernel(x_ref, wf_ref, bf_ref, wh_ref, bh_ref, o_ref, *, n_classes):
    h = jnp.dot(x_ref[...].astype(jnp.bfloat16), wf_ref[...].astype(jnp.bfloat16),
                preferred_element_type=jnp.float32) + bf_ref[...]
    h = jnp.maximum(h, 0.0)
    out = jnp.dot(h.astype(jnp.bfloat16), wh_ref[...].astype(jnp.bfloat16),
                  preferred_element_type=jnp.float32) + bh_ref[...]
    C = n_classes
    col = jax.lax.broadcasted_iota(jnp.int32, out.shape, 1)
    smask = (col >= 4 * C) & (col < 5 * C)          # score columns
    s = jnp.where(smask, out, -1e30)
    m = jnp.max(s, axis=-1, keepdims=True)
    e = jnp.where(smask, jnp.exp(s - m), 0.0)
    denom = jnp.sum(e, axis=-1, keepdims=True)
    prob = e * pl.reciprocal(denom, approx=True)
    # cols [0, 4C): roi_cls_loc ; cols [4C, 5C): softmax prob ; rest: zeros.
    o_ref[...] = jnp.where(smask, prob, out)


def pallas_head(flat, w_fc, b_fc, w_heads, b_heads, n_classes):
    R, K = flat.shape
    Hd = w_fc.shape[1]
    TM = 128                                   # pad rows to full MXU row occupancy
    Rpad = ((R + TM - 1) // TM) * TM
    xpad = jnp.zeros((Rpad, K), jnp.float32).at[:R].set(flat)
    out = pl.pallas_call(
        functools.partial(_head_kernel, n_classes=n_classes),
        out_shape=jax.ShapeDtypeStruct((Rpad, LANE), jnp.float32),
        grid=(Rpad // TM,),
        in_specs=[
            pl.BlockSpec((TM, K), lambda i: (i, 0)),
            pl.BlockSpec((K, Hd), lambda i: (0, 0)),
            pl.BlockSpec((1, Hd), lambda i: (0, 0)),
            pl.BlockSpec((Hd, LANE), lambda i: (0, 0)),
            pl.BlockSpec((1, LANE), lambda i: (0, 0)),
        ],
        out_specs=pl.BlockSpec((TM, LANE), lambda i: (i, 0)),
        compiler_params=_mosaic_params("parallel"),
    )(xpad, w_fc, b_fc, w_heads, b_heads)
    roi_cls_loc = out[:R, : 4 * n_classes]
    prob = out[:R, 4 * n_classes: 5 * n_classes]
    return roi_cls_loc, prob


# ----------------------------------------------------------------------------
# Plain-JAX glue
# ----------------------------------------------------------------------------
def make_anchors(H, W, sizes):
    ys = jnp.arange(H, dtype=jnp.float32) + 0.5
    xs = jnp.arange(W, dtype=jnp.float32) + 0.5
    cy, cx = jnp.meshgrid(ys, xs, indexing="ij")
    cy = cy[..., None]
    cx = cx[..., None]
    s = jnp.asarray(sizes, jnp.float32)[None, None, :]
    anchors = jnp.stack([cy - s / 2, cx - s / 2, cy + s / 2, cx + s / 2], axis=-1)
    return anchors.reshape(H * W * len(sizes), 4)


def roi_pool(feature_nhwc, rois, roi_indices, pool_size, spatial_scale):
    # TODO(synk): exact quantized RoIPool max-over-bin replaced by nearest-sample gather;
    # a PrefetchScalarGridSpec DMA-gather version would keep pooled data in VMEM for the fc.
    N, H, W, C = feature_nhwc.shape
    y1, x1, y2, x2 = rois[:, 0], rois[:, 1], rois[:, 2], rois[:, 3]
    t = (jnp.arange(pool_size, dtype=jnp.float32) + 0.5) / pool_size
    ys = y1[:, None] + (y2 - y1)[:, None] * t[None, :]
    xs = x1[:, None] + (x2 - x1)[:, None] * t[None, :]
    yi = jnp.clip(jnp.floor(ys * spatial_scale), 0, H - 1).astype(jnp.int32)
    xi = jnp.clip(jnp.floor(xs * spatial_scale), 0, W - 1).astype(jnp.int32)
    lin = (roi_indices[:, None, None] * H + yi[:, :, None]) * W + xi[:, None, :]
    flat = feature_nhwc.reshape(N * H * W, C)
    pooled = jnp.take(flat, lin.reshape(-1), axis=0).reshape(
        rois.shape[0], pool_size, pool_size, C)
    return pooled


# ----------------------------------------------------------------------------
# Model
# ----------------------------------------------------------------------------
class FasterRCNNBottleneckPallas:
    """Concrete, synthetic Faster R-CNN bottleneck (inference / eval path)."""

    def __init__(self, n_classes=5, feat_channels=32, n_anchor=3,
                 anchor_sizes=(4.0, 8.0, 16.0), pooling_size=4,
                 spatial_scale=1.0, hidden=64, rois_per_image=8,
                 in_channels=4, roi_sigma=1.0):
        self.n_classes = n_classes
        self.feat_channels = feat_channels
        self.n_anchor = n_anchor
        self.anchor_sizes = anchor_sizes
        self.pooling_size = pooling_size
        self.spatial_scale = spatial_scale
        self.hidden = hidden
        self.rois_per_image = rois_per_image
        self.roi_sigma = roi_sigma
        self.loc_normalize_mean = (0.0, 0.0, 0.0, 0.0)
        self.loc_normalize_std = (0.1, 0.1, 0.2, 0.2)
        self.nms_thresh = 0.3
        self.score_thresh = 0.05

        Cf, Cin, A, P, H_, C = (feat_channels, in_channels, n_anchor,
                                pooling_size, hidden, n_classes)
        assert 6 * A <= LANE and 5 * C <= LANE

        key = jax.random.PRNGKey(0)
        ks = jax.random.split(key, 14)

        def init(k, shape, s=0.05):
            return jax.random.normal(k, shape, jnp.float32) * s

        w_rpn_score = init(ks[2], (Cf, A * 2))
        w_rpn_loc = init(ks[3], (Cf, A * 4))
        w_loc = init(ks[5], (H_, C * 4))
        w_score = init(ks[6], (H_, C))

        # Concatenated, lane-dense (128-wide) head weights: unmasked stores + one matmul.
        w_rpn_heads = jnp.zeros((Cf, LANE), jnp.float32)
        w_rpn_heads = w_rpn_heads.at[:, :2 * A].set(w_rpn_score)
        w_rpn_heads = w_rpn_heads.at[:, 2 * A:6 * A].set(w_rpn_loc)
        w_head_cat = jnp.zeros((H_, LANE), jnp.float32)
        w_head_cat = w_head_cat.at[:, :4 * C].set(w_loc)
        w_head_cat = w_head_cat.at[:, 4 * C:5 * C].set(w_score)

        self.params = {
            # extractor: 3x3 conv Cin -> Cf (+ReLU)
            "w_ext": init(ks[0], (9 * Cin, Cf)),
            "b_ext": jnp.zeros((1, Cf), jnp.float32),
            # RPN: 3x3 mid conv Cf -> Cf (+ReLU), fused [score|loc] heads
            "w_rpn": init(ks[1], (9 * Cf, Cf)),
            "b_rpn": jnp.zeros((1, Cf), jnp.float32),
            "w_rpn_heads": w_rpn_heads,
            "b_rpn_heads": jnp.zeros((1, LANE), jnp.float32),
            # head: fc + fused [loc|score] heads
            "w_fc": init(ks[4], (P * P * Cf, H_)),
            "b_fc": jnp.zeros((1, H_), jnp.float32),
            "w_head_cat": w_head_cat,
            "b_head_cat": jnp.zeros((1, LANE), jnp.float32),
        }

    # -- stage 1 --------------------------------------------------------------
    def feature_extraction_layer(self, x_nchw):
        x_nhwc = jnp.transpose(x_nchw, (0, 2, 3, 1))
        return pallas_conv3x3_relu(x_nhwc, self.params["w_ext"], self.params["b_ext"])

    # -- stage 2 (simplified RPN: proposals only, eval mode) -------------------
    def rpn(self, feature, img_size, scale):
        N, H, W, Cf = feature.shape
        A = self.n_anchor
        head = pallas_rpn_conv_heads(feature, self.params["w_rpn"], self.params["b_rpn"],
                                     self.params["w_rpn_heads"], self.params["b_rpn_heads"])
        head = head.reshape(N, H * W, LANE)
        rpn_score = head[..., :2 * A].reshape(N, H * W * A, 2)
        rpn_loc = head[..., 2 * A:6 * A].reshape(N * H * W * A, 4)

        anchors = make_anchors(H, W, self.anchor_sizes)
        base = jnp.tile(anchors, (N, 1))
        # std=1 / mean=0 baked in -> the normalization mul/add constant-folds away.
        proposals = pallas_decode_boxes(base, rpn_loc,
                                        (1.0, 1.0, 1.0, 1.0), (0.0, 0.0, 0.0, 0.0),
                                        clamp_y=img_size[0], clamp_x=img_size[1])
        proposals = proposals.reshape(N, H * W * A, 4)

        objectness = rpn_score[..., 1] - rpn_score[..., 0]
        # TODO(synk): proposal min-size filtering / NMS produce dynamic shapes; fixed top-k only.
        _, idx = jax.lax.top_k(objectness, self.rois_per_image)
        rois = jnp.take_along_axis(proposals, idx[..., None], axis=1)
        rois = rois.reshape(N * self.rois_per_image, 4)
        roi_indices = jnp.repeat(jnp.arange(N, dtype=jnp.int32), self.rois_per_image)
        return rois, roi_indices

    # -- stage 3 ---------------------------------------------------------------
    def roi_pooling_layer(self, feature, rois, roi_indices):
        return roi_pool(feature, rois, roi_indices, self.pooling_size, self.spatial_scale)

    def bbox_regression_and_classification_layer(self, roi_pool_feat):
        R = roi_pool_feat.shape[0]
        flat = roi_pool_feat.reshape(R, -1)
        # Fused fc + heads + softmax: returns (roi_cls_loc, softmax(roi_score)).
        return pallas_head(flat, self.params["w_fc"], self.params["b_fc"],
                           self.params["w_head_cat"], self.params["b_head_cat"],
                           self.n_classes)

    # -- post-processing / suppression -----------------------------------------
    def _suppress(self, cls_bbox, prob):
        # TODO(synk): per-class score-threshold + NMS produce dynamic shapes; replaced by a
        # fixed-size per-RoI argmax over foreground classes (no Pallas equivalent for NMS).
        R, C = prob.shape
        fg = prob[:, 1:]
        label = jnp.argmax(fg, axis=1)
        score = jnp.take_along_axis(fg, label[:, None], axis=1)[:, 0]
        bbox = cls_bbox.reshape(R, C, 4)
        bbox = jnp.take_along_axis(bbox, (label + 1)[:, None, None], axis=1)[:, 0, :]
        return bbox, label.astype(jnp.int32), score

    # -- full eval forward -------------------------------------------------------
    def forward(self, x, gt_bboxes=None, gt_labels=None, scale=1.0, ori_size=None):
        img_size = (x.shape[2], x.shape[3])
        if ori_size is None:
            ori_size = img_size
        feature = self.feature_extraction_layer(x)                     # (N,H,W,Cf)
        rois, roi_indices = self.rpn(feature, img_size, scale)
        pooled = self.roi_pooling_layer(feature, rois, roi_indices)
        roi_cls_loc, prob = self.bbox_regression_and_classification_layer(pooled)

        R = roi_cls_loc.shape[0]
        C = self.n_classes
        roi = rois / scale
        roi_exp = jnp.repeat(roi, C, axis=0)                           # (R*C, 4)
        loc_rs = roi_cls_loc.reshape(R * C, 4)
        cls_bbox = pallas_decode_boxes(roi_exp, loc_rs,
                                       self.loc_normalize_std, self.loc_normalize_mean,
                                       clamp_y=ori_size[0], clamp_x=ori_size[1])
        cls_bbox = cls_bbox.reshape(R, C * 4)
        return self._suppress(cls_bbox, prob)


# ----------------------------------------------------------------------------
if __name__ == "__main__":
    model = FasterRCNNBottleneckPallas(n_classes=5, feat_channels=32, pooling_size=4,
                                       spatial_scale=1.0, hidden=64, rois_per_image=8,
                                       in_channels=4)
    key = jax.random.PRNGKey(0)
    x = jax.random.normal(key, (2, 4, 16, 16), jnp.float32)   # NCHW, like the PyTorch module
    bbox, label, score = model.forward(x, scale=1.0, ori_size=(16, 16))
    jax.block_until_ready((bbox, label, score))
    assert bbox.shape == (16, 4) and label.shape == (16,) and score.shape == (16,)
    print("KERNEL_OK")
</pallas_src>

<mosaic_0001>
module attributes {stable_mosaic.version = 11 : i64} {
  func.func @_conv3x3_relu_kernel(%arg0: i32, %arg1: memref<1x362x4xf32, #tpu.memory_space<vmem>>, %arg2: memref<36x32xf32, #tpu.memory_space<vmem>>, %arg3: memref<1x32xf32, #tpu.memory_space<vmem>>, %arg4: memref<1x324x32xf32, #tpu.memory_space<vmem>>) attributes {dimension_semantics = [#tpu.dimension_semantics<parallel>], iteration_bounds = array<i64: 2>, scalar_prefetch = 0 : i64, scratch_operands = 0 : i64, tpu.core_type = #tpu.core_type<tc>, window_params = [{transform_indices = @transform_0, window_bounds = array<i64: 1, 362, 4>}, {pipeline_mode = #tpu.pipeline_mode<synchronous>, transform_indices = @transform_1, window_bounds = array<i64: 36, 32>}, {pipeline_mode = #tpu.pipeline_mode<synchronous>, transform_indices = @transform_2, window_bounds = array<i64: 1, 32>}, {transform_indices = @transform_3, window_bounds = array<i64: 1, 324, 32>}]} {
    %c0 = arith.constant 0 : index
    %c0_0 = arith.constant 0 : index
    %c0_1 = arith.constant 0 : index
    %0 = vector.load %arg1[%c0, %c0_0, %c0_1] : memref<1x362x4xf32, #tpu.memory_space<vmem>>, vector<1x324x4xf32>
    %1 = vector.shape_cast %0 : vector<1x324x4xf32> to vector<324x4xf32>
    %2 = arith.truncf %1 : vector<324x4xf32> to vector<324x4xbf16>
    %c0_2 = arith.constant 0 : index
    %c0_3 = arith.constant 0 : index
    %3 = vector.load %arg2[%c0_2, %c0_3] : memref<36x32xf32, #tpu.memory_space<vmem>>, vector<4x32xf32>
    %4 = arith.truncf %3 : vector<4x32xf32> to vector<4x32xbf16>
    %cst = arith.constant dense<0.000000e+00> : vector<324x32xf32>
    %5 = tpu.matmul %2, %4, %cst {dimension_numbers = #tpu.dot_dimension_numbers<[1], [0], [0], [1], [0, 0, 1, 1], [], []>} : vector<324x4xbf16>, vector<4x32xbf16>, vector<324x32xf32> -> vector<324x32xf32>
    %c0_4 = arith.constant 0 : index
    %c1 = arith.constant 1 : index
    %c0_5 = arith.constant 0 : index
    %6 = vector.load %arg1[%c0_4, %c1, %c0_5] : memref<1x362x4xf32, #tpu.memory_space<vmem>>, vector<1x324x4xf32>
    %7 = vector.shape_cast %6 : vector<1x324x4xf32> to vector<324x4xf32>
    %8 = arith.truncf %7 : vector<324x4xf32> to vector<324x4xbf16>
    %c4 = arith.constant 4 : index
    %c0_6 = arith.constant 0 : index
    %9 = vector.load %arg2[%c4, %c0_6] : memref<36x32xf32, #tpu.memory_space<vmem>>, vector<4x32xf32>
    %10 = arith.truncf %9 : vector<4x32xf32> to vector<4x32xbf16>
    %cst_7 = arith.constant dense<0.000000e+00> : vector<324x32xf32>
    %11 = tpu.matmul %8, %10, %cst_7 {dimension_numbers = #tpu.dot_dimension_numbers<[1], [0], [0], [1], [0, 0, 1, 1], [], []>} : vector<324x4xbf16>, vector<4x32xbf16>, vector<324x32xf32> -> vector<324x32xf32>
    %12 = arith.addf %5, %11 : vector<324x32xf32>
    %c0_8 = arith.constant 0 : index
    %c2 = arith.constant 2 : index
    %c0_9 = arith.constant 0 : index
    %13 = vector.load %arg1[%c0_8, %c2, %c0_9] : memref<1x362x4xf32, #tpu.memory_space<vmem>>, vector<1x324x4xf32>
    %14 = vector.shape_cast %13 : vector<1x324x4xf32> to vector<324x4xf32>
    %15 = arith.truncf %14 : vector<324x4xf32> to vector<324x4xbf16>
    %c8 = arith.constant 8 : index
    %c0_10 = arith.constant 0 : index
    %16 = vector.load %arg2[%c8, %c0_10] : memref<36x32xf32, #tpu.memory_space<vmem>>, vector<4x32xf32>
    %17 = arith.truncf %16 : vector<4x32xf32> to vector<4x32xbf16>
    %cst_11 = arith.constant dense<0.000000e+00> : vector<324x32xf32>
    %18 = tpu.matmul %15, %17, %cst_11 {dimension_numbers = #tpu.dot_dimension_numbers<[1], [0], [0], [1], [0, 0, 1, 1], [], []>} : vector<324x4xbf16>, vector<4x32xbf16>, vector<324x32xf32> -> vector<324x32xf32>
    %19 = arith.addf %12, %18 : vector<324x32xf32>
    %c0_12 = arith.constant 0 : index
    %c18 = arith.constant 18 : index
    %c0_13 = arith.constant 0 : index
    %20 = vector.load %arg1[%c0_12, %c18, %c0_13] : memref<1x362x4xf32, #tpu.memory_space<vmem>>, vector<1x324x4xf32>
    %21 = vector.shape_cast %20 : vector<1x324x4xf32> to vector<324x4xf32>
    %22 = arith.truncf %21 : vector<324x4xf32> to vector<324x4xbf16>
    %c12 = arith.constant 12 : index
    %c0_14 = arith.constant 0 : index
    %23 = vector.load %arg2[%c12, %c0_14] : memref<36x32xf32, #tpu.memory_space<vmem>>, vector<4x32xf32>
    %24 = arith.truncf %23 : vector<4x32xf32> to vector<4x32xbf16>
    %cst_15 = arith.constant dense<0.000000e+00> : vector<324x32xf32>
    %25 = tpu.matmul %22, %24, %cst_15 {dimension_numbers = #tpu.dot_dimension_numbers<[1], [0], [0], [1], [0, 0, 1, 1], [], []>} : vector<324x4xbf16>, vector<4x32xbf16>, vector<324x32xf32> -> vector<324x32xf32>
    %26 = arith.addf %19, %25 : vector<324x32xf32>
    %c0_16 = arith.constant 0 : index
    %c19 = arith.constant 19 : index
    %c0_17 = arith.constant 0 : index
    %27 = vector.load %arg1[%c0_16, %c19, %c0_17] : memref<1x362x4xf32, #tpu.memory_space<vmem>>, vector<1x324x4xf32>
    %28 = vector.shape_cast %27 : vector<1x324x4xf32> to vector<324x4xf32>
    %29 = arith.truncf %28 : vector<324x4xf32> to vector<324x4xbf16>
    %c16 = arith.constant 16 : index
    %c0_18 = arith.constant 0 : index
    %30 = vector.load %arg2[%c16, %c0_18] : memref<36x32xf32, #tpu.memory_space<vmem>>, vector<4x32xf32>
    %31 = arith.truncf %30 : vector<4x32xf32> to vector<4x32xbf16>
    %cst_19 = arith.constant dense<0.000000e+00> : vector<324x32xf32>
    %32 = tpu.matmul %29, %31, %cst_19 {dimension_numbers = #tpu.dot_dimension_numbers<[1], [0], [0], [1], [0, 0, 1, 1], [], []>} : vector<324x4xbf16>, vector<4x32xbf16>, vector<324x32xf32> -> vector<324x32xf32>
    %33 = arith.addf %26, %32 : vector<324x32xf32>
    %c0_20 = arith.constant 0 : index
    %c20 = arith.constant 20 : index
    %c0_21 = arith.constant 0 : index
    %34 = vector.load %arg1[%c0_20, %c20, %c0_21] : memref<1x362x4xf32, #tpu.memory_space<vmem>>, vector<1x324x4xf32>
    %35 = vector.shape_cast %34 : vector<1x324x4xf32> to vector<324x4xf32>
    %36 = arith.truncf %35 : vector<324x4xf32> to vector<324x4xbf16>
    %c20_22 = arith.constant 20 : index
    %c0_23 = arith.constant 0 : index
    %37 = vector.load %arg2[%c20_22, %c0_23] : memref<36x32xf32, #tpu.memory_space<vmem>>, vector<4x32xf32>
    %38 = arith.truncf %37 : vector<4x32xf32> to vector<4x32xbf16>
    %cst_24 = arith.constant dense<0.000000e+00> : vector<324x32xf32>
    %39 = tpu.matmul %36, %38, %cst_24 {dimension_numbers = #tpu.dot_dimension_numbers<[1], [0], [0], [1], [0, 0, 1, 1], [], []>} : vector<324x4xbf16>, vector<4x32xbf16>, vector<324x32xf32> -> vector<324x32xf32>
    %40 = arith.addf %33, %39 : vector<324x32xf32>
    %c0_25 = arith.constant 0 : index
    %c36 = arith.constant 36 : index
    %c0_26 = arith.constant 0 : index
    %41 = vector.load %arg1[%c0_25, %c36, %c0_26] : memref<1x362x4xf32, #tpu.memory_space<vmem>>, vector<1x324x4xf32>
    %42 = vector.shape_cast %41 : vector<1x324x4xf32> to vector<324x4xf32>
    %43 = arith.truncf %42 : vector<324x4xf32> to vector<324x4xbf16>
    %c24 = arith.constant 24 : index
    %c0_27 = arith.constant 0 : index
    %44 = vector.load %arg2[%c24, %c0_27] : memref<36x32xf32, #tpu.memory_space<vmem>>, vector<4x32xf32>
    %45 = arith.truncf %44 : vector<4x32xf32> to vector<4x32xbf16>
    %cst_28 = arith.constant dense<0.000000e+00> : vector<324x32xf32>
    %46 = tpu.matmul %43, %45, %cst_28 {dimension_numbers = #tpu.dot_dimension_numbers<[1], [0], [0], [1], [0, 0, 1, 1], [], []>} : vector<324x4xbf16>, vector<4x32xbf16>, vector<324x32xf32> -> vector<324x32xf32>
    %47 = arith.addf %40, %46 : vector<324x32xf32>
    %c0_29 = arith.constant 0 : index
    %c37 = arith.constant 37 : index
    %c0_30 = arith.constant 0 : index
    %48 = vector.load %arg1[%c0_29, %c37, %c0_30] : memref<1x362x4xf32, #tpu.memory_space<vmem>>, vector<1x324x4xf32>
    %49 = vector.shape_cast %48 : vector<1x324x4xf32> to vector<324x4xf32>
    %50 = arith.truncf %49 : vector<324x4xf32> to vector<324x4xbf16>
    %c28 = arith.constant 28 : index
    %c0_31 = arith.constant 0 : index
    %51 = vector.load %arg2[%c28, %c0_31] : memref<36x32xf32, #tpu.memory_space<vmem>>, vector<4x32xf32>
    %52 = arith.truncf %51 : vector<4x32xf32> to vector<4x32xbf16>
    %cst_32 = arith.constant dense<0.000000e+00> : vector<324x32xf32>
    %53 = tpu.matmul %50, %52, %cst_32 {dimension_numbers = #tpu.dot_dimension_numbers<[1], [0], [0], [1], [0, 0, 1, 1], [], []>} : vector<324x4xbf16>, vector<4x32xbf16>, vector<324x32xf32> -> vector<324x32xf32>
    %54 = arith.addf %47, %53 : vector<324x32xf32>
    %c0_33 = arith.constant 0 : index
    %c38 = arith.constant 38 : index
    %c0_34 = arith.constant 0 : index
    %55 = vector.load %arg1[%c0_33, %c38, %c0_34] : memref<1x362x4xf32, #tpu.memory_space<vmem>>, vector<1x324x4xf32>
    %56 = vector.shape_cast %55 : vector<1x324x4xf32> to vector<324x4xf32>
    %57 = arith.truncf %56 : vector<324x4xf32> to vector<324x4xbf16>
    %c32 = arith.constant 32 : index
    %c0_35 = arith.constant 0 : index
    %58 = vector.load %arg2[%c32, %c0_35] : memref<36x32xf32, #tpu.memory_space<vmem>>, vector<4x32xf32>
    %59 = arith.truncf %58 : vector<4x32xf32> to vector<4x32xbf16>
    %cst_36 = arith.constant dense<0.000000e+00> : vector<324x32xf32>
    %60 = tpu.matmul %57, %59, %cst_36 {dimension_numbers = #tpu.dot_dimension_numbers<[1], [0], [0], [1], [0, 0, 1, 1], [], []>} : vector<324x4xbf16>, vector<4x32xbf16>, vector<324x32xf32> -> vector<324x32xf32>
    %61 = arith.addf %54, %60 : vector<324x32xf32>
    %c0_37 = arith.constant 0 : index
    %c0_38 = arith.constant 0 : index
    %62 = vector.load %arg3[%c0_37, %c0_38] : memref<1x32xf32, #tpu.memory_space<vmem>>, vector<1x32xf32>
    %63 = vector.broadcast %62 : vector<1x32xf32> to vector<324x32xf32>
    %64 = arith.addf %61, %63 : vector<324x32xf32>
    %cst_39 = arith.constant 0.000000e+00 : f32
    %65 = vector.broadcast %cst_39 : f32 to vector<324x32xf32>
    %66 = arith.maximumf %64, %65 : vector<324x32xf32>
    %c0_40 = arith.constant 0 : index
    %c0_41 = arith.constant 0 : index
    %c0_42 = arith.constant 0 : index
    %67 = vector.load %arg4[%c0_40, %c0_41, %c0_42] : memref<1x324x32xf32, #tpu.memory_space<vmem>>, vector<1x324x32xf32>
    %68 = vector.shape_cast %67 : vector<1x324x32xf32> to vector<324x32xf32>
    %69 = vector.shape_cast %66 : vector<324x32xf32> to vector<1x324x32xf32>
    tpu.vector_store %arg4[%c0_40, %c0_41, %c0_42], %69 {strides = array<i32>} : memref<1x324x32xf32, #tpu.memory_space<vmem>>, vector<1x324x32xf32>,
    return
  }
  func.func @transform_0(%arg0: i32) -> (i32, i32, i32) {
    %c0_i32 = arith.constant 0 : i32
    %c0_i32_0 = arith.constant 0 : i32
    %c0_i32_1 = arith.constant 0 : i32
    return %arg0, %c0_i32, %c0_i32_0 : i32, i32, i32
  }
  func.func @transform_1(%arg0: i32) -> (i32, i32) {
    %c0_i32 = arith.constant 0 : i32
    %c0_i32_0 = arith.constant 0 : i32
    %c0_i32_1 = arith.constant 0 : i32
    return %c0_i32, %c0_i32_0 : i32, i32
  }
  func.func @transform_2(%arg0: i32) -> (i32, i32) {
    %c0_i32 = arith.constant 0 : i32
    %c0_i32_0 = arith.constant 0 : i32
    %c0_i32_1 = arith.constant 0 : i32
    return %c0_i32, %c0_i32_0 : i32, i32
  }
  func.func @transform_3(%arg0: i32) -> (i32, i32, i32) {
    %c0_i32 = arith.constant 0 : i32
    %c0_i32_0 = arith.constant 0 : i32
    %c0_i32_1 = arith.constant 0 : i32
    return %arg0, %c0_i32, %c0_i32_0 : i32, i32, i32
  }
}

</mosaic_0001>

<llo_original>
// kernel: tpu_custom_call.1
$region0: #{tpu_custom_call.1}
  #allocation0 [shape = 'u32[]', space=smem, size = 0x4, offset = 0x4, fixed_abs, tag = 'smem constant byte address 0x4 - core index']
  #allocation1 [shape = 'u32[144,128]{1,0:T(1,128)}', space=vmem, size = 0x12000, scoped, tag = 'internal scratch']
  %s0 = inlined_call_operand.vmem [shape: f32[2,362,4], index: 0, kind: input, shape index: {}]
  %s1 = inlined_call_operand.vmem [shape: f32[36,32], index: 1, kind: input, shape index: {}]
  %s2 = inlined_call_operand.vmem [shape: f32[1,32], index: 2, kind: input, shape index: {}]
  %s3 = inlined_call_operand.vmem [shape: f32[2,324,32], index: 3, kind: output, shape index: {}]
  %s4 = sld [smem:[#allocation0]]
  $region45: #{tpu_custom_call.1} parent=0
    _
  %s6 = ssub.s32 1, %s4
  %s7 = scalar_select 0, %s6, %s4
  loop: start=0, step=1, limit=4
  $region2: #{tpu_custom_call.1} parent=0 // loop_pre_header
    _
  $region3: #{tpu_custom_call.1} parent=0 // loop_header
    %s9 = sphi 0, %s13
    %p10 = scmp.ge.s32.totalorder %s9, 4
    %s19 = sphi 0, %s21
    %s22 = sphi 0, %s19
    %s23 = sphi 0, %s22
    %s39 = sphi 0, %s23
    %s43 = sphi 0, %s43
    %s45 = sphi 0, %s43
    %s46 = sphi 0, %s45
    %s60 = sphi 0, %s46
    %s64 = sphi 0, %s64
    %s66 = sphi 0, %s64
    %s67 = sphi 0, %s66
    %s81 = sphi 0, %s67
    %s87 = sphi 0, %s89
    %s90 = sphi 0, %s87
    %s91 = sphi 0, %s90
    %s107 = sphi 0, %s91
  $region4: #{tpu_custom_call.1} parent=0 // loop_header_branch
    %12 = sbr.rel (%p10) target = $region8
  $region5: #{tpu_custom_call.1} parent=0 // loop_body
    %s14 = ssub.s32 %s9, 1
    %s15 = ssub.s32 %s9, 2
    %s16 = sadd.s32 %s9, 1
    %s17 = ssub.s32 %s9, %s16
    %p18 = scmp.eq.s32.totalorder %s17, 0
    %s20 = sadd.s32 %s19, 1
    %s21 = scalar_select %p18, %s19, %s20
    %p24 = pneg %p18
    %p25 = scmp.eq.s32.totalorder %s9, 1
    %p26 = por %p24, %p25
    %p27 = scmp.ne.s32.totalorder %s19, %s22
    %p28 = scmp.eq.s32.totalorder %s9, 0
    %p29 = por %p27, %p28
    %p30 = scmp.ne.s32.totalorder %s19, %s22
    %p31 = scmp.eq.s32.totalorder %s14, 1
    %p32 = por %p30, %p31
    %p33 = scmp.ne.s32.totalorder %s22, %s23
    %p34 = scmp.eq.s32.totalorder %s14, 0
    %p35 = por %p33, %p34
    %p36 = scmp.ne.s32.totalorder %s22, %s23
    %p37 = scmp.eq.s32.totalorder %s15, 1
    %p38 = por %p36, %p37
    %p40 = scmp.ne.s32.totalorder %s23, %s39
    %p41 = scmp.eq.s32.totalorder %s15, 0
    %p42 = por %p40, %p41
    %s44 = sadd.s32 %s43, 1
    %p47 = scmp.eq.s32.totalorder %s9, 1
    %p48 = scmp.ne.s32.totalorder %s43, %s45
    %p49 = scmp.eq.s32.totalorder %s9, 0
    %p50 = por %p48, %p49
    %p51 = scmp.ne.s32.totalorder %s43, %s45
    %p52 = scmp.eq.s32.totalorder %s14, 1
    %p53 = por %p51, %p52
    %p54 = scmp.ne.s32.totalorder %s45, %s46
    %p55 = scmp.eq.s32.totalorder %s14, 0
    %p56 = por %p54, %p55
    %p57 = scmp.ne.s32.totalorder %s45, %s46
    %p58 = scmp.eq.s32.totalorder %s15, 1
    %p59 = por %p57, %p58
    %p61 = scmp.ne.s32.totalorder %s46, %s60
    %p62 = scmp.eq.s32.totalorder %s15, 0
    %p63 = por %p61, %p62
    %s65 = sadd.s32 %s64, 1
    %p68 = scmp.eq.s32.totalorder %s9, 1
    %p69 = scmp.ne.s32.totalorder %s64, %s66
    %p70 = scmp.eq.s32.totalorder %s9, 0
    %p71 = por %p69, %p70
    %p72 = scmp.ne.s32.totalorder %s64, %s66
    %p73 = scmp.eq.s32.totalorder %s14, 1
    %p74 = por %p72, %p73
    %p75 = scmp.ne.s32.totalorder %s66, %s67
    %p76 = scmp.eq.s32.totalorder %s14, 0
    %p77 = por %p75, %p76
    %p78 = scmp.ne.s32.totalorder %s66, %s67
    %p79 = scmp.eq.s32.totalorder %s15, 1
    %p80 = por %p78, %p79
    %p82 = scmp.ne.s32.totalorder %s67, %s81
    %p83 = scmp.eq.s32.totalorder %s15, 0
    %p84 = por %p82, %p83
    %s85 = ssub.s32 %s9, %s16
    %p86 = scmp.eq.s32.totalorder %s85, 0
    %s88 = sadd.s32 %s87, 1
    %s89 = scalar_select %p86, %s87, %s88
    %p92 = pneg %p86
    %p93 = scmp.eq.s32.totalorder %s9, 1
    %p94 = por %p92, %p93
    %p95 = scmp.ne.s32.totalorder %s87, %s90
    %p96 = scmp.eq.s32.totalorder %s9, 0
    %p97 = por %p95, %p96
    %p98 = scmp.ne.s32.totalorder %s87, %s90
    %p99 = scmp.eq.s32.totalorder %s14, 1
    %p100 = por %p98, %p99
    %p101 = scmp.ne.s32.totalorder %s90, %s91
    %p102 = scmp.eq.s32.totalorder %s14, 0
    %p103 = por %p101, %p102
    %p104 = scmp.ne.s32.totalorder %s90, %s91
    %p105 = scmp.eq.s32.totalorder %s15, 1
    %p106 = por %p104, %p105
    %p108 = scmp.ne.s32.totalorder %s91, %s107
    %p109 = scmp.eq.s32.totalorder %s15, 0
    %p110 = por %p108, %p109
    %p111 = scmp.le.s32.totalorder 1, %s9
    %p112 = scmp.lt.s32.totalorder %s9, 3
    %p113 = pnand %p111, %p112
    %p114 = pneg %p113
    // Predicated region
    $region9: #{tpu_custom_call.1} parent=5 // pred_check
      _
    $region10: #{tpu_custom_call.1} parent=5 // pred_check_branch
      %116 = sbr.rel (%p113) target = $region12
    $region11: #{tpu_custom_call.1} parent=5 // pred_region
      %s117 = ssub.s32 %s9, 1
      // Predicated region
      $region13: #{tpu_custom_call.1} parent=11 // pred_check
        %p118 = pneg %p56
      $region14: #{tpu_custom_call.1} parent=11 // pred_check_branch
        %120 = sbr.rel (%p118) target = $region16
      $region15: #{tpu_custom_call.1} parent=11 // pred_region
        _
      $region16: #{tpu_custom_call.1} parent=11 // pred_fallthru
        _
      // Predicated region
      $region17: #{tpu_custom_call.1} parent=11 // pred_check
        %p121 = pneg %p77
      $region18: #{tpu_custom_call.1} parent=11 // pred_check_branch
        %123 = sbr.rel (%p121) target = $region20
      $region19: #{tpu_custom_call.1} parent=11 // pred_region
        _
      $region20: #{tpu_custom_call.1} parent=11 // pred_fallthru
        _
    $region12: #{tpu_custom_call.1} parent=5 // pred_fallthru
      _
    %p124 = scmp.lt.s32.totalorder %s9, 2
    // Predicated region
    $region21: #{tpu_custom_call.1} parent=5 // pred_check
      %p125 = pneg %p124
    $region22: #{tpu_custom_call.1} parent=5 // pred_check_branch
      %127 = sbr.rel (%p125) target = $region24
    $region23: #{tpu_custom_call.1} parent=5 // pred_region
      // Predicated region
      $region25: #{tpu_custom_call.1} parent=23 // pred_check
        %p128 = pneg %p29
      $region26: #{tpu_custom_call.1} parent=23 // pred_check_branch
        %130 = sbr.rel (%p128) target = $region28
      $region27: #{tpu_custom_call.1} parent=23 // pred_region
        %p131 = scmp.lt.s32.totalorder %s9, 1
        %s132 = scalar_select %p131, %s9, 1
        %s133 = smul.addr %s132, 46
        %s134 = smul.addr %s133, 8
        %s135 = scalar_lea.vmem %s0, %s134
      $region28: #{tpu_custom_call.1} parent=23 // pred_fallthru
        _
    $region24: #{tpu_custom_call.1} parent=5 // pred_fallthru
      _
    %p136 = scmp.le.s32.totalorder 1, %s9
    %p137 = scmp.lt.s32.totalorder %s9, 3
    %p138 = pnand %p136, %p137
    %p139 = pneg %p138
    // Predicated region
    $region29: #{tpu_custom_call.1} parent=5 // pred_check
      _
    $region30: #{tpu_custom_call.1} parent=5 // pred_check_branch
      %141 = sbr.rel (%p138) target = $region32
    $region31: #{tpu_custom_call.1} parent=5 // pred_region
      %s142 = ssub.s32 %s9, 1
      %p143 = scmp.lt.s32.totalorder %s14, 1
      %s144 = scalar_select %p143, %s14, 1
      %s145 = smul.addr %s144, 46
      %s146 = smul.addr %s145, 8
      %s147 = scalar_lea.vmem %s0, %s146
      %p148 = pneg %p35
      %p149 = pneg %p32
      %p150 = pneg %p56
      %p151 = pneg %p53
      %p152 = pneg %p77
      %p153 = pneg %p74
      %p154 = pneg %p103
      %p155 = pneg %p100
      %p156 = scmp.lt.s32.totalorder %s14, 1
      %s157 = scalar_select %p156, %s14, 1
      %s158 = smul.addr %s157, 41
      %s159 = smul.addr %s158, 8
      %s160 = scalar_lea.vmem %s3, %s159
      %p161 = scmp.lt.s32.totalorder %s14, 1
      %s162 = scalar_select %p161, %s14, 1
      %s163 = smul.addr %s162, 46
      %s164 = smul.addr %s163, 8
      %s165 = scalar_lea.vmem %s0, %s164
      %p166 = scmp.lt.s32.totalorder %s14, 1
      %s167 = scalar_select %p166, %s14, 1
      %s168 = smul.addr %s167, 41
      %s169 = smul.addr %s168, 8
      %s170 = scalar_lea.vmem %s3, %s169
      %v172 = vld [vmem:[%s165] sm:$0xff]
      %v173 = vld [vmem:[%s165 + $0x8] sm:$0xff]
      %v174 = vld [vmem:[%s165 + $0x10] sm:$0xff]
      %v175 = vld [vmem:[%s165 + $0x18] sm:$0xff]
      %v176 = vld [vmem:[%s165 + $0x20] sm:$0xff]
      %v177 = vld [vmem:[%s165 + $0x28] sm:$0xff]
      %v178 = vld [vmem:[%s165 + $0x30] sm:$0xff]
      %v179 = vld [vmem:[%s165 + $0x38] sm:$0xff]
      %v180 = vld [vmem:[%s165 + $0x40] sm:$0xff]
      %v181 = vld [vmem:[%s165 + $0x48] sm:$0xff]
      %v182 = vld [vmem:[%s165 + $0x50] sm:$0xff]
      %v183 = vld [vmem:[%s165 + $0x58] sm:$0xff]
      %v184 = vld [vmem:[%s165 + $0x60] sm:$0xff]
      %v185 = vld [vmem:[%s165 + $0x68] sm:$0xff]
      %v186 = vld [vmem:[%s165 + $0x70] sm:$0xff]
      %v187 = vld [vmem:[%s165 + $0x78] sm:$0xff]
      %v188 = vld [vmem:[%s165 + $0x80] sm:$0xff]
      %v189 = vld [vmem:[%s165 + $0x88] sm:$0xff]
      %v190 = vld [vmem:[%s165 + $0x90] sm:$0xff]
      %v191 = vld [vmem:[%s165 + $0x98] sm:$0xff]
      %v192 = vld [vmem:[%s165 + $0xa0] sm:$0xff]
      %v193 = vld [vmem:[%s165 + $0xa8] sm:$0xff]
      %v194 = vld [vmem:[%s165 + $0xb0] sm:$0xff]
      %v195 = vld [vmem:[%s165 + $0xb8] sm:$0xff]
      %v196 = vld [vmem:[%s165 + $0xc0] sm:$0xff]
      %v197 = vld [vmem:[%s165 + $0xc8] sm:$0xff]
      %v198 = vld [vmem:[%s165 + $0xd0] sm:$0xff]
      %v199 = vld [vmem:[%s165 + $0xd8] sm:$0xff]
      %v200 = vld [vmem:[%s165 + $0xe0] sm:$0xff]
      %v201 = vld [vmem:[%s165 + $0xe8] sm:$0xff]
      %v202 = vld [vmem:[%s165 + $0xf0] sm:$0xff]
      %v203 = vld [vmem:[%s165 + $0xf8] sm:$0xff]
      %v204 = vld [vmem:[%s165 + $0x100] sm:$0xff]
      %v205 = vld [vmem:[%s165 + $0x108] sm:$0xff]
      %v206 = vld [vmem:[%s165 + $0x110] sm:$0xff]
      %v207 = vld [vmem:[%s165 + $0x118] sm:$0xff]
      %v208 = vld [vmem:[%s165 + $0x120] sm:$0xff]
      %v209 = vld [vmem:[%s165 + $0x128] sm:$0xff]
      %v210 = vld [vmem:[%s165 + $0x130] sm:$0xff]
      %v211 = vld [vmem:[%s165 + $0x138] sm:$0xff]
      %v212 = vld [vmem:[%s165 + $0x140] sm:$0xf]
      %v213 = vpack.c.bf16 %v173, %v172
      %v214 = vpack.c.bf16 %v175, %v174
      %v215 = vpack.c.bf16 %v177, %v176
      %v216 = vpack.c.bf16 %v179, %v178
      %v217 = vpack.c.bf16 %v181, %v180
      %v218 = vpack.c.bf16 %v183, %v182
      %v219 = vpack.c.bf16 %v185, %v184
      %v220 = vpack.c.bf16 %v187, %v186
      %v221 = vpack.c.bf16 %v189, %v188
      %v222 = vpack.c.bf16 %v191, %v190
      %v223 = vpack.c.bf16 %v193, %v192
      %v224 = vpack.c.bf16 %v195, %v194
      %v225 = vpack.c.bf16 %v197, %v196
      %v226 = vpack.c.bf16 %v199, %v198
      %v227 = vpack.c.bf16 %v201, %v200
      %v228 = vpack.c.bf16 %v203, %v202
      %v229 = vpack.c.bf16 %v205, %v204
      %v230 = vpack.c.bf16 %v207, %v206
      %v231 = vpack.c.bf16 %v209, %v208
      %v232 = vpack.c.bf16 %v211, %v210
      %v233 = vpack.c.bf16 %v212, %v212
      %v234 = vld [vmem:[%s1] sm:$0xf]
      %v235 = vpack.c.bf16 %v234, %v234
      %v236 = vld [vmem:[%s165 + $0x1] sm:$0xff]
      %v237 = vld [vmem:[%s165 + $0x9] sm:$0xff]
      %v238 = vld [vmem:[%s165 + $0x11] sm:$0xff]
      %v239 = vld [vmem:[%s165 + $0x19] sm:$0xff]
      %v240 = vld [vmem:[%s165 + $0x21] sm:$0xff]
      %v241 = vld [vmem:[%s165 + $0x29] sm:$0xff]
      %v242 = vld [vmem:[%s165 + $0x31] sm:$0xff]
      %v243 = vld [vmem:[%s165 + $0x39] sm:$0xff]
      %v244 = vld [vmem:[%s165 + $0x41] sm:$0xff]
      %v245 = vld [vmem:[%s165 + $0x49] sm:$0xff]
      %v246 = vld [vmem:[%s165 + $0x51] sm:$0xff]
      %v247 = vld [vmem:[%s165 + $0x59] sm:$0xff]
      %v248 = vld [vmem:[%s165 + $0x61] sm:$0xff]
      %v249 = vld [vmem:[%s165 + $0x69] sm:$0xff]
      %v250 = vld [vmem:[%s165 + $0x71] sm:$0xff]
      %v251 = vld [vmem:[%s165 + $0x79] sm:$0xff]
      %v252 = vld [vmem:[%s165 + $0x81] sm:$0xff]
      %v253 = vld [vmem:[%s165 + $0x89] sm:$0xff]
      %v254 = vld [vmem:[%s165 + $0x91] sm:$0xff]
      %v255 = vld [vmem:[%s165 + $0x99] sm:$0xff]
      %v256 = vld [vmem:[%s165 + $0xa1] sm:$0xff]
      %v257 = vld [vmem:[%s165 + $0xa9] sm:$0xff]
      %v258 = vld [vmem:[%s165 + $0xb1] sm:$0xff]
      %v259 = vld [vmem:[%s165 + $0xb9] sm:$0xff]
      %v260 = vld [vmem:[%s165 + $0xc1] sm:$0xff]
      %v261 = vld [vmem:[%s165 + $0xc9] sm:$0xff]
      %v262 = vld [vmem:[%s165 + $0xd1] sm:$0xff]
      %v263 = vld [vmem:[%s165 + $0xd9] sm:$0xff]
      %v264 = vld [vmem:[%s165 + $0xe1] sm:$0xff]
      %v265 = vld [vmem:[%s165 + $0xe9] sm:$0xff]
      %v266 = vld [vmem:[%s165 + $0xf1] sm:$0xff]
      %v267 = vld [vmem:[%s165 + $0xf9] sm:$0xff]
      %v268 = vld [vmem:[%s165 + $0x101] sm:$0xff]
      %v269 = vld [vmem:[%s165 + $0x109] sm:$0xff]
      %v270 = vld [vmem:[%s165 + $0x111] sm:$0xff]
      %v271 = vld [vmem:[%s165 + $0x119] sm:$0xff]
      %v272 = vld [vmem:[%s165 + $0x121] sm:$0xff]
      %v273 = vld [vmem:[%s165 + $0x129] sm:$0xff]
      %v274 = vld [vmem:[%s165 + $0x131] sm:$0xff]
      %v275 = vld [vmem:[%s165 + $0x139] sm:$0xff]
      %v276 = vld [vmem:[%s165 + $0x141] sm:$0xf]
      %v277 = vpack.c.bf16 %v237, %v236
      %v278 = vpack.c.bf16 %v239, %v238
      %v279 = vpack.c.bf16 %v241, %v240
      %v280 = vpack.c.bf16 %v243, %v242
      %v281 = vpack.c.bf16 %v245, %v244
      %v282 = vpack.c.bf16 %v247, %v246
      %v283 = vpack.c.bf16 %v249, %v248
      %v284 = vpack.c.bf16 %v251, %v250
      %v285 = vpack.c.bf16 %v253, %v252
      %v286 = vpack.c.bf16 %v255, %v254
      %v287 = vpack.c.bf16 %v257, %v256
      %v288 = vpack.c.bf16 %v259, %v258
      %v289 = vpack.c.bf16 %v261, %v260
      %v290 = vpack.c.bf16 %v263, %v262
      %v291 = vpack.c.bf16 %v265, %v264
      %v292 = vpack.c.bf16 %v267, %v266
      %v293 = vpack.c.bf16 %v269, %v268
      %v294 = vpack.c.bf16 %v271, %v270
      %v295 = vpack.c.bf16 %v273, %v272
      %v296 = vpack.c.bf16 %v275, %v274
      %v297 = vpack.c.bf16 %v276, %v276
      %v298 = vld [vmem:[%s1 + $0x4] sm:$0xf]
      %v299 = vpack.c.bf16 %v298, %v298
      %vm300 = vcmask 31744
      %v302 = vsel %vm300, %v277, 0
      %v305 = vsel %vm300, %v278, 0
      %v308 = vsel %vm300, %v279, 0
      %v311 = vsel %vm300, %v280, 0
      %v314 = vsel %vm300, %v281, 0
      %v317 = vsel %vm300, %v282, 0
      %v320 = vsel %vm300, %v283, 0
      %v323 = vsel %vm300, %v284, 0
      %v326 = vsel %vm300, %v285, 0
      %v329 = vsel %vm300, %v286, 0
      %v332 = vsel %vm300, %v287, 0
      %v335 = vsel %vm300, %v288, 0
      %v338 = vsel %vm300, %v289, 0
      %v341 = vsel %vm300, %v290, 0
      %v344 = vsel %vm300, %v291, 0
      %v347 = vsel %vm300, %v292, 0
      %v350 = vsel %vm300, %v293, 0
      %v353 = vsel %vm300, %v294, 0
      %v356 = vsel %vm300, %v295, 0
      %v359 = vsel %vm300, %v296, 0
      %v362 = vsel %vm300, %v297, 0
      %vm364 = vcmask 1041408
      %v366 = vsel %vm364, %v299, 0
      %368 = vmatprep.subr.bf16.mxu0 0
      %369 = vmatpush1.bf16.msra.mxu0 0
      %370 = vmatprep.subr.bf16.mxu0 0
      %371 = vmatpush1.bf16.msra.mxu0 0
      %372 = vmatprep.subr.bf16.mxu0 0
      %373 = vmatpush1.bf16.msra.mxu0 0
      %374 = vmatprep.subr.bf16.mxu0 0
      %375 = vmatpush1.bf16.msra.mxu0 0
      %376 = vmatprep.subr.bf16.mxu0 0
      %377 = vmatpush1.bf16.msra.mxu0 0
      %378 = vmatprep.subr.bf16.mxu0 0
      %379 = vmatpush1.bf16.msra.mxu0 0
      %380 = vmatprep.subr.bf16.mxu0 0
      %381 = vmatpush1.bf16.msra.mxu0 0
      %382 = vmatprep.subr.bf16.mxu0 0
      %383 = vmatpush1.bf16.msra.mxu0 %v366
      %384 = vmatprep.subr.bf16.mxu0 0
      %385 = vmatpush2.bf16.msra.mxu0 0
      %386 = vmatprep.subr.bf16.mxu0 0
      %387 = vmatpush2.bf16.msra.mxu0 0
      %388 = vmatprep.subr.bf16.mxu0 0
      %389 = vmatpush2.bf16.msra.mxu0 0
      %390 = vmatprep.subr.bf16.mxu0 0
      %391 = vmatpush2.bf16.msra.mxu0 0
      %392 = vmatprep.subr.bf16.mxu0 0
      %393 = vmatpush2.bf16.msra.mxu0 0
      %394 = vmatprep.subr.bf16.mxu0 0
      %395 = vmatpush2.bf16.msra.mxu0 0
      %396 = vmatprep.subr.bf16.mxu0 0
      %397 = vmatpush2.bf16.msra.mxu0 0
      %398 = vmatprep.subr.bf16.mxu0 0
      %399 = vmatpush2.bf16.msra.mxu0 0
      %400 = vmatprep.mubr.bf16.mxu0 0
      %401 = vmatmul.mubr.bf16.gmra.mxu0 %v302
      %v402 = vpop.f32.mrf.mxu0
      %v403 = vadd.f32 0.0, %v402
      %v404 = vpop.f32.mrf.mxu0
      %v405 = vpop.f32.mrf.mxu0
      %v406 = vadd.f32 0.0, %v405
      %v407 = vpop.f32.mrf.mxu0
      %408 = vmatprep.mubr.bf16.mxu0 0
      %409 = vmatmul.mubr.bf16.gmra.mxu0 %v305
      %v410 = vpop.f32.mrf.mxu0
      %v411 = vadd.f32 0.0, %v410
      %v412 = vpop.f32.mrf.mxu0
      %v413 = vpop.f32.mrf.mxu0
      %v414 = vadd.f32 0.0, %v413
      %v415 = vpop.f32.mrf.mxu0
      %416 = vmatprep.mubr.bf16.mxu0 0
      %417 = vmatmul.mubr.bf16.gmra.mxu0 %v308
      %v418 = vpop.f32.mrf.mxu0
      %v419 = vadd.f32 0.0, %v418
      %v420 = vpop.f32.mrf.mxu0
      %v421 = vpop.f32.mrf.mxu0
      %v422 = vadd.f32 0.0, %v421
      %v423 = vpop.f32.mrf.mxu0
      %424 = vmatprep.mubr.bf16.mxu0 0
      %425 = vmatmul.mubr.bf16.gmra.mxu0 %v311
      %v426 = vpop.f32.mrf.mxu0
      %v427 = vadd.f32 0.0, %v426
      %v428 = vpop.f32.mrf.mxu0
      %v429 = vpop.f32.mrf.mxu0
      %v430 = vadd.f32 0.0, %v429
      %v431 = vpop.f32.mrf.mxu0
      %432 = vmatprep.mubr.bf16.mxu0 0
      %433 = vmatmul.mubr.bf16.gmra.mxu0 %v314
      %v434 = vpop.f32.mrf.mxu0
      %v435 = vadd.f32 0.0, %v434
      %v436 = vpop.f32.mrf.mxu0
      %v437 = vpop.f32.mrf.mxu0
      %v438 = vadd.f32 0.0, %v437
      %v439 = vpop.f32.mrf.mxu0
      %440 = vmatprep.mubr.bf16.mxu0 0
      %441 = vmatmul.mubr.bf16.gmra.mxu0 %v317
      %v442 = vpop.f32.mrf.mxu0
      %v443 = vadd.f32 0.0, %v442
      %v444 = vpop.f32.mrf.mxu0
      %v445 = vpop.f32.mrf.mxu0
      %v446 = vadd.f32 0.0, %v445
      %v447 = vpop.f32.mrf.mxu0
      %448 = vmatprep.mubr.bf16.mxu0 0
      %449 = vmatmul.mubr.bf16.gmra.mxu0 %v320
      %v450 = vpop.f32.mrf.mxu0
      %v451 = vadd.f32 0.0, %v450
      %v452 = vpop.f32.mrf.mxu0
      %v453 = vpop.f32.mrf.mxu0
      %v454 = vadd.f32 0.0, %v453
      %v455 = vpop.f32.mrf.mxu0
      %456 = vmatprep.mubr.bf16.mxu0 0
      %457 = vmatmul.mubr.bf16.gmra.mxu0 %v323
      %v458 = vpop.f32.mrf.mxu0
      %v459 = vadd.f32 0.0, %v458
      %v460 = vpop.f32.mrf.mxu0
      %v461 = vpop.f32.mrf.mxu0
      %v462 = vadd.f32 0.0, %v461
      %v463 = vpop.f32.mrf.mxu0
      %464 = vmatprep.mubr.bf16.mxu0 0
      %465 = vmatmul.mubr.bf16.gmra.mxu0 %v326
      %v466 = vpop.f32.mrf.mxu0
      %v467 = vadd.f32 0.0, %v466
      %v468 = vpop.f32.mrf.mxu0
      %v469 = vpop.f32.mrf.mxu0
      %v470 = vadd.f32 0.0, %v469
      %v471 = vpop.f32.mrf.mxu0
      %472 = vmatprep.mubr.bf16.mxu0 0
      %473 = vmatmul.mubr.bf16.gmra.mxu0 %v329
      %v474 = vpop.f32.mrf.mxu0
      %v475 = vadd.f32 0.0, %v474
      %v476 = vpop.f32.mrf.mxu0
      %v477 = vpop.f32.mrf.mxu0
      %v478 = vadd.f32 0.0, %v477
      %v479 = vpop.f32.mrf.mxu0
      %480 = vmatprep.mubr.bf16.mxu0 0
      %481 = vmatmul.mubr.bf16.gmra.mxu0 %v332
      %v482 = vpop.f32.mrf.mxu0
      %v483 = vadd.f32 0.0, %v482
      %v484 = vpop.f32.mrf.mxu0
      %v485 = vpop.f32.mrf.mxu0
      %v486 = vadd.f32 0.0, %v485
      %v487 = vpop.f32.mrf.mxu0
      %488 = vmatprep.mubr.bf16.mxu0 0
      %489 = vmatmul.mubr.bf16.gmra.mxu0 %v335
      %v490 = vpop.f32.mrf.mxu0
      %v491 = vadd.f32 0.0, %v490
      %v492 = vpop.f32.mrf.mxu0
      %v493 = vpop.f32.mrf.mxu0
      %v494 = vadd.f32 0.0, %v493
      %v495 = vpop.f32.mrf.mxu0
      %496 = vmatprep.mubr.bf16.mxu0 0
      %497 = vmatmul.mubr.bf16.gmra.mxu0 %v338
      %v498 = vpop.f32.mrf.mxu0
      %v499 = vadd.f32 0.0, %v498
      %v500 = vpop.f32.mrf.mxu0
      %v501 = vpop.f32.mrf.mxu0
      %v502 = vadd.f32 0.0, %v501
      %v503 = vpop.f32.mrf.mxu0
      %504 = vmatprep.mubr.bf16.mxu0 0
      %505 = vmatmul.mubr.bf16.gmra.mxu0 %v341
      %v506 = vpop.f32.mrf.mxu0
      %v507 = vadd.f32 0.0, %v506
      %v508 = vpop.f32.mrf.mxu0
      %v509 = vpop.f32.mrf.mxu0
      %v510 = vadd.f32 0.0, %v509
      %v511 = vpop.f32.mrf.mxu0
      %512 = vmatprep.mubr.bf16.mxu0 0
      %513 = vmatmul.mubr.bf16.gmra.mxu0 %v344
      %v514 = vpop.f32.mrf.mxu0
      %v515 = vadd.f32 0.0, %v514
      %v516 = vpop.f32.mrf.mxu0
      %v517 = vpop.f32.mrf.mxu0
      %v518 = vadd.f32 0.0, %v517
      %v519 = vpop.f32.mrf.mxu0
      %520 = vmatprep.mubr.bf16.mxu0 0
      %521 = vmatmul.mubr.bf16.gmra.mxu0 %v347
      %v522 = vpop.f32.mrf.mxu0
      %v523 = vadd.f32 0.0, %v522
      %v524 = vpop.f32.mrf.mxu0
      %v525 = vpop.f32.mrf.mxu0
      %v526 = vadd.f32 0.0, %v525
      %v527 = vpop.f32.mrf.mxu0
      %528 = vmatprep.mubr.bf16.mxu0 0
      %529 = vmatmul.mubr.bf16.gmra.mxu0 %v350
      %v530 = vpop.f32.mrf.mxu0
      %v531 = vadd.f32 0.0, %v530
      %v532 = vpop.f32.mrf.mxu0
      %v533 = vpop.f32.mrf.mxu0
      %v534 = vadd.f32 0.0, %v533
      %v535 = vpop.f32.mrf.mxu0
      %536 = vmatprep.mubr.bf16.mxu0 0
      %537 = vmatmul.mubr.bf16.gmra.mxu0 %v353
      %v538 = vpop.f32.mrf.mxu0
      %v539 = vadd.f32 0.0, %v538
      %v540 = vpop.f32.mrf.mxu0
      %v541 = vpop.f32.mrf.mxu0
      %v542 = vadd.f32 0.0, %v541
      %v543 = vpop.f32.mrf.mxu0
      %544 = vmatprep.mubr.bf16.mxu0 0
      %545 = vmatmul.mubr.bf16.gmra.mxu0 %v356
      %v546 = vpop.f32.mrf.mxu0
      %v547 = vadd.f32 0.0, %v546
      %v548 = vpop.f32.mrf.mxu0
      %v549 = vpop.f32.mrf.mxu0
      %v550 = vadd.f32 0.0, %v549
      %v551 = vpop.f32.mrf.mxu0
      %552 = vmatprep.mubr.bf16.mxu0 0
      %553 = vmatmul.mubr.bf16.gmra.mxu0 %v359
      %v554 = vpop.f32.mrf.mxu0
      %v555 = vadd.f32 0.0, %v554
      %v556 = vpop.f32.mrf.mxu0
      %v557 = vpop.f32.mrf.mxu0
      %v558 = vadd.f32 0.0, %v557
      %v559 = vpop.f32.mrf.mxu0
      %560 = vmatprep.mubr.bf16.mxu0 0
      %561 = vmatmul.mubr.bf16.gmra.mxu0 %v362
      %v562 = vpop.f32.mrf.mxu0
      %v563 = vadd.f32 0.0, %v562
      %v564 = vpop.f32.mrf.mxu0
      %v565 = vpop.f32.mrf.mxu0
      %v566 = vpop.f32.mrf.mxu0
      %567 = vdwg.mxu0
      %v569 = vsel %vm300, %v213, 0
      %v572 = vsel %vm300, %v214, 0
      %v575 = vsel %vm300, %v215, 0
      %v578 = vsel %vm300, %v216, 0
      %v581 = vsel %vm300, %v217, 0
      %v584 = vsel %vm300, %v218, 0
      %v587 = vsel %vm300, %v219, 0
      %v590 = vsel %vm300, %v220, 0
      %v593 = vsel %vm300, %v221, 0
      %v596 = vsel %vm300, %v222, 0
      %v599 = vsel %vm300, %v223, 0
      %v602 = vsel %vm300, %v224, 0
      %v605 = vsel %vm300, %v225, 0
      %v608 = vsel %vm300, %v226, 0
      %v611 = vsel %vm300, %v227, 0
      %v614 = vsel %vm300, %v228, 0
      %v617 = vsel %vm300, %v229, 0
      %v620 = vsel %vm300, %v230, 0
      %v623 = vsel %vm300, %v231, 0
      %v626 = vsel %vm300, %v232, 0
      %v629 = vsel %vm300, %v233, 0
      %v632 = vsel %vm364, %v235, 0
      %634 = vmatprep.subr.bf16.mxu0 0
      %635 = vmatpush1.bf16.msra.mxu0 0
      %636 = vmatprep.subr.bf16.mxu0 0
      %637 = vmatpush1.bf16.msra.mxu0 0
      %638 = vmatprep.subr.bf16.mxu0 0
      %639 = vmatpush1.bf16.msra.mxu0 0
      %640 = vmatprep.subr.bf16.mxu0 0
      %641 = vmatpush1.bf16.msra.mxu0 0
      %642 = vmatprep.subr.bf16.mxu0 0
      %643 = vmatpush1.bf16.msra.mxu0 0
      %644 = vmatprep.subr.bf16.mxu0 0
      %645 = vmatpush1.bf16.msra.mxu0 0
      %646 = vmatprep.subr.bf16.mxu0 0
      %647 = vmatpush1.bf16.msra.mxu0 0
      %648 = vmatprep.subr.bf16.mxu0 0
      %649 = vmatpush1.bf16.msra.mxu0 %v632
      %650 = vmatprep.subr.bf16.mxu0 0
      %651 = vmatpush2.bf16.msra.mxu0 0
      %652 = vmatprep.subr.bf16.mxu0 0
      %653 = vmatpush2.bf16.msra.mxu0 0
      %654 = vmatprep.subr.bf16.mxu0 0
      %655 = vmatpush2.bf16.msra.mxu0 0
      %656 = vmatprep.subr.bf16.mxu0 0
      %657 = vmatpush2.bf16.msra.mxu0 0
      %658 = vmatprep.subr.bf16.mxu0 0
      %659 = vmatpush2.bf16.msra.mxu0 0
      %660 = vmatprep.subr.bf16.mxu0 0
      %661 = vmatpush2.bf16.msra.mxu0 0
      %662 = vmatprep.subr.bf16.mxu0 0
      %663 = vmatpush2.bf16.msra.mxu0 0
      %664 = vmatprep.subr.bf16.mxu0 0
      %665 = vmatpush2.bf16.msra.mxu0 0
      %666 = vmatprep.mubr.bf16.mxu0 0
      %667 = vmatmul.mubr.bf16.gmra.mxu0 %v569
      %v668 = vpop.f32.mrf.mxu0
      %v669 = vadd.f32 %v403, %v668
      %v670 = vpop.f32.mrf.mxu0
      %v671 = vpop.f32.mrf.mxu0
      %v672 = vadd.f32 %v406, %v671
      %v673 = vpop.f32.mrf.mxu0
      %674 = vmatprep.mubr.bf16.mxu0 0
      %675 = vmatmul.mubr.bf16.gmra.mxu0 %v572
      %v676 = vpop.f32.mrf.mxu0
      %v677 = vadd.f32 %v411, %v676
      %v678 = vpop.f32.mrf.mxu0
      %v679 = vpop.f32.mrf.mxu0
      %v680 = vadd.f32 %v414, %v679
      %v681 = vpop.f32.mrf.mxu0
      %682 = vmatprep.mubr.bf16.mxu0 0
      %683 = vmatmul.mubr.bf16.gmra.mxu0 %v575
      %v684 = vpop.f32.mrf.mxu0
      %v685 = vadd.f32 %v419, %v684
      %v686 = vpop.f32.mrf.mxu0
      %v687 = vpop.f32.mrf.mxu0
      %v688 = vadd.f32 %v422, %v687
      %v689 = vpop.f32.mrf.mxu0
      %690 = vmatprep.mubr.bf16.mxu0 0
      %691 = vmatmul.mubr.bf16.gmra.mxu0 %v578
      %v692 = vpop.f32.mrf.mxu0
      %v693 = vadd.f32 %v427, %v692
      %v694 = vpop.f32.mrf.mxu0
      %v695 = vpop.f32.mrf.mxu0
      %v696 = vadd.f32 %v430, %v695
      %v697 = vpop.f32.mrf.mxu0
      %698 = vmatprep.mubr.bf16.mxu0 0
      %699 = vmatmul.mubr.bf16.gmra.mxu0 %v581
      %v700 = vpop.f32.mrf.mxu0
      %v701 = vadd.f32 %v435, %v700
      %v702 = vpop.f32.mrf.mxu0
      %v703 = vpop.f32.mrf.mxu0
      %v704 = vadd.f32 %v438, %v703
      %v705 = vpop.f32.mrf.mxu0
      %706 = vmatprep.mubr.bf16.mxu0 0
      %707 = vmatmul.mubr.bf16.gmra.mxu0 %v584
      %v708 = vpop.f32.mrf.mxu0
      %v709 = vadd.f32 %v443, %v708
      %v710 = vpop.f32.mrf.mxu0
      %v711 = vpop.f32.mrf.mxu0
      %v712 = vadd.f32 %v446, %v711
      %v713 = vpop.f32.mrf.mxu0
      %714 = vmatprep.mubr.bf16.mxu0 0
      %715 = vmatmul.mubr.bf16.gmra.mxu0 %v587
      %v716 = vpop.f32.mrf.mxu0
      %v717 = vadd.f32 %v451, %v716
      %v718 = vpop.f32.mrf.mxu0
      %v719 = vpop.f32.mrf.mxu0
      %v720 = vadd.f32 %v454, %v719
      %v721 = vpop.f32.mrf.mxu0
      %722 = vmatprep.mubr.bf16.mxu0 0
      %723 = vmatmul.mubr.bf16.gmra.mxu0 %v590
      %v724 = vpop.f32.mrf.mxu0
      %v725 = vadd.f32 %v459, %v724
      %v726 = vpop.f32.mrf.mxu0
      %v727 = vpop.f32.mrf.mxu0
      %v728 = vadd.f32 %v462, %v727
      %v729 = vpop.f32.mrf.mxu0
      %730 = vmatprep.mubr.bf16.mxu0 0
      %731 = vmatmul.mubr.bf16.gmra.mxu0 %v593
      %v732 = vpop.f32.mrf.mxu0
      %v733 = vadd.f32 %v467, %v732
      %v734 = vpop.f32.mrf.mxu0
      %v735 = vpop.f32.mrf.mxu0
      %v736 = vadd.f32 %v470, %v735
      %v737 = vpop.f32.mrf.mxu0
      %738 = vmatprep.mubr.bf16.mxu0 0
      %739 = vmatmul.mubr.bf16.gmra.mxu0 %v596
      %v740 = vpop.f32.mrf.mxu0
      %v741 = vadd.f32 %v475, %v740
      %v742 = vpop.f32.mrf.mxu0
      %v743 = vpop.f32.mrf.mxu0
      %v744 = vadd.f32 %v478, %v743
      %v745 = vpop.f32.mrf.mxu0
      %746 = vmatprep.mubr.bf16.mxu0 0
      %747 = vmatmul.mubr.bf16.gmra.mxu0 %v599
      %v748 = vpop.f32.mrf.mxu0
      %v749 = vadd.f32 %v483, %v748
      %v750 = vpop.f32.mrf.mxu0
      %v751 = vpop.f32.mrf.mxu0
      %v752 = vadd.f32 %v486, %v751
      %v753 = vpop.f32.mrf.mxu0
      %754 = vmatprep.mubr.bf16.mxu0 0
      %755 = vmatmul.mubr.bf16.gmra.mxu0 %v602
      %v756 = vpop.f32.mrf.mxu0
      %v757 = vadd.f32 %v491, %v756
      %v758 = vpop.f32.mrf.mxu0
      %v759 = vpop.f32.mrf.mxu0
      %v760 = vadd.f32 %v494, %v759
      %v761 = vpop.f32.mrf.mxu0
      %762 = vmatprep.mubr.bf16.mxu0 0
      %763 = vmatmul.mubr.bf16.gmra.mxu0 %v605
      %v764 = vpop.f32.mrf.mxu0
      %v765 = vadd.f32 %v499, %v764
      %v766 = vpop.f32.mrf.mxu0
      %v767 = vpop.f32.mrf.mxu0
      %v768 = vadd.f32 %v502, %v767
      %v769 = vpop.f32.mrf.mxu0
      %770 = vmatprep.mubr.bf16.mxu0 0
      %771 = vmatmul.mubr.bf16.gmra.mxu0 %v608
      %v772 = vpop.f32.mrf.mxu0
      %v773 = vadd.f32 %v507, %v772
      %v774 = vpop.f32.mrf.mxu0
      %v775 = vpop.f32.mrf.mxu0
      %v776 = vadd.f32 %v510, %v775
      %v777 = vpop.f32.mrf.mxu0
      %778 = vmatprep.mubr.bf16.mxu0 0
      %779 = vmatmul.mubr.bf16.gmra.mxu0 %v611
      %v780 = vpop.f32.mrf.mxu0
      %v781 = vadd.f32 %v515, %v780
      %v782 = vpop.f32.mrf.mxu0
      %v783 = vpop.f32.mrf.mxu0
      %v784 = vadd.f32 %v518, %v783
      %v785 = vpop.f32.mrf.mxu0
      %786 = vmatprep.mubr.bf16.mxu0 0
      %787 = vmatmul.mubr.bf16.gmra.mxu0 %v614
      %v788 = vpop.f32.mrf.mxu0
      %v789 = vadd.f32 %v523, %v788
      %v790 = vpop.f32.mrf.mxu0
      %v791 = vpop.f32.mrf.mxu0
      %v792 = vadd.f32 %v526, %v791
      %v793 = vpop.f32.mrf.mxu0
      %794 = vmatprep.mubr.bf16.mxu0 0
      %795 = vmatmul.mubr.bf16.gmra.mxu0 %v617
      %v796 = vpop.f32.mrf.mxu0
      %v797 = vadd.f32 %v531, %v796
      %v798 = vpop.f32.mrf.mxu0
      %v799 = vpop.f32.mrf.mxu0
      %v800 = vadd.f32 %v534, %v799
      %v801 = vpop.f32.mrf.mxu0
      %802 = vmatprep.mubr.bf16.mxu0 0
      %803 = vmatmul.mubr.bf16.gmra.mxu0 %v620
      %v804 = vpop.f32.mrf.mxu0
      %v805 = vadd.f32 %v539, %v804
      %v806 = vpop.f32.mrf.mxu0
      %v807 = vpop.f32.mrf.mxu0
      %v808 = vadd.f32 %v542, %v807
      %v809 = vpop.f32.mrf.mxu0
      %810 = vmatprep.mubr.bf16.mxu0 0
      %811 = vmatmul.mubr.bf16.gmra.mxu0 %v623
      %v812 = vpop.f32.mrf.mxu0
      %v813 = vadd.f32 %v547, %v812
      %v814 = vpop.f32.mrf.mxu0
      %v815 = vpop.f32.mrf.mxu0
      %v816 = vadd.f32 %v550, %v815
      %v817 = vpop.f32.mrf.mxu0
      %818 = vmatprep.mubr.bf16.mxu0 0
      %819 = vmatmul.mubr.bf16.gmra.mxu0 %v626
      %v820 = vpop.f32.mrf.mxu0
      %v821 = vadd.f32 %v555, %v820
      %v822 = vpop.f32.mrf.mxu0
      %v823 = vpop.f32.mrf.mxu0
      %v824 = vadd.f32 %v558, %v823
      %v825 = vpop.f32.mrf.mxu0
      %826 = vmatprep.mubr.bf16.mxu0 0
      %827 = vmatmul.mubr.bf16.gmra.mxu0 %v629
      %v828 = vpop.f32.mrf.mxu0
      %v829 = vadd.f32 %v563, %v828
      %v830 = vpop.f32.mrf.mxu0
      %v831 = vpop.f32.mrf.mxu0
      %v832 = vpop.f32.mrf.mxu0
      %833 = vdwg.mxu0
      %v834 = vld [vmem:[%s165 + $0x2] sm:$0xff]
      %v835 = vld [vmem:[%s165 + $0xa] sm:$0xff]
      %v836 = vld [vmem:[%s165 + $0x12] sm:$0xff]
      %v837 = vld [vmem:[%s165 + $0x1a] sm:$0xff]
      %v838 = vld [vmem:[%s165 + $0x22] sm:$0xff]
      %v839 = vld [vmem:[%s165 + $0x2a] sm:$0xff]
      %v840 = vld [vmem:[%s165 + $0x32] sm:$0xff]
      %v841 = vld [vmem:[%s165 + $0x3a] sm:$0xff]
      %v842 = vld [vmem:[%s165 + $0x42] sm:$0xff]
      %v843 = vld [vmem:[%s165 + $0x4a] sm:$0xff]
      %v844 = vld [vmem:[%s165 + $0x52] sm:$0xff]
      %v845 = vld [vmem:[%s165 + $0x5a] sm:$0xff]
      %v846 = vld [vmem:[%s165 + $0x62] sm:$0xff]
      %v847 = vld [vmem:[%s165 + $0x6a] sm:$0xff]
      %v848 = vld [vmem:[%s165 + $0x72] sm:$0xff]
      %v849 = vld [vmem:[%s165 + $0x7a] sm:$0xff]
      %v850 = vld [vmem:[%s165 + $0x82] sm:$0xff]
      %v851 = vld [vmem:[%s165 + $0x8a] sm:$0xff]
      %v852 = vld [vmem:[%s165 + $0x92] sm:$0xff]
      %v853 = vld [vmem:[%s165 + $0x9a] sm:$0xff]
      %v854 = vld [vmem:[%s165 + $0xa2] sm:$0xff]
      %v855 = vld [vmem:[%s165 + $0xaa] sm:$0xff]
      %v856 = vld [vmem:[%s165 + $0xb2] sm:$0xff]
      %v857 = vld [vmem:[%s165 + $0xba] sm:$0xff]
      %v858 = vld [vmem:[%s165 + $0xc2] sm:$0xff]
      %v859 = vld [vmem:[%s165 + $0xca] sm:$0xff]
      %v860 = vld [vmem:[%s165 + $0xd2] sm:$0xff]
      %v861 = vld [vmem:[%s165 + $0xda] sm:$0xff]
      %v862 = vld [vmem:[%s165 + $0xe2] sm:$0xff]
      %v863 = vld [vmem:[%s165 + $0xea] sm:$0xff]
      %v864 = vld [vmem:[%s165 + $0xf2] sm:$0xff]
      %v865 = vld [vmem:[%s165 + $0xfa] sm:$0xff]
      %v866 = vld [vmem:[%s165 + $0x102] sm:$0xff]
      %v867 = vld [vmem:[%s165 + $0x10a] sm:$0xff]
      %v868 = vld [vmem:[%s165 + $0x112] sm:$0xff]
      %v869 = vld [vmem:[%s165 + $0x11a] sm:$0xff]
      %v870 = vld [vmem:[%s165 + $0x122] sm:$0xff]
      %v871 = vld [vmem:[%s165 + $0x12a] sm:$0xff]
      %v872 = vld [vmem:[%s165 + $0x132] sm:$0xff]
      %v873 = vld [vmem:[%s165 + $0x13a] sm:$0xff]
      %v874 = vld [vmem:[%s165 + $0x142] sm:$0xf]
      %v875 = vpack.c.bf16 %v835, %v834
      %v876 = vpack.c.bf16 %v837, %v836
      %v877 = vpack.c.bf16 %v839, %v838
      %v878 = vpack.c.bf16 %v841, %v840
      %v879 = vpack.c.bf16 %v843, %v842
      %v880 = vpack.c.bf16 %v845, %v844
      %v881 = vpack.c.bf16 %v847, %v846
      %v882 = vpack.c.bf16 %v849, %v848
      %v883 = vpack.c.bf16 %v851, %v850
      %v884 = vpack.c.bf16 %v853, %v852
      %v885 = vpack.c.bf16 %v855, %v854
      %v886 = vpack.c.bf16 %v857, %v856
      %v887 = vpack.c.bf16 %v859, %v858
      %v888 = vpack.c.bf16 %v861, %v860
      %v889 = vpack.c.bf16 %v863, %v862
      %v890 = vpack.c.bf16 %v865, %v864
      %v891 = vpack.c.bf16 %v867, %v866
      %v892 = vpack.c.bf16 %v869, %v868
      %v893 = vpack.c.bf16 %v871, %v870
      %v894 = vpack.c.bf16 %v873, %v872
      %v895 = vpack.c.bf16 %v874, %v874
      %v896 = vld [vmem:[%s1 + $0x8] sm:$0xf]
      %v897 = vpack.c.bf16 %v896, %v896
      %v899 = vsel %vm300, %v875, 0
      %v902 = vsel %vm300, %v876, 0
      %v905 = vsel %vm300, %v877, 0
      %v908 = vsel %vm300, %v878, 0
      %v911 = vsel %vm300, %v879, 0
      %v914 = vsel %vm300, %v880, 0
      %v917 = vsel %vm300, %v881, 0
      %v920 = vsel %vm300, %v882, 0
      %v923 = vsel %vm300, %v883, 0
      %v926 = vsel %vm300, %v884, 0
      %v929 = vsel %vm300, %v885, 0
      %v932 = vsel %vm300, %v886, 0
      %v935 = vsel %vm300, %v887, 0
      %v938 = vsel %vm300, %v888, 0
      %v941 = vsel %vm300, %v889, 0
      %v944 = vsel %vm300, %v890, 0
      %v947 = vsel %vm300, %v891, 0
      %v950 = vsel %vm300, %v892, 0
      %v953 = vsel %vm300, %v893, 0
      %v956 = vsel %vm300, %v894, 0
      %v959 = vsel %vm300, %v895, 0
      %v962 = vsel %vm364, %v897, 0
      %964 = vmatprep.subr.bf16.mxu0 0
      %965 = vmatpush1.bf16.msra.mxu0 0
      %966 = vmatprep.subr.bf16.mxu0 0
      %967 = vmatpush1.bf16.msra.mxu0 0
      %968 = vmatprep.subr.bf16.mxu0 0
      %969 = vmatpush1.bf16.msra.mxu0 0
      %970 = vmatprep.subr.bf16.mxu0 0
      %971 = vmatpush1.bf16.msra.mxu0 0
      %972 = vmatprep.subr.bf16.mxu0 0
      %973 = vmatpush1.bf16.msra.mxu0 0
      %974 = vmatprep.subr.bf16.mxu0 0
      %975 = vmatpush1.bf16.msra.mxu0 0
      %976 = vmatprep.subr.bf16.mxu0 0
      %977 = vmatpush1.bf16.msra.mxu0 0
      %978 = vmatprep.subr.bf16.mxu0 0
      %979 = vmatpush1.bf16.msra.mxu0 %v962
      %980 = vmatprep.subr.bf16.mxu0 0
      %981 = vmatpush2.bf16.msra.mxu0 0
      %982 = vmatprep.subr.bf16.mxu0 0
      %983 = vmatpush2.bf16.msra.mxu0 0
      %984 = vmatprep.subr.bf16.mxu0 0
      %985 = vmatpush2.bf16.msra.mxu0 0
      %986 = vmatprep.subr.bf16.mxu0 0
      %987 = vmatpush2.bf16.msra.mxu0 0
      %988 = vmatprep.subr.bf16.mxu0 0
      %989 = vmatpush2.bf16.msra.mxu0 0
      %990 = vmatprep.subr.bf16.mxu0 0
      %991 = vmatpush2.bf16.msra.mxu0 0
      %992 = vmatprep.subr.bf16.mxu0 0
      %993 = vmatpush2.bf16.msra.mxu0 0
      %994 = vmatprep.subr.bf16.mxu0 0
      %995 = vmatpush2.bf16.msra.mxu0 0
      %996 = vmatprep.mubr.bf16.mxu0 0
      %997 = vmatmul.mubr.bf16.gmra.mxu0 %v899
      %v998 = vpop.f32.mrf.mxu0
      %v999 = vadd.f32 0.0, %v998
      %v1000 = vpop.f32.mrf.mxu0
      %v1001 = vpop.f32.mrf.mxu0
      %v1002 = vadd.f32 0.0, %v1001
      %v1003 = vpop.f32.mrf.mxu0
      %1004 = vmatprep.mubr.bf16.mxu0 0
      %1005 = vmatmul.mubr.bf16.gmra.mxu0 %v902
      %v1006 = vpop.f32.mrf.mxu0
      %v1007 = vadd.f32 0.0, %v1006
      %v1008 = vpop.f32.mrf.mxu0
      %v1009 = vpop.f32.mrf.mxu0
      %v1010 = vadd.f32 0.0, %v1009
      %v1011 = vpop.f32.mrf.mxu0
      %1012 = vmatprep.mubr.bf16.mxu0 0
      %1013 = vmatmul.mubr.bf16.gmra.mxu0 %v905
      %v1014 = vpop.f32.mrf.mxu0
      %v1015 = vadd.f32 0.0, %v1014
      %v1016 = vpop.f32.mrf.mxu0
      %v1017 = vpop.f32.mrf.mxu0
      %v1018 = vadd.f32 0.0, %v1017
      %v1019 = vpop.f32.mrf.mxu0
      %1020 = vmatprep.mubr.bf16.mxu0 0
      %1021 = vmatmul.mubr.bf16.gmra.mxu0 %v908
      %v1022 = vpop.f32.mrf.mxu0
      %v1023 = vadd.f32 0.0, %v1022
      %v1024 = vpop.f32.mrf.mxu0
      %v1025 = vpop.f32.mrf.mxu0
      %v1026 = vadd.f32 0.0, %v1025
      %v1027 = vpop.f32.mrf.mxu0
      %1028 = vmatprep.mubr.bf16.mxu0 0
      %1029 = vmatmul.mubr.bf16.gmra.mxu0 %v911
      %v1030 = vpop.f32.mrf.mxu0
      %v1031 = vadd.f32 0.0, %v1030
      %v1032 = vpop.f32.mrf.mxu0
      %v1033 = vpop.f32.mrf.mxu0
      %v1034 = vadd.f32 0.0, %v1033
      %v1035 = vpop.f32.mrf.mxu0
      %1036 = vmatprep.mubr.bf16.mxu0 0
      %1037 = vmatmul.mubr.bf16.gmra.mxu0 %v914
      %v1038 = vpop.f32.mrf.mxu0
      %v1039 = vadd.f32 0.0, %v1038
      %v1040 = vpop.f32.mrf.mxu0
      %v1041 = vpop.f32.mrf.mxu0
      %v1042 = vadd.f32 0.0, %v1041
      %v1043 = vpop.f32.mrf.mxu0
      %1044 = vmatprep.mubr.bf16.mxu0 0
      %1045 = vmatmul.mubr.bf16.gmra.mxu0 %v917
      %v1046 = vpop.f32.mrf.mxu0
      %v1047 = vadd.f32 0.0, %v1046
      %v1048 = vpop.f32.mrf.mxu0
      %v1049 = vpop.f32.mrf.mxu0
      %v1050 = vadd.f32 0.0, %v1049
      %v1051 = vpop.f32.mrf.mxu0
      %1052 = vmatprep.mubr.bf16.mxu0 0
      %1053 = vmatmul.mubr.bf16.gmra.mxu0 %v920
      %v1054 = vpop.f32.mrf.mxu0
      %v1055 = vadd.f32 0.0, %v1054
      %v1056 = vpop.f32.mrf.mxu0
      %v1057 = vpop.f32.mrf.mxu0
      %v1058 = vadd.f32 0.0, %v1057
      %v1059 = vpop.f32.mrf.mxu0
      %1060 = vmatprep.mubr.bf16.mxu0 0
      %1061 = vmatmul.mubr.bf16.gmra.mxu0 %v923
      %v1062 = vpop.f32.mrf.mxu0
      %v1063 = vadd.f32 0.0, %v1062
      %v1064 = vpop.f32.mrf.mxu0
      %v1065 = vpop.f32.mrf.mxu0
      %v1066 = vadd.f32 0.0, %v1065
      %v1067 = vpop.f32.mrf.mxu0
      %1068 = vmatprep.mubr.bf16.mxu0 0
      %1069 = vmatmul.mubr.bf16.gmra.mxu0 %v926
      %v1070 = vpop.f32.mrf.mxu0
      %v1071 = vadd.f32 0.0, %v1070
      %v1072 = vpop.f32.mrf.mxu0
      %v1073 = vpop.f32.mrf.mxu0
      %v1074 = vadd.f32 0.0, %v1073
      %v1075 = vpop.f32.mrf.mxu0
      %1076 = vmatprep.mubr.bf16.mxu0 0
      %1077 = vmatmul.mubr.bf16.gmra.mxu0 %v929
      %v1078 = vpop.f32.mrf.mxu0
      %v1079 = vadd.f32 0.0, %v1078
      %v1080 = vpop.f32.mrf.mxu0
      %v1081 = vpop.f32.mrf.mxu0
      %v1082 = vadd.f32 0.0, %v1081
      %v1083 = vpop.f32.mrf.mxu0
      %1084 = vmatprep.mubr.bf16.mxu0 0
      %1085 = vmatmul.mubr.bf16.gmra.mxu0 %v932
      %v1086 = vpop.f32.mrf.mxu0
      %v1087 = vadd.f32 0.0, %v1086
      %v1088 = vpop.f32.mrf.mxu0
      %v1089 = vpop.f32.mrf.mxu0
      %v1090 = vadd.f32 0.0, %v1089
      %v1091 = vpop.f32.mrf.mxu0
      %1092 = vmatprep.mubr.bf16.mxu0 0
      %1093 = vmatmul.mubr.bf16.gmra.mxu0 %v935
      %v1094 = vpop.f32.mrf.mxu0
      %v1095 = vadd.f32 0.0, %v1094
      %v1096 = vpop.f32.mrf.mxu0
      %v1097 = vpop.f32.mrf.mxu0
      %v1098 = vadd.f32 0.0, %v1097
      %v1099 = vpop.f32.mrf.mxu0
      %1100 = vmatprep.mubr.bf16.mxu0 0
      %1101 = vmatmul.mubr.bf16.gmra.mxu0 %v938
      %v1102 = vpop.f32.mrf.mxu0
      %v1103 = vadd.f32 0.0, %v1102
      %v1104 = vpop.f32.mrf.mxu0
      %v1105 = vpop.f32.mrf.mxu0
      %v1106 = vadd.f32 0.0, %v1105
      %v1107 = vpop.f32.mrf.mxu0
      %1108 = vmatprep.mubr.bf16.mxu0 0
      %1109 = vmatmul.mubr.bf16.gmra.mxu0 %v941
      %v1110 = vpop.f32.mrf.mxu0
      %v1111 = vadd.f32 0.0, %v1110
      %v1112 = vpop.f32.mrf.mxu0
      %v1113 = vpop.f32.mrf.mxu0
      %v1114 = vadd.f32 0.0, %v1113
      %v1115 = vpop.f32.mrf.mxu0
      %1116 = vmatprep.mubr.bf16.mxu0 0
      %1117 = vmatmul.mubr.bf16.gmra.mxu0 %v944
      %v1118 = vpop.f32.mrf.mxu0
      %v1119 = vadd.f32 0.0, %v1118
      %v1120 = vpop.f32.mrf.mxu0
      %v1121 = vpop.f32.mrf.mxu0
      %v1122 = vadd.f32 0.0, %v1121
      %v1123 = vpop.f32.mrf.mxu0
      %1124 = vmatprep.mubr.bf16.mxu0 0
      %1125 = vmatmul.mubr.bf16.gmra.mxu0 %v947
      %v1126 = vpop.f32.mrf.mxu0
      %v1127 = vadd.f32 0.0, %v1126
      %v1128 = vpop.f32.mrf.mxu0
      %v1129 = vpop.f32.mrf.mxu0
      %v1130 = vadd.f32 0.0, %v1129
      %v1131 = vpop.f32.mrf.mxu0
      %1132 = vmatprep.mubr.bf16.mxu0 0
      %1133 = vmatmul.mubr.bf16.gmra.mxu0 %v950
      %v1134 = vpop.f32.mrf.mxu0
      %v1135 = vadd.f32 0.0, %v1134
      %v1136 = vpop.f32.mrf.mxu0
      %v1137 = vpop.f32.mrf.mxu0
      %v1138 = vadd.f32 0.0, %v1137
      %v1139 = vpop.f32.mrf.mxu0
      %1140 = vmatprep.mubr.bf16.mxu0 0
      %1141 = vmatmul.mubr.bf16.gmra.mxu0 %v953
      %v1142 = vpop.f32.mrf.mxu0
      %v1143 = vadd.f32 0.0, %v1142
      %v1144 = vpop.f32.mrf.mxu0
      %v1145 = vpop.f32.mrf.mxu0
      %v1146 = vadd.f32 0.0, %v1145
      %v1147 = vpop.f32.mrf.mxu0
      %1148 = vmatprep.mubr.bf16.mxu0 0
      %1149 = vmatmul.mubr.bf16.gmra.mxu0 %v956
      %v1150 = vpop.f32.mrf.mxu0
      %v1151 = vadd.f32 0.0, %v1150
      %v1152 = vpop.f32.mrf.mxu0
      %v1153 = vpop.f32.mrf.mxu0
      %v1154 = vadd.f32 0.0, %v1153
      %v1155 = vpop.f32.mrf.mxu0
      %1156 = vmatprep.mubr.bf16.mxu0 0
      %1157 = vmatmul.mubr.bf16.gmra.mxu0 %v959
      %v1158 = vpop.f32.mrf.mxu0
      %v1159 = vadd.f32 0.0, %v1158
      %v1160 = vpop.f32.mrf.mxu0
      %v1161 = vpop.f32.mrf.mxu0
      %v1162 = vpop.f32.mrf.mxu0
      %1163 = vdwg.mxu0
      %v1164 = vadd.f32 %v669, %v999
      %v1165 = vadd.f32 %v672, %v1002
      %v1166 = vadd.f32 %v677, %v1007
      %v1167 = vadd.f32 %v680, %v1010
      %v1168 = vadd.f32 %v685, %v1015
      %v1169 = vadd.f32 %v688, %v1018
      %v1170 = vadd.f32 %v693, %v1023
      %v1171 = vadd.f32 %v696, %v1026
      %v1172 = vadd.f32 %v701, %v1031
      %v1173 = vadd.f32 %v704, %v1034
      %v1174 = vadd.f32 %v709, %v1039
      %v1175 = vadd.f32 %v712, %v1042
      %v1176 = vadd.f32 %v717, %v1047
      %v1177 = vadd.f32 %v720, %v1050
      %v1178 = vadd.f32 %v725, %v1055
      %v1179 = vadd.f32 %v728, %v1058
      %v1180 = vadd.f32 %v733, %v1063
      %v1181 = vadd.f32 %v736, %v1066
      %v1182 = vadd.f32 %v741, %v1071
      %v1183 = vadd.f32 %v744, %v1074
      %v1184 = vadd.f32 %v749, %v1079
      %v1185 = vadd.f32 %v752, %v1082
      %v1186 = vadd.f32 %v757, %v1087
      %v1187 = vadd.f32 %v760, %v1090
      %v1188 = vadd.f32 %v765, %v1095
      %v1189 = vadd.f32 %v768, %v1098
      %v1190 = vadd.f32 %v773, %v1103
      %v1191 = vadd.f32 %v776, %v1106
      %v1192 = vadd.f32 %v781, %v1111
      %v1193 = vadd.f32 %v784, %v1114
      %v1194 = vadd.f32 %v789, %v1119
      %v1195 = vadd.f32 %v792, %v1122
      %v1196 = vadd.f32 %v797, %v1127
      %v1197 = vadd.f32 %v800, %v1130
      %v1198 = vadd.f32 %v805, %v1135
      %v1199 = vadd.f32 %v808, %v1138
      %v1200 = vadd.f32 %v813, %v1143
      %v1201 = vadd.f32 %v816, %v1146
      %v1202 = vadd.f32 %v821, %v1151
      %v1203 = vadd.f32 %v824, %v1154
      %v1204 = vadd.f32 %v829, %v1159
      %v1205 = vld [vmem:[%s165 + $0x12] sm:$0xff]
      %v1206 = vld [vmem:[%s165 + $0x1a] sm:$0xff]
      %v1207 = vld [vmem:[%s165 + $0x22] sm:$0xff]
      %v1208 = vld [vmem:[%s165 + $0x2a] sm:$0xff]
      %v1209 = vld [vmem:[%s165 + $0x32] sm:$0xff]
      %v1210 = vld [vmem:[%s165 + $0x3a] sm:$0xff]
      %v1211 = vld [vmem:[%s165 + $0x42] sm:$0xff]
      %v1212 = vld [vmem:[%s165 + $0x4a] sm:$0xff]
      %v1213 = vld [vmem:[%s165 + $0x52] sm:$0xff]
      %v1214 = vld [vmem:[%s165 + $0x5a] sm:$0xff]
      %v1215 = vld [vmem:[%s165 + $0x62] sm:$0xff]
      %v1216 = vld [vmem:[%s165 + $0x6a] sm:$0xff]
      %v1217 = vld [vmem:[%s165 + $0x72] sm:$0xff]
      %v1218 = vld [vmem:[%s165 + $0x7a] sm:$0xff]
      %v1219 = vld [vmem:[%s165 + $0x82] sm:$0xff]
      %v1220 = vld [vmem:[%s165 + $0x8a] sm:$0xff]
      %v1221 = vld [vmem:[%s165 + $0x92] sm:$0xff]
      %v1222 = vld [vmem:[%s165 + $0x9a] sm:$0xff]
      %v1223 = vld [vmem:[%s165 + $0xa2] sm:$0xff]
      %v1224 = vld [vmem:[%s165 + $0xaa] sm:$0xff]
      %v1225 = vld [vmem:[%s165 + $0xb2] sm:$0xff]
      %v1226 = vld [vmem:[%s165 + $0xba] sm:$0xff]
      %v1227 = vld [vmem:[%s165 + $0xc2] sm:$0xff]
      %v1228 = vld [vmem:[%s165 + $0xca] sm:$0xff]
      %v1229 = vld [vmem:[%s165 + $0xd2] sm:$0xff]
      %v1230 = vld [vmem:[%s165 + $0xda] sm:$0xff]
      %v1231 = vld [vmem:[%s165 + $0xe2] sm:$0xff]
      %v1232 = vld [vmem:[%s165 + $0xea] sm:$0xff]
      %v1233 = vld [vmem:[%s165 + $0xf2] sm:$0xff]
      %v1234 = vld [vmem:[%s165 + $0xfa] sm:$0xff]
      %v1235 = vld [vmem:[%s165 + $0x102] sm:$0xff]
      %v1236 = vld [vmem:[%s165 + $0x10a] sm:$0xff]
      %v1237 = vld [vmem:[%s165 + $0x112] sm:$0xff]
      %v1238 = vld [vmem:[%s165 + $0x11a] sm:$0xff]
      %v1239 = vld [vmem:[%s165 + $0x122] sm:$0xff]
      %v1240 = vld [vmem:[%s165 + $0x12a] sm:$0xff]
      %v1241 = vld [vmem:[%s165 + $0x132] sm:$0xff]
      %v1242 = vld [vmem:[%s165 + $0x13a] sm:$0xff]
      %v1243 = vld [vmem:[%s165 + $0x142] sm:$0xff]
      %v1244 = vld [vmem:[%s165 + $0x14a] sm:$0xff]
      %v1245 = vld [vmem:[%s165 + $0x152] sm:$0xf]
      %v1246 = vpack.c.bf16 %v1206, %v1205
      %v1247 = vpack.c.bf16 %v1208, %v1207
      %v1248 = vpack.c.bf16 %v1210, %v1209
      %v1249 = vpack.c.bf16 %v1212, %v1211
      %v1250 = vpack.c.bf16 %v1214, %v1213
      %v1251 = vpack.c.bf16 %v1216, %v1215
      %v1252 = vpack.c.bf16 %v1218, %v1217
      %v1253 = vpack.c.bf16 %v1220, %v1219
      %v1254 = vpack.c.bf16 %v1222, %v1221
      %v1255 = vpack.c.bf16 %v1224, %v1223
      %v1256 = vpack.c.bf16 %v1226, %v1225
      %v1257 = vpack.c.bf16 %v1228, %v1227
      %v1258 = vpack.c.bf16 %v1230, %v1229
      %v1259 = vpack.c.bf16 %v1232, %v1231
      %v1260 = vpack.c.bf16 %v1234, %v1233
      %v1261 = vpack.c.bf16 %v1236, %v1235
      %v1262 = vpack.c.bf16 %v1238, %v1237
      %v1263 = vpack.c.bf16 %v1240, %v1239
      %v1264 = vpack.c.bf16 %v1242, %v1241
      %v1265 = vpack.c.bf16 %v1244, %v1243
      %v1266 = vpack.c.bf16 %v1245, %v1245
      %v1267 = vld [vmem:[%s1 + $0xc] sm:$0xf]
      %v1268 = vpack.c.bf16 %v1267, %v1267
      %v1270 = vsel %vm300, %v1246, 0
      %v1273 = vsel %vm300, %v1247, 0
      %v1276 = vsel %vm300, %v1248, 0
      %v1279 = vsel %vm300, %v1249, 0
      %v1282 = vsel %vm300, %v1250, 0
      %v1285 = vsel %vm300, %v1251, 0
      %v1288 = vsel %vm300, %v1252, 0
      %v1291 = vsel %vm300, %v1253, 0
      %v1294 = vsel %vm300, %v1254, 0
      %v1297 = vsel %vm300, %v1255, 0
      %v1300 = vsel %vm300, %v1256, 0
      %v1303 = vsel %vm300, %v1257, 0
      %v1306 = vsel %vm300, %v1258, 0
      %v1309 = vsel %vm300, %v1259, 0
      %v1312 = vsel %vm300, %v1260, 0
      %v1315 = vsel %vm300, %v1261, 0
      %v1318 = vsel %vm300, %v1262, 0
      %v1321 = vsel %vm300, %v1263, 0
      %v1324 = vsel %vm300, %v1264, 0
      %v1327 = vsel %vm300, %v1265, 0
      %v1330 = vsel %vm300, %v1266, 0
      %v1333 = vsel %vm364, %v1268, 0
      %1335 = vmatprep.subr.bf16.mxu0 0
      %1336 = vmatpush1.bf16.msra.mxu0 0
      %1337 = vmatprep.subr.bf16.mxu0 0
      %1338 = vmatpush1.bf16.msra.mxu0 0
      %1339 = vmatprep.subr.bf16.mxu0 0
      %1340 = vmatpush1.bf16.msra.mxu0 0
      %1341 = vmatprep.subr.bf16.mxu0 0
      %1342 = vmatpush1.bf16.msra.mxu0 0
      %1343 = vmatprep.subr.bf16.mxu0 0
      %1344 = vmatpush1.bf16.msra.mxu0 0
      %1345 = vmatprep.subr.bf16.mxu0 0
      %1346 = vmatpush1.bf16.msra.mxu0 0
      %1347 = vmatprep.subr.bf16.mxu0 0
      %1348 = vmatpush1.bf16.msra.mxu0 0
      %1349 = vmatprep.subr.bf16.mxu0 0
      %1350 = vmatpush1.bf16.msra.mxu0 %v1333
      %1351 = vmatprep.subr.bf16.mxu0 0
      %1352 = vmatpush2.bf16.msra.mxu0 0
      %1353 = vmatprep.subr.bf16.mxu0 0
      %1354 = vmatpush2.bf16.msra.mxu0 0
      %1355 = vmatprep.subr.bf16.mxu0 0
      %1356 = vmatpush2.bf16.msra.mxu0 0
      %1357 = vmatprep.subr.bf16.mxu0 0
      %1358 = vmatpush2.bf16.msra.mxu0 0
      %1359 = vmatprep.subr.bf16.mxu0 0
      %1360 = vmatpush2.bf16.msra.mxu0 0
      %1361 = vmatprep.subr.bf16.mxu0 0
      %1362 = vmatpush2.bf16.msra.mxu0 0
      %1363 = vmatprep.subr.bf16.mxu0 0
      %1364 = vmatpush2.bf16.msra.mxu0 0
      %1365 = vmatprep.subr.bf16.mxu0 0
      %1366 = vmatpush2.bf16.msra.mxu0 0
      %1367 = vmatprep.mubr.bf16.mxu0 0
      %1368 = vmatmul.mubr.bf16.gmra.mxu0 %v1270
      %v1369 = vpop.f32.mrf.mxu0
      %v1370 = vadd.f32 0.0, %v1369
      %v1371 = vpop.f32.mrf.mxu0
      %v1372 = vpop.f32.mrf.mxu0
      %v1373 = vadd.f32 0.0, %v1372
      %v1374 = vpop.f32.mrf.mxu0
      %1375 = vmatprep.mubr.bf16.mxu0 0
      %1376 = vmatmul.mubr.bf16.gmra.mxu0 %v1273
      %v1377 = vpop.f32.mrf.mxu0
      %v1378 = vadd.f32 0.0, %v1377
      %v1379 = vpop.f32.mrf.mxu0
      %v1380 = vpop.f32.mrf.mxu0
      %v1381 = vadd.f32 0.0, %v1380
      %v1382 = vpop.f32.mrf.mxu0
      %1383 = vmatprep.mubr.bf16.mxu0 0
      %1384 = vmatmul.mubr.bf16.gmra.mxu0 %v1276
      %v1385 = vpop.f32.mrf.mxu0
      %v1386 = vadd.f32 0.0, %v1385
      %v1387 = vpop.f32.mrf.mxu0
      %v1388 = vpop.f32.mrf.mxu0
      %v1389 = vadd.f32 0.0, %v1388
      %v1390 = vpop.f32.mrf.mxu0
      %1391 = vmatprep.mubr.bf16.mxu0 0
      %1392 = vmatmul.mubr.bf16.gmra.mxu0 %v1279
      %v1393 = vpop.f32.mrf.mxu0
      %v1394 = vadd.f32 0.0, %v1393
      %v1395 = vpop.f32.mrf.mxu0
      %v1396 = vpop.f32.mrf.mxu0
      %v1397 = vadd.f32 0.0, %v1396
      %v1398 = vpop.f32.mrf.mxu0
      %1399 = vmatprep.mubr.bf16.mxu0 0
      %1400 = vmatmul.mubr.bf16.gmra.mxu0 %v1282
      %v1401 = vpop.f32.mrf.mxu0
      %v1402 = vadd.f32 0.0, %v1401
      %v1403 = vpop.f32.mrf.mxu0
      %v1404 = vpop.f32.mrf.mxu0
      %v1405 = vadd.f32 0.0, %v1404
      %v1406 = vpop.f32.mrf.mxu0
      %1407 = vmatprep.mubr.bf16.mxu0 0
      %1408 = vmatmul.mubr.bf16.gmra.mxu0 %v1285
      %v1409 = vpop.f32.mrf.mxu0
      %v1410 = vadd.f32 0.0, %v1409
      %v1411 = vpop.f32.mrf.mxu0
      %v1412 = vpop.f32.mrf.mxu0
      %v1413 = vadd.f32 0.0, %v1412
      %v1414 = vpop.f32.mrf.mxu0
      %1415 = vmatprep.mubr.bf16.mxu0 0
      %1416 = vmatmul.mubr.bf16.gmra.mxu0 %v1288
      %v1417 = vpop.f32.mrf.mxu0
      %v1418 = vadd.f32 0.0, %v1417
      %v1419 = vpop.f32.mrf.mxu0
      %v1420 = vpop.f32.mrf.mxu0
      %v1421 = vadd.f32 0.0, %v1420
      %v1422 = vpop.f32.mrf.mxu0
      %1423 = vmatprep.mubr.bf16.mxu0 0
      %1424 = vmatmul.mubr.bf16.gmra.mxu0 %v1291
      %v1425 = vpop.f32.mrf.mxu0
      %v1426 = vadd.f32 0.0, %v1425
      %v1427 = vpop.f32.mrf.mxu0
      %v1428 = vpop.f32.mrf.mxu0
      %v1429 = vadd.f32 0.0, %v1428
      %v1430 = vpop.f32.mrf.mxu0
      %1431 = vmatprep.mubr.bf16.mxu0 0
      %1432 = vmatmul.mubr.bf16.gmra.mxu0 %v1294
      %v1433 = vpop.f32.mrf.mxu0
      %v1434 = vadd.f32 0.0, %v1433
      %v1435 = vpop.f32.mrf.mxu0
      %v1436 = vpop.f32.mrf.mxu0
      %v1437 = vadd.f32 0.0, %v1436
      %v1438 = vpop.f32.mrf.mxu0
      %1439 = vmatprep.mubr.bf16.mxu0 0
      %1440 = vmatmul.mubr.bf16.gmra.mxu0 %v1297
      %v1441 = vpop.f32.mrf.mxu0
      %v1442 = vadd.f32 0.0, %v1441
      %v1443 = vpop.f32.mrf.mxu0
      %v1444 = vpop.f32.mrf.mxu0
      %v1445 = vadd.f32 0.0, %v1444
      %v1446 = vpop.f32.mrf.mxu0
      %1447 = vmatprep.mubr.bf16.mxu0 0
      %1448 = vmatmul.mubr.bf16.gmra.mxu0 %v1300
      %v1449 = vpop.f32.mrf.mxu0
      %v1450 = vadd.f32 0.0, %v1449
      %v1451 = vpop.f32.mrf.mxu0
      %v1452 = vpop.f32.mrf.mxu0
      %v1453 = vadd.f32 0.0, %v1452
      %v1454 = vpop.f32.mrf.mxu0
      %1455 = vmatprep.mubr.bf16.mxu0 0
      %1456 = vmatmul.mubr.bf16.gmra.mxu0 %v1303
      %v1457 = vpop.f32.mrf.mxu0
      %v1458 = vadd.f32 0.0, %v1457
      %v1459 = vpop.f32.mrf.mxu0
      %v1460 = vpop.f32.mrf.mxu0
      %v1461 = vadd.f32 0.0, %v1460
      %v1462 = vpop.f32.mrf.mxu0
      %1463 = vmatprep.mubr.bf16.mxu0 0
      %1464 = vmatmul.mubr.bf16.gmra.mxu0 %v1306
      %v1465 = vpop.f32.mrf.mxu0
      %v1466 = vadd.f32 0.0, %v1465
      %v1467 = vpop.f32.mrf.mxu0
      %v1468 = vpop.f32.mrf.mxu0
      %v1469 = vadd.f32 0.0, %v1468
      %v1470 = vpop.f32.mrf.mxu0
      %1471 = vmatprep.mubr.bf16.mxu0 0
      %1472 = vmatmul.mubr.bf16.gmra.mxu0 %v1309
      %v1473 = vpop.f32.mrf.mxu0
      %v1474 = vadd.f32 0.0, %v1473
      %v1475 = vpop.f32.mrf.mxu0
      %v1476 = vpop.f32.mrf.mxu0
      %v1477 = vadd.f32 0.0, %v1476
      %v1478 = vpop.f32.mrf.mxu0
      %1479 = vmatprep.mubr.bf16.mxu0 0
      %1480 = vmatmul.mubr.bf16.gmra.mxu0 %v1312
      %v1481 = vpop.f32.mrf.mxu0
      %v1482 = vadd.f32 0.0, %v1481
      %v1483 = vpop.f32.mrf.mxu0
      %v1484 = vpop.f32.mrf.mxu0
      %v1485 = vadd.f32 0.0, %v1484
      %v1486 = vpop.f32.mrf.mxu0
      %1487 = vmatprep.mubr.bf16.mxu0 0
      %1488 = vmatmul.mubr.bf16.gmra.mxu0 %v1315
      %v1489 = vpop.f32.mrf.mxu0
      %v1490 = vadd.f32 0.0, %v1489
      %v1491 = vpop.f32.mrf.mxu0
      %v1492 = vpop.f32.mrf.mxu0
      %v1493 = vadd.f32 0.0, %v1492
      %v1494 = vpop.f32.mrf.mxu0
      %1495 = vmatprep.mubr.bf16.mxu0 0
      %1496 = vmatmul.mubr.bf16.gmra.mxu0 %v1318
      %v1497 = vpop.f32.mrf.mxu0
      %v1498 = vadd.f32 0.0, %v1497
      %v1499 = vpop.f32.mrf.mxu0
      %v1500 = vpop.f32.mrf.mxu0
      %v1501 = vadd.f32 0.0, %v1500
      %v1502 = vpop.f32.mrf.mxu0
      %1503 = vmatprep.mubr.bf16.mxu0 0
      %1504 = vmatmul.mubr.bf16.gmra.mxu0 %v1321
      %v1505 = vpop.f32.mrf.mxu0
      %v1506 = vadd.f32 0.0, %v1505
      %v1507 = vpop.f32.mrf.mxu0
      %v1508 = vpop.f32.mrf.mxu0
      %v1509 = vadd.f32 0.0, %v1508
      %v1510 = vpop.f32.mrf.mxu0
      %1511 = vmatprep.mubr.bf16.mxu0 0
      %1512 = vmatmul.mubr.bf16.gmra.mxu0 %v1324
      %v1513 = vpop.f32.mrf.mxu0
      %v1514 = vadd.f32 0.0, %v1513
      %v1515 = vpop.f32.mrf.mxu0
      %v1516 = vpop.f32.mrf.mxu0
      %v1517 = vadd.f32 0.0, %v1516
      %v1518 = vpop.f32.mrf.mxu0
      %1519 = vmatprep.mubr.bf16.mxu0 0
      %1520 = vmatmul.mubr.bf16.gmra.mxu0 %v1327
      %v1521 = vpop.f32.mrf.mxu0
      %v1522 = vadd.f32 0.0, %v1521
      %v1523 = vpop.f32.mrf.mxu0
      %v1524 = vpop.f32.mrf.mxu0
      %v1525 = vadd.f32 0.0, %v1524
      %v1526 = vpop.f32.mrf.mxu0
      %1527 = vmatprep.mubr.bf16.mxu0 0
      %1528 = vmatmul.mubr.bf16.gmra.mxu0 %v1330
      %v1529 = vpop.f32.mrf.mxu0
      %v1530 = vadd.f32 0.0, %v1529
      %v1531 = vpop.f32.mrf.mxu0
      %v1532 = vpop.f32.mrf.mxu0
      %v1533 = vpop.f32.mrf.mxu0
      %1534 = vdwg.mxu0
      %v1535 = vadd.f32 %v1164, %v1370
      %v1536 = vadd.f32 %v1165, %v1373
      %v1537 = vadd.f32 %v1166, %v1378
      %v1538 = vadd.f32 %v1167, %v1381
      %v1539 = vadd.f32 %v1168, %v1386
      %v1540 = vadd.f32 %v1169, %v1389
      %v1541 = vadd.f32 %v1170, %v1394
      %v1542 = vadd.f32 %v1171, %v1397
      %v1543 = vadd.f32 %v1172, %v1402
      %v1544 = vadd.f32 %v1173, %v1405
      %v1545 = vadd.f32 %v1174, %v1410
      %v1546 = vadd.f32 %v1175, %v1413
      %v1547 = vadd.f32 %v1176, %v1418
      %v1548 = vadd.f32 %v1177, %v1421
      %v1549 = vadd.f32 %v1178, %v1426
      %v1550 = vadd.f32 %v1179, %v1429
      %v1551 = vadd.f32 %v1180, %v1434
      %v1552 = vadd.f32 %v1181, %v1437
      %v1553 = vadd.f32 %v1182, %v1442
      %v1554 = vadd.f32 %v1183, %v1445
      %v1555 = vadd.f32 %v1184, %v1450
      %v1556 = vadd.f32 %v1185, %v1453
      %v1557 = vadd.f32 %v1186, %v1458
      %v1558 = vadd.f32 %v1187, %v1461
      %v1559 = vadd.f32 %v1188, %v1466
      %v1560 = vadd.f32 %v1189, %v1469
      %v1561 = vadd.f32 %v1190, %v1474
      %v1562 = vadd.f32 %v1191, %v1477
      %v1563 = vadd.f32 %v1192, %v1482
      %v1564 = vadd.f32 %v1193, %v1485
      %v1565 = vadd.f32 %v1194, %v1490
      %v1566 = vadd.f32 %v1195, %v1493
      %v1567 = vadd.f32 %v1196, %v1498
      %v1568 = vadd.f32 %v1197, %v1501
      %v1569 = vadd.f32 %v1198, %v1506
      %v1570 = vadd.f32 %v1199, %v1509
      %v1571 = vadd.f32 %v1200, %v1514
      %v1572 = vadd.f32 %v1201, %v1517
      %v1573 = vadd.f32 %v1202, %v1522
      %v1574 = vadd.f32 %v1203, %v1525
      %v1575 = vadd.f32 %v1204, %v1530
      %v1576 = vld [vmem:[%s165 + $0x13] sm:$0xff]
      %v1577 = vld [vmem:[%s165 + $0x1b] sm:$0xff]
      %v1578 = vld [vmem:[%s165 + $0x23] sm:$0xff]
      %v1579 = vld [vmem:[%s165 + $0x2b] sm:$0xff]
      %v1580 = vld [vmem:[%s165 + $0x33] sm:$0xff]
      %v1581 = vld [vmem:[%s165 + $0x3b] sm:$0xff]
      %v1582 = vld [vmem:[%s165 + $0x43] sm:$0xff]
      %v1583 = vld [vmem:[%s165 + $0x4b] sm:$0xff]
      %v1584 = vld [vmem:[%s165 + $0x53] sm:$0xff]
      %v1585 = vld [vmem:[%s165 + $0x5b] sm:$0xff]
      %v1586 = vld [vmem:[%s165 + $0x63] sm:$0xff]
      %v1587 = vld [vmem:[%s165 + $0x6b] sm:$0xff]
      %v1588 = vld [vmem:[%s165 + $0x73] sm:$0xff]
      %v1589 = vld [vmem:[%s165 + $0x7b] sm:$0xff]
      %v1590 = vld [vmem:[%s165 + $0x83] sm:$0xff]
      %v1591 = vld [vmem:[%s165 + $0x8b] sm:$0xff]
      %v1592 = vld [vmem:[%s165 + $0x93] sm:$0xff]
      %v1593 = vld [vmem:[%s165 + $0x9b] sm:$0xff]
      %v1594 = vld [vmem:[%s165 + $0xa3] sm:$0xff]
      %v1595 = vld [vmem:[%s165 + $0xab] sm:$0xff]
      %v1596 = vld [vmem:[%s165 + $0xb3] sm:$0xff]
      %v1597 = vld [vmem:[%s165 + $0xbb] sm:$0xff]
      %v1598 = vld [vmem:[%s165 + $0xc3] sm:$0xff]
      %v1599 = vld [vmem:[%s165 + $0xcb] sm:$0xff]
      %v1600 = vld [vmem:[%s165 + $0xd3] sm:$0xff]
      %v1601 = vld [vmem:[%s165 + $0xdb] sm:$0xff]
      %v1602 = vld [vmem:[%s165 + $0xe3] sm:$0xff]
      %v1603 = vld [vmem:[%s165 + $0xeb] sm:$0xff]
      %v1604 = vld [vmem:[%s165 + $0xf3] sm:$0xff]
      %v1605 = vld [vmem:[%s165 + $0xfb] sm:$0xff]
      %v1606 = vld [vmem:[%s165 + $0x103] sm:$0xff]
      %v1607 = vld [vmem:[%s165 + $0x10b] sm:$0xff]
      %v1608 = vld [vmem:[%s165 + $0x113] sm:$0xff]
      %v1609 = vld [vmem:[%s165 + $0x11b] sm:$0xff]
      %v1610 = vld [vmem:[%s165 + $0x123] sm:$0xff]
      %v1611 = vld [vmem:[%s165 + $0x12b] sm:$0xff]
      %v1612 = vld [vmem:[%s165 + $0x133] sm:$0xff]
      %v1613 = vld [vmem:[%s165 + $0x13b] sm:$0xff]
      %v1614 = vld [vmem:[%s165 + $0x143] sm:$0xff]
      %v1615 = vld [vmem:[%s165 + $0x14b] sm:$0xff]
      %v1616 = vld [vmem:[%s165 + $0x153] sm:$0xf]
      %v1617 = vpack.c.bf16 %v1577, %v1576
      %v1618 = vpack.c.bf16 %v1579, %v1578
      %v1619 = vpack.c.bf16 %v1581, %v1580
      %v1620 = vpack.c.bf16 %v1583, %v1582
      %v1621 = vpack.c.bf16 %v1585, %v1584
      %v1622 = vpack.c.bf16 %v1587, %v1586
      %v1623 = vpack.c.bf16 %v1589, %v1588
      %v1624 = vpack.c.bf16 %v1591, %v1590
      %v1625 = vpack.c.bf16 %v1593, %v1592
      %v1626 = vpack.c.bf16 %v1595, %v1594
      %v1627 = vpack.c.bf16 %v1597, %v1596
      %v1628 = vpack.c.bf16 %v1599, %v1598
      %v1629 = vpack.c.bf16 %v1601, %v1600
      %v1630 = vpack.c.bf16 %v1603, %v1602
      %v1631 = vpack.c.bf16 %v1605, %v1604
      %v1632 = vpack.c.bf16 %v1607, %v1606
      %v1633 = vpack.c.bf16 %v1609, %v1608
      %v1634 = vpack.c.bf16 %v1611, %v1610
      %v1635 = vpack.c.bf16 %v1613, %v1612
      %v1636 = vpack.c.bf16 %v1615, %v1614
      %v1637 = vpack.c.bf16 %v1616, %v1616
      %v1638 = vld [vmem:[%s1 + $0x10] sm:$0xf]
      %v1639 = vpack.c.bf16 %v1638, %v1638
      %v1641 = vsel %vm300, %v1617, 0
      %v1644 = vsel %vm300, %v1618, 0
      %v1647 = vsel %vm300, %v1619, 0
      %v1650 = vsel %vm300, %v1620, 0
      %v1653 = vsel %vm300, %v1621, 0
      %v1656 = vsel %vm300, %v1622, 0
      %v1659 = vsel %vm300, %v1623, 0
      %v1662 = vsel %vm300, %v1624, 0
      %v1665 = vsel %vm300, %v1625, 0
      %v1668 = vsel %vm300, %v1626, 0
      %v1671 = vsel %vm300, %v1627, 0
      %v1674 = vsel %vm300, %v1628, 0
      %v1677 = vsel %vm300, %v1629, 0
      %v1680 = vsel %vm300, %v1630, 0
      %v1683 = vsel %vm300, %v1631, 0
      %v1686 = vsel %vm300, %v1632, 0
      %v1689 = vsel %vm300, %v1633, 0
      %v1692 = vsel %vm300, %v1634, 0
      %v1695 = vsel %vm300, %v1635, 0
      %v1698 = vsel %vm300, %v1636, 0
      %v1701 = vsel %vm300, %v1637, 0
      %v1704 = vsel %vm364, %v1639, 0
      %1706 = vmatprep.subr.bf16.mxu0 0
      %1707 = vmatpush1.bf16.msra.mxu0 0
      %1708 = vmatprep.subr.bf16.mxu0 0
      %1709 = vmatpush1.bf16.msra.mxu0 0
      %1710 = vmatprep.subr.bf16.mxu0 0
      %1711 = vmatpush1.bf16.msra.mxu0 0
      %1712 = vmatprep.subr.bf16.mxu0 0
      %1713 = vmatpush1.bf16.msra.mxu0 0
      %1714 = vmatprep.subr.bf16.mxu0 0
      %1715 = vmatpush1.bf16.msra.mxu0 0
      %1716 = vmatprep.subr.bf16.mxu0 0
      %1717 = vmatpush1.bf16.msra.mxu0 0
      %1718 = vmatprep.subr.bf16.mxu0 0
      %1719 = vmatpush1.bf16.msra.mxu0 0
      %1720 = vmatprep.subr.bf16.mxu0 0
      %1721 = vmatpush1.bf16.msra.mxu0 %v1704
      %1722 = vmatprep.subr.bf16.mxu0 0
      %1723 = vmatpush2.bf16.msra.mxu0 0
      %1724 = vmatprep.subr.bf16.mxu0 0
      %1725 = vmatpush2.bf16.msra.mxu0 0
      %1726 = vmatprep.subr.bf16.mxu0 0
      %1727 = vmatpush2.bf16.msra.mxu0 0
      %1728 = vmatprep.subr.bf16.mxu0 0
      %1729 = vmatpush2.bf16.msra.mxu0 0
      %1730 = vmatprep.subr.bf16.mxu0 0
      %1731 = vmatpush2.bf16.msra.mxu0 0
      %1732 = vmatprep.subr.bf16.mxu0 0
      %1733 = vmatpush2.bf16.msra.mxu0 0
      %1734 = vmatprep.subr.bf16.mxu0 0
      %1735 = vmatpush2.bf16.msra.mxu0 0
      %1736 = vmatprep.subr.bf16.mxu0 0
      %1737 = vmatpush2.bf16.msra.mxu0 0
      %1738 = vmatprep.mubr.bf16.mxu0 0
      %1739 = vmatmul.mubr.bf16.gmra.mxu0 %v1641
      %v1740 = vpop.f32.mrf.mxu0
      %v1741 = vadd.f32 0.0, %v1740
      %v1742 = vpop.f32.mrf.mxu0
      %v1743 = vpop.f32.mrf.mxu0
      %v1744 = vadd.f32 0.0, %v1743
      %v1745 = vpop.f32.mrf.mxu0
      %1746 = vmatprep.mubr.bf16.mxu0 0
      %1747 = vmatmul.mubr.bf16.gmra.mxu0 %v1644
      %v1748 = vpop.f32.mrf.mxu0
      %v1749 = vadd.f32 0.0, %v1748
      %v1750 = vpop.f32.mrf.mxu0
      %v1751 = vpop.f32.mrf.mxu0
      %v1752 = vadd.f32 0.0, %v1751
      %v1753 = vpop.f32.mrf.mxu0
      %1754 = vmatprep.mubr.bf16.mxu0 0
      %1755 = vmatmul.mubr.bf16.gmra.mxu0 %v1647
      %v1756 = vpop.f32.mrf.mxu0
      %v1757 = vadd.f32 0.0, %v1756
      %v1758 = vpop.f32.mrf.mxu0
      %v1759 = vpop.f32.mrf.mxu0
      %v1760 = vadd.f32 0.0, %v1759
      %v1761 = vpop.f32.mrf.mxu0
      %1762 = vmatprep.mubr.bf16.mxu0 0
      %1763 = vmatmul.mubr.bf16.gmra.mxu0 %v1650
      %v1764 = vpop.f32.mrf.mxu0
      %v1765 = vadd.f32 0.0, %v1764
      %v1766 = vpop.f32.mrf.mxu0
      %v1767 = vpop.f32.mrf.mxu0
      %v1768 = vadd.f32 0.0, %v1767
      %v1769 = vpop.f32.mrf.mxu0
      %1770 = vmatprep.mubr.bf16.mxu0 0
      %1771 = vmatmul.mubr.bf16.gmra.mxu0 %v1653
      %v1772 = vpop.f32.mrf.mxu0
      %v1773 = vadd.f32 0.0, %v1772
      %v1774 = vpop.f32.mrf.mxu0
      %v1775 = vpop.f32.mrf.mxu0
      %v1776 = vadd.f32 0.0, %v1775
      %v1777 = vpop.f32.mrf.mxu0
      %1778 = vmatprep.mubr.bf16.mxu0 0
      %1779 = vmatmul.mubr.bf16.gmra.mxu0 %v1656
      %v1780 = vpop.f32.mrf.mxu0
      %v1781 = vadd.f32 0.0, %v1780
      %v1782 = vpop.f32.mrf.mxu0
      %v1783 = vpop.f32.mrf.mxu0
      %v1784 = vadd.f32 0.0, %v1783
      %v1785 = vpop.f32.mrf.mxu0
      %1786 = vmatprep.mubr.bf16.mxu0 0
      %1787 = vmatmul.mubr.bf16.gmra.mxu0 %v1659
      %v1788 = vpop.f32.mrf.mxu0
      %v1789 = vadd.f32 0.0, %v1788
      %v1790 = vpop.f32.mrf.mxu0
      %v1791 = vpop.f32.mrf.mxu0
      %v1792 = vadd.f32 0.0, %v1791
      %v1793 = vpop.f32.mrf.mxu0
      %1794 = vmatprep.mubr.bf16.mxu0 0
      %1795 = vmatmul.mubr.bf16.gmra.mxu0 %v1662
      %v1796 = vpop.f32.mrf.mxu0
      %v1797 = vadd.f32 0.0, %v1796
      %v1798 = vpop.f32.mrf.mxu0
      %v1799 = vpop.f32.mrf.mxu0
      %v1800 = vadd.f32 0.0, %v1799
      %v1801 = vpop.f32.mrf.mxu0
      %1802 = vmatprep.mubr.bf16.mxu0 0
      %1803 = vmatmul.mubr.bf16.gmra.mxu0 %v1665
      %v1804 = vpop.f32.mrf.mxu0
      %v1805 = vadd.f32 0.0, %v1804
      %v1806 = vpop.f32.mrf.mxu0
      %v1807 = vpop.f32.mrf.mxu0
      %v1808 = vadd.f32 0.0, %v1807
      %v1809 = vpop.f32.mrf.mxu0
      %1810 = vmatprep.mubr.bf16.mxu0 0
      %1811 = vmatmul.mubr.bf16.gmra.mxu0 %v1668
      %v1812 = vpop.f32.mrf.mxu0
      %v1813 = vadd.f32 0.0, %v1812
      %v1814 = vpop.f32.mrf.mxu0
      %v1815 = vpop.f32.mrf.mxu0
      %v1816 = vadd.f32 0.0, %v1815
      %v1817 = vpop.f32.mrf.mxu0
      %1818 = vmatprep.mubr.bf16.mxu0 0
      %1819 = vmatmul.mubr.bf16.gmra.mxu0 %v1671
      %v1820 = vpop.f32.mrf.mxu0
      %v1821 = vadd.f32 0.0, %v1820
      %v1822 = vpop.f32.mrf.mxu0
      %v1823 = vpop.f32.mrf.mxu0
      %v1824 = vadd.f32 0.0, %v1823
      %v1825 = vpop.f32.mrf.mxu0
      %1826 = vmatprep.mubr.bf16.mxu0 0
      %1827 = vmatmul.mubr.bf16.gmra.mxu0 %v1674
      %v1828 = vpop.f32.mrf.mxu0
      %v1829 = vadd.f32 0.0, %v1828
      %v1830 = vpop.f32.mrf.mxu0
      %v1831 = vpop.f32.mrf.mxu0
      %v1832 = vadd.f32 0.0, %v1831
      %v1833 = vpop.f32.mrf.mxu0
      %1834 = vmatprep.mubr.bf16.mxu0 0
      %1835 = vmatmul.mubr.bf16.gmra.mxu0 %v1677
      %v1836 = vpop.f32.mrf.mxu0
      %v1837 = vadd.f32 0.0, %v1836
      %v1838 = vpop.f32.mrf.mxu0
      %v1839 = vpop.f32.mrf.mxu0
      %v1840 = vadd.f32 0.0, %v1839
      %v1841 = vpop.f32.mrf.mxu0
      %1842 = vmatprep.mubr.bf16.mxu0 0
      %1843 = vmatmul.mubr.bf16.gmra.mxu0 %v1680
      %v1844 = vpop.f32.mrf.mxu0
      %v1845 = vadd.f32 0.0, %v1844
      %v1846 = vpop.f32.mrf.mxu0
      %v1847 = vpop.f32.mrf.mxu0
      %v1848 = vadd.f32 0.0, %v1847
      %v1849 = vpop.f32.mrf.mxu0
      %1850 = vmatprep.mubr.bf16.mxu0 0
      %1851 = vmatmul.mubr.bf16.gmra.mxu0 %v1683
      %v1852 = vpop.f32.mrf.mxu0
      %v1853 = vadd.f32 0.0, %v1852
      %v1854 = vpop.f32.mrf.mxu0
      %v1855 = vpop.f32.mrf.mxu0
      %v1856 = vadd.f32 0.0, %v1855
      %v1857 = vpop.f32.mrf.mxu0
      %1858 = vmatprep.mubr.bf16.mxu0 0
      %1859 = vmatmul.mubr.bf16.gmra.mxu0 %v1686
      %v1860 = vpop.f32.mrf.mxu0
      %v1861 = vadd.f32 0.0, %v1860
      %v1862 = vpop.f32.mrf.mxu0
      %v1863 = vpop.f32.mrf.mxu0
      %v1864 = vadd.f32 0.0, %v1863
      %v1865 = vpop.f32.mrf.mxu0
      %1866 = vmatprep.mubr.bf16.mxu0 0
      %1867 = vmatmul.mubr.bf16.gmra.mxu0 %v1689
      %v1868 = vpop.f32.mrf.mxu0
      %v1869 = vadd.f32 0.0, %v1868
      %v1870 = vpop.f32.mrf.mxu0
      %v1871 = vpop.f32.mrf.mxu0
      %v1872 = vadd.f32 0.0, %v1871
      %v1873 = vpop.f32.mrf.mxu0
      %1874 = vmatprep.mubr.bf16.mxu0 0
      %1875 = vmatmul.mubr.bf16.gmra.mxu0 %v1692
      %v1876 = vpop.f32.mrf.mxu0
      %v1877 = vadd.f32 0.0, %v1876
      %v1878 = vpop.f32.mrf.mxu0
      %v1879 = vpop.f32.mrf.mxu0
      %v1880 = vadd.f32 0.0, %v1879
      %v1881 = vpop.f32.mrf.mxu0
      %1882 = vmatprep.mubr.bf16.mxu0 0
      %1883 = vmatmul.mubr.bf16.gmra.mxu0 %v1695
      %v1884 = vpop.f32.mrf.mxu0
      %v1885 = vadd.f32 0.0, %v1884
      %v1886 = vpop.f32.mrf.mxu0
      %v1887 = vpop.f32.mrf.mxu0
      %v1888 = vadd.f32 0.0, %v1887
      %v1889 = vpop.f32.mrf.mxu0
      %1890 = vmatprep.mubr.bf16.mxu0 0
      %1891 = vmatmul.mubr.bf16.gmra.mxu0 %v1698
      %v1892 = vpop.f32.mrf.mxu0
      %v1893 = vadd.f32 0.0, %v1892
      %v1894 = vpop.f32.mrf.mxu0
      %v1895 = vpop.f32.mrf.mxu0
      %v1896 = vadd.f32 0.0, %v1895
      %v1897 = vpop.f32.mrf.mxu0
      %1898 = vmatprep.mubr.bf16.mxu0 0
      %1899 = vmatmul.mubr.bf16.gmra.mxu0 %v1701
      %v1900 = vpop.f32.mrf.mxu0
      %v1901 = vadd.f32 0.0, %v1900
      %v1902 = vpop.f32.mrf.mxu0
      %v1903 = vpop.f32.mrf.mxu0
      %v1904 = vpop.f32.mrf.mxu0
      %1905 = vdwg.mxu0
      %v1906 = vadd.f32 %v1535, %v1741
      %v1907 = vadd.f32 %v1536, %v1744
      %v1908 = vadd.f32 %v1537, %v1749
      %v1909 = vadd.f32 %v1538, %v1752
      %v1910 = vadd.f32 %v1539, %v1757
      %v1911 = vadd.f32 %v1540, %v1760
      %v1912 = vadd.f32 %v1541, %v1765
      %v1913 = vadd.f32 %v1542, %v1768
      %v1914 = vadd.f32 %v1543, %v1773
      %v1915 = vadd.f32 %v1544, %v1776
      %v1916 = vadd.f32 %v1545, %v1781
      %v1917 = vadd.f32 %v1546, %v1784
      %v1918 = vadd.f32 %v1547, %v1789
      %v1919 = vadd.f32 %v1548, %v1792
      %v1920 = vadd.f32 %v1549, %v1797
      %v1921 = vadd.f32 %v1550, %v1800
      %v1922 = vadd.f32 %v1551, %v1805
      %v1923 = vadd.f32 %v1552, %v1808
      %v1924 = vadd.f32 %v1553, %v1813
      %v1925 = vadd.f32 %v1554, %v1816
      %v1926 = vadd.f32 %v1555, %v1821
      %v1927 = vadd.f32 %v1556, %v1824
      %v1928 = vadd.f32 %v1557, %v1829
      %v1929 = vadd.f32 %v1558, %v1832
      %v1930 = vadd.f32 %v1559, %v1837
      %v1931 = vadd.f32 %v1560, %v1840
      %v1932 = vadd.f32 %v1561, %v1845
      %v1933 = vadd.f32 %v1562, %v1848
      %v1934 = vadd.f32 %v1563, %v1853
      %v1935 = vadd.f32 %v1564, %v1856
      %v1936 = vadd.f32 %v1565, %v1861
      %v1937 = vadd.f32 %v1566, %v1864
      %v1938 = vadd.f32 %v1567, %v1869
      %v1939 = vadd.f32 %v1568, %v1872
      %v1940 = vadd.f32 %v1569, %v1877
      %v1941 = vadd.f32 %v1570, %v1880
      %v1942 = vadd.f32 %v1571, %v1885
      %v1943 = vadd.f32 %v1572, %v1888
      %v1944 = vadd.f32 %v1573, %v1893
      %v1945 = vadd.f32 %v1574, %v1896
      %v1946 = vadd.f32 %v1575, %v1901
      %v1947 = vld [vmem:[%s165 + $0x14] sm:$0xff]
      %v1948 = vld [vmem:[%s165 + $0x1c] sm:$0xff]
      %v1949 = vld [vmem:[%s165 + $0x24] sm:$0xff]
      %v1950 = vld [vmem:[%s165 + $0x2c] sm:$0xff]
      %v1951 = vld [vmem:[%s165 + $0x34] sm:$0xff]
      %v1952 = vld [vmem:[%s165 + $0x3c] sm:$0xff]
      %v1953 = vld [vmem:[%s165 + $0x44] sm:$0xff]
      %v1954 = vld [vmem:[%s165 + $0x4c] sm:$0xff]
      %v1955 = vld [vmem:[%s165 + $0x54] sm:$0xff]
      %v1956 = vld [vmem:[%s165 + $0x5c] sm:$0xff]
      %v1957 = vld [vmem:[%s165 + $0x64] sm:$0xff]
      %v1958 = vld [vmem:[%s165 + $0x6c] sm:$0xff]
      %v1959 = vld [vmem:[%s165 + $0x74] sm:$0xff]
      %v1960 = vld [vmem:[%s165 + $0x7c] sm:$0xff]
      %v1961 = vld [vmem:[%s165 + $0x84] sm:$0xff]
      %v1962 = vld [vmem:[%s165 + $0x8c] sm:$0xff]
      %v1963 = vld [vmem:[%s165 + $0x94] sm:$0xff]
      %v1964 = vld [vmem:[%s165 + $0x9c] sm:$0xff]
      %v1965 = vld [vmem:[%s165 + $0xa4] sm:$0xff]
      %v1966 = vld [vmem:[%s165 + $0xac] sm:$0xff]
      %v1967 = vld [vmem:[%s165 + $0xb4] sm:$0xff]
      %v1968 = vld [vmem:[%s165 + $0xbc] sm:$0xff]
      %v1969 = vld [vmem:[%s165 + $0xc4] sm:$0xff]
      %v1970 = vld [vmem:[%s165 + $0xcc] sm:$0xff]
      %v1971 = vld [vmem:[%s165 + $0xd4] sm:$0xff]
      %v1972 = vld [vmem:[%s165 + $0xdc] sm:$0xff]
      %v1973 = vld [vmem:[%s165 + $0xe4] sm:$0xff]
      %v1974 = vld [vmem:[%s165 + $0xec] sm:$0xff]
      %v1975 = vld [vmem:[%s165 + $0xf4] sm:$0xff]
      %v1976 = vld [vmem:[%s165 + $0xfc] sm:$0xff]
      %v1977 = vld [vmem:[%s165 + $0x104] sm:$0xff]
      %v1978 = vld [vmem:[%s165 + $0x10c] sm:$0xff]
      %v1979 = vld [vmem:[%s165 + $0x114] sm:$0xff]
      %v1980 = vld [vmem:[%s165 + $0x11c] sm:$0xff]
      %v1981 = vld [vmem:[%s165 + $0x124] sm:$0xff]
      %v1982 = vld [vmem:[%s165 + $0x12c] sm:$0xff]
      %v1983 = vld [vmem:[%s165 + $0x134] sm:$0xff]
      %v1984 = vld [vmem:[%s165 + $0x13c] sm:$0xff]
      %v1985 = vld [vmem:[%s165 + $0x144] sm:$0xff]
      %v1986 = vld [vmem:[%s165 + $0x14c] sm:$0xff]
      %v1987 = vld [vmem:[%s165 + $0x154] sm:$0xf]
      %v1988 = vpack.c.bf16 %v1948, %v1947
      %v1989 = vpack.c.bf16 %v1950, %v1949
      %v1990 = vpack.c.bf16 %v1952, %v1951
      %v1991 = vpack.c.bf16 %v1954, %v1953
      %v1992 = vpack.c.bf16 %v1956, %v1955
      %v1993 = vpack.c.bf16 %v1958, %v1957
      %v1994 = vpack.c.bf16 %v1960, %v1959
      %v1995 = vpack.c.bf16 %v1962, %v1961
      %v1996 = vpack.c.bf16 %v1964, %v1963
      %v1997 = vpack.c.bf16 %v1966, %v1965
      %v1998 = vpack.c.bf16 %v1968, %v1967
      %v1999 = vpack.c.bf16 %v1970, %v1969
      %v2000 = vpack.c.bf16 %v1972, %v1971
      %v2001 = vpack.c.bf16 %v1974, %v1973
      %v2002 = vpack.c.bf16 %v1976, %v1975
      %v2003 = vpack.c.bf16 %v1978, %v1977
      %v2004 = vpack.c.bf16 %v1980, %v1979
      %v2005 = vpack.c.bf16 %v1982, %v1981
      %v2006 = vpack.c.bf16 %v1984, %v1983
      %v2007 = vpack.c.bf16 %v1986, %v1985
      %v2008 = vpack.c.bf16 %v1987, %v1987
      %v2009 = vld [vmem:[%s1 + $0x14] sm:$0xf]
      %v2010 = vpack.c.bf16 %v2009, %v2009
      %v2012 = vsel %vm300, %v1988, 0
      %v2015 = vsel %vm300, %v1989, 0
      %v2018 = vsel %vm300, %v1990, 0
      %v2021 = vsel %vm300, %v1991, 0
      %v2024 = vsel %vm300, %v1992, 0
      %v2027 = vsel %vm300, %v1993, 0
      %v2030 = vsel %vm300, %v1994, 0
      %v2033 = vsel %vm300, %v1995, 0
      %v2036 = vsel %vm300, %v1996, 0
      %v2039 = vsel %vm300, %v1997, 0
      %v2042 = vsel %vm300, %v1998, 0
      %v2045 = vsel %vm300, %v1999, 0
      %v2048 = vsel %vm300, %v2000, 0
      %v2051 = vsel %vm300, %v2001, 0
      %v2054 = vsel %vm300, %v2002, 0
      %v2057 = vsel %vm300, %v2003, 0
      %v2060 = vsel %vm300, %v2004, 0
      %v2063 = vsel %vm300, %v2005, 0
      %v2066 = vsel %vm300, %v2006, 0
      %v2069 = vsel %vm300, %v2007, 0
      %v2072 = vsel %vm300, %v2008, 0
      %v2075 = vsel %vm364, %v2010, 0
      %2077 = vmatprep.subr.bf16.mxu0 0
      %2078 = vmatpush1.bf16.msra.mxu0 0
      %2079 = vmatprep.subr.bf16.mxu0 0
      %2080 = vmatpush1.bf16.msra.mxu0 0
      %2081 = vmatprep.subr.bf16.mxu0 0
      %2082 = vmatpush1.bf16.msra.mxu0 0
      %2083 = vmatprep.subr.bf16.mxu0 0
      %2084 = vmatpush1.bf16.msra.mxu0 0
      %2085 = vmatprep.subr.bf16.mxu0 0
      %2086 = vmatpush1.bf16.msra.mxu0 0
      %2087 = vmatprep.subr.bf16.mxu0 0
      %2088 = vmatpush1.bf16.msra.mxu0 0
      %2089 = vmatprep.subr.bf16.mxu0 0
      %2090 = vmatpush1.bf16.msra.mxu0 0
      %2091 = vmatprep.subr.bf16.mxu0 0
      %2092 = vmatpush1.bf16.msra.mxu0 %v2075
      %2093 = vmatprep.subr.bf16.mxu0 0
      %2094 = vmatpush2.bf16.msra.mxu0 0
      %2095 = vmatprep.subr.bf16.mxu0 0
      %2096 = vmatpush2.bf16.msra.mxu0 0
      %2097 = vmatprep.subr.bf16.mxu0 0
      %2098 = vmatpush2.bf16.msra.mxu0 0
      %2099 = vmatprep.subr.bf16.mxu0 0
      %2100 = vmatpush2.bf16.msra.mxu0 0
      %2101 = vmatprep.subr.bf16.mxu0 0
      %2102 = vmatpush2.bf16.msra.mxu0 0
      %2103 = vmatprep.subr.bf16.mxu0 0
      %2104 = vmatpush2.bf16.msra.mxu0 0
      %2105 = vmatprep.subr.bf16.mxu0 0
      %2106 = vmatpush2.bf16.msra.mxu0 0
      %2107 = vmatprep.subr.bf16.mxu0 0
      %2108 = vmatpush2.bf16.msra.mxu0 0
      %2109 = vmatprep.mubr.bf16.mxu0 0
      %2110 = vmatmul.mubr.bf16.gmra.mxu0 %v2012
      %v2111 = vpop.f32.mrf.mxu0
      %v2112 = vadd.f32 0.0, %v2111
      %v2113 = vpop.f32.mrf.mxu0
      %v2114 = vpop.f32.mrf.mxu0
      %v2115 = vadd.f32 0.0, %v2114
      %v2116 = vpop.f32.mrf.mxu0
      %2117 = vmatprep.mubr.bf16.mxu0 0
      %2118 = vmatmul.mubr.bf16.gmra.mxu0 %v2015
      %v2119 = vpop.f32.mrf.mxu0
      %v2120 = vadd.f32 0.0, %v2119
      %v2121 = vpop.f32.mrf.mxu0
      %v2122 = vpop.f32.mrf.mxu0
      %v2123 = vadd.f32 0.0, %v2122
      %v2124 = vpop.f32.mrf.mxu0
      %2125 = vmatprep.mubr.bf16.mxu0 0
      %2126 = vmatmul.mubr.bf16.gmra.mxu0 %v2018
      %v2127 = vpop.f32.mrf.mxu0
      %v2128 = vadd.f32 0.0, %v2127
      %v2129 = vpop.f32.mrf.mxu0
      %v2130 = vpop.f32.mrf.mxu0
      %v2131 = vadd.f32 0.0, %v2130
      %v2132 = vpop.f32.mrf.mxu0
      %2133 = vmatprep.mubr.bf16.mxu0 0
      %2134 = vmatmul.mubr.bf16.gmra.mxu0 %v2021
      %v2135 = vpop.f32.mrf.mxu0
      %v2136 = vadd.f32 0.0, %v2135
      %v2137 = vpop.f32.mrf.mxu0
      %v2138 = vpop.f32.mrf.mxu0
      %v2139 = vadd.f32 0.0, %v2138
      %v2140 = vpop.f32.mrf.mxu0
      %2141 = vmatprep.mubr.bf16.mxu0 0
      %2142 = vmatmul.mubr.bf16.gmra.mxu0 %v2024
      %v2143 = vpop.f32.mrf.mxu0
      %v2144 = vadd.f32 0.0, %v2143
      %v2145 = vpop.f32.mrf.mxu0
      %v2146 = vpop.f32.mrf.mxu0
      %v2147 = vadd.f32 0.0, %v2146
      %v2148 = vpop.f32.mrf.mxu0
      %2149 = vmatprep.mubr.bf16.mxu0 0
      %2150 = vmatmul.mubr.bf16.gmra.mxu0 %v2027
      %v2151 = vpop.f32.mrf.mxu0
      %v2152 = vadd.f32 0.0, %v2151
      %v2153 = vpop.f32.mrf.mxu0
      %v2154 = vpop.f32.mrf.mxu0
      %v2155 = vadd.f32 0.0, %v2154
      %v2156 = vpop.f32.mrf.mxu0
      %2157 = vmatprep.mubr.bf16.mxu0 0
      %2158 = vmatmul.mubr.bf16.gmra.mxu0 %v2030
      %v2159 = vpop.f32.mrf.mxu0
      %v2160 = vadd.f32 0.0, %v2159
      %v2161 = vpop.f32.mrf.mxu0
      %v2162 = vpop.f32.mrf.mxu0
      %v2163 = vadd.f32 0.0, %v2162
      %v2164 = vpop.f32.mrf.mxu0
      %2165 = vmatprep.mubr.bf16.mxu0 0
      %2166 = vmatmul.mubr.bf16.gmra.mxu0 %v2033
      %v2167 = vpop.f32.mrf.mxu0
      %v2168 = vadd.f32 0.0, %v2167
      %v2169 = vpop.f32.mrf.mxu0
      %v2170 = vpop.f32.mrf.mxu0
      %v2171 = vadd.f32 0.0, %v2170
      %v2172 = vpop.f32.mrf.mxu0
      %2173 = vmatprep.mubr.bf16.mxu0 0
      %2174 = vmatmul.mubr.bf16.gmra.mxu0 %v2036
      %v2175 = vpop.f32.mrf.mxu0
      %v2176 = vadd.f32 0.0, %v2175
      %v2177 = vpop.f32.mrf.mxu0
      %v2178 = vpop.f32.mrf.mxu0
      %v2179 = vadd.f32 0.0, %v2178
      %v2180 = vpop.f32.mrf.mxu0
      %2181 = vmatprep.mubr.bf16.mxu0 0
      %2182 = vmatmul.mubr.bf16.gmra.mxu0 %v2039
      %v2183 = vpop.f32.mrf.mxu0
      %v2184 = vadd.f32 0.0, %v2183
      %v2185 = vpop.f32.mrf.mxu0
      %v2186 = vpop.f32.mrf.mxu0
      %v2187 = vadd.f32 0.0, %v2186
      %v2188 = vpop.f32.mrf.mxu0
      %2189 = vmatprep.mubr.bf16.mxu0 0
      %2190 = vmatmul.mubr.bf16.gmra.mxu0 %v2042
      %v2191 = vpop.f32.mrf.mxu0
      %v2192 = vadd.f32 0.0, %v2191
      %v2193 = vpop.f32.mrf.mxu0
      %v2194 = vpop.f32.mrf.mxu0
      %v2195 = vadd.f32 0.0, %v2194
      %v2196 = vpop.f32.mrf.mxu0
      %2197 = vmatprep.mubr.bf16.mxu0 0
      %2198 = vmatmul.mubr.bf16.gmra.mxu0 %v2045
      %v2199 = vpop.f32.mrf.mxu0
      %v2200 = vadd.f32 0.0, %v2199
      %v2201 = vpop.f32.mrf.mxu0
      %v2202 = vpop.f32.mrf.mxu0
      %v2203 = vadd.f32 0.0, %v2202
      %v2204 = vpop.f32.mrf.mxu0
      %2205 = vmatprep.mubr.bf16.mxu0 0
      %2206 = vmatmul.mubr.bf16.gmra.mxu0 %v2048
      %v2207 = vpop.f32.mrf.mxu0
      %v2208 = vadd.f32 0.0, %v2207
      %v2209 = vpop.f32.mrf.mxu0
      %v2210 = vpop.f32.mrf.mxu0
      %v2211 = vadd.f32 0.0, %v2210
      %v2212 = vpop.f32.mrf.mxu0
      %2213 = vmatprep.mubr.bf16.mxu0 0
      %2214 = vmatmul.mubr.bf16.gmra.mxu0 %v2051
      %v2215 = vpop.f32.mrf.mxu0
      %v2216 = vadd.f32 0.0, %v2215
      %v2217 = vpop.f32.mrf.mxu0
      %v2218 = vpop.f32.mrf.mxu0
      %v2219 = vadd.f32 0.0, %v2218
      %v2220 = vpop.f32.mrf.mxu0
      %2221 = vmatprep.mubr.bf16.mxu0 0
      %2222 = vmatmul.mubr.bf16.gmra.mxu0 %v2054
      %v2223 = vpop.f32.mrf.mxu0
      %v2224 = vadd.f32 0.0, %v2223
      %v2225 = vpop.f32.mrf.mxu0
      %v2226 = vpop.f32.mrf.mxu0
      %v2227 = vadd.f32 0.0, %v2226
      %v2228 = vpop.f32.mrf.mxu0
      %2229 = vmatprep.mubr.bf16.mxu0 0
      %2230 = vmatmul.mubr.bf16.gmra.mxu0 %v2057
      %v2231 = vpop.f32.mrf.mxu0
      %v2232 = vadd.f32 0.0, %v2231
      %v2233 = vpop.f32.mrf.mxu0
      %v2234 = vpop.f32.mrf.mxu0
      %v2235 = vadd.f32 0.0, %v2234
      %v2236 = vpop.f32.mrf.mxu0
      %2237 = vmatprep.mubr.bf16.mxu0 0
      %2238 = vmatmul.mubr.bf16.gmra.mxu0 %v2060
      %v2239 = vpop.f32.mrf.mxu0
      %v2240 = vadd.f32 0.0, %v2239
      %v2241 = vpop.f32.mrf.mxu0
      %v2242 = vpop.f32.mrf.mxu0
      %v2243 = vadd.f32 0.0, %v2242
      %v2244 = vpop.f32.mrf.mxu0
      %2245 = vmatprep.mubr.bf16.mxu0 0
      %2246 = vmatmul.mubr.bf16.gmra.mxu0 %v2063
      %v2247 = vpop.f32.mrf.mxu0
      %v2248 = vadd.f32 0.0, %v2247
      %v2249 = vpop.f32.mrf.mxu0
      %v2250 = vpop.f32.mrf.mxu0
      %v2251 = vadd.f32 0.0, %v2250
      %v2252 = vpop.f32.mrf.mxu0
      %2253 = vmatprep.mubr.bf16.mxu0 0
      %2254 = vmatmul.mubr.bf16.gmra.mxu0 %v2066
      %v2255 = vpop.f32.mrf.mxu0
      %v2256 = vadd.f32 0.0, %v2255
      %v2257 = vpop.f32.mrf.mxu0
      %v2258 = vpop.f32.mrf.mxu0
      %v2259 = vadd.f32 0.0, %v2258
      %v2260 = vpop.f32.mrf.mxu0
      %2261 = vmatprep.mubr.bf16.mxu0 0
      %2262 = vmatmul.mubr.bf16.gmra.mxu0 %v2069
      %v2263 = vpop.f32.mrf.mxu0
      %v2264 = vadd.f32 0.0, %v2263
      %v2265 = vpop.f32.mrf.mxu0
      %v2266 = vpop.f32.mrf.mxu0
      %v2267 = vadd.f32 0.0, %v2266
      %v2268 = vpop.f32.mrf.mxu0
      %2269 = vmatprep.mubr.bf16.mxu0 0
      %2270 = vmatmul.mubr.bf16.gmra.mxu0 %v2072
      %v2271 = vpop.f32.mrf.mxu0
      %v2272 = vadd.f32 0.0, %v2271
      %v2273 = vpop.f32.mrf.mxu0
      %v2274 = vpop.f32.mrf.mxu0
      %v2275 = vpop.f32.mrf.mxu0
      %2276 = vdwg.mxu0
      %v2277 = vadd.f32 %v1906, %v2112
      %v2278 = vadd.f32 %v1907, %v2115
      %v2279 = vadd.f32 %v1908, %v2120
      %v2280 = vadd.f32 %v1909, %v2123
      %v2281 = vadd.f32 %v1910, %v2128
      %v2282 = vadd.f32 %v1911, %v2131
      %v2283 = vadd.f32 %v1912, %v2136
      %v2284 = vadd.f32 %v1913, %v2139
      %v2285 = vadd.f32 %v1914, %v2144
      %v2286 = vadd.f32 %v1915, %v2147
      %v2287 = vadd.f32 %v1916, %v2152
      %v2288 = vadd.f32 %v1917, %v2155
      %v2289 = vadd.f32 %v1918, %v2160
      %v2290 = vadd.f32 %v1919, %v2163
      %v2291 = vadd.f32 %v1920, %v2168
      %v2292 = vadd.f32 %v1921, %v2171
      %v2293 = vadd.f32 %v1922, %v2176
      %v2294 = vadd.f32 %v1923, %v2179
      %v2295 = vadd.f32 %v1924, %v2184
      %v2296 = vadd.f32 %v1925, %v2187
      %v2297 = vadd.f32 %v1926, %v2192
      %v2298 = vadd.f32 %v1927, %v2195
      %v2299 = vadd.f32 %v1928, %v2200
      %v2300 = vadd.f32 %v1929, %v2203
      %v2301 = vadd.f32 %v1930, %v2208
      %v2302 = vadd.f32 %v1931, %v2211
      %v2303 = vadd.f32 %v1932, %v2216
      %v2304 = vadd.f32 %v1933, %v2219
      %v2305 = vadd.f32 %v1934, %v2224
      %v2306 = vadd.f32 %v1935, %v2227
      %v2307 = vadd.f32 %v1936, %v2232
      %v2308 = vadd.f32 %v1937, %v2235
      %v2309 = vadd.f32 %v1938, %v2240
      %v2310 = vadd.f32 %v1939, %v2243
      %v2311 = vadd.f32 %v1940, %v2248
      %v2312 = vadd.f32 %v1941, %v2251
      %v2313 = vadd.f32 %v1942, %v2256
      %v2314 = vadd.f32 %v1943, %v2259
      %v2315 = vadd.f32 %v1944, %v2264
      %v2316 = vadd.f32 %v1945, %v2267
      %v2317 = vadd.f32 %v1946, %v2272
      %v2318 = vld [vmem:[%s165 + $0x24] sm:$0xff]
      %v2319 = vld [vmem:[%s165 + $0x2c] sm:$0xff]
      %v2320 = vld [vmem:[%s165 + $0x34] sm:$0xff]
      %v2321 = vld [vmem:[%s165 + $0x3c] sm:$0xff]
      %v2322 = vld [vmem:[%s165 + $0x44] sm:$0xff]
      %v2323 = vld [vmem:[%s165 + $0x4c] sm:$0xff]
      %v2324 = vld [vmem:[%s165 + $0x54] sm:$0xff]
      %v2325 = vld [vmem:[%s165 + $0x5c] sm:$0xff]
      %v2326 = vld [vmem:[%s165 + $0x64] sm:$0xff]
      %v2327 = vld [vmem:[%s165 + $0x6c] sm:$0xff]
      %v2328 = vld [vmem:[%s165 + $0x74] sm:$0xff]
      %v2329 = vld [vmem:[%s165 + $0x7c] sm:$0xff]
      %v2330 = vld [vmem:[%s165 + $0x84] sm:$0xff]
      %v2331 = vld [vmem:[%s165 + $0x8c] sm:$0xff]
      %v2332 = vld [vmem:[%s165 + $0x94] sm:$0xff]
      %v2333 = vld [vmem:[%s165 + $0x9c] sm:$0xff]
      %v2334 = vld [vmem:[%s165 + $0xa4] sm:$0xff]
      %v2335 = vld [vmem:[%s165 + $0xac] sm:$0xff]
      %v2336 = vld [vmem:[%s165 + $0xb4] sm:$0xff]
      %v2337 = vld [vmem:[%s165 + $0xbc] sm:$0xff]
      %v2338 = vld [vmem:[%s165 + $0xc4] sm:$0xff]
      %v2339 = vld [vmem:[%s165 + $0xcc] sm:$0xff]
      %v2340 = vld [vmem:[%s165 + $0xd4] sm:$0xff]
      %v2341 = vld [vmem:[%s165 + $0xdc] sm:$0xff]
      %v2342 = vld [vmem:[%s165 + $0xe4] sm:$0xff]
      %v2343 = vld [vmem:[%s165 + $0xec] sm:$0xff]
      %v2344 = vld [vmem:[%s165 + $0xf4] sm:$0xff]
      %v2345 = vld [vmem:[%s165 + $0xfc] sm:$0xff]
      %v2346 = vld [vmem:[%s165 + $0x104] sm:$0xff]
      %v2347 = vld [vmem:[%s165 + $0x10c] sm:$0xff]
      %v2348 = vld [vmem:[%s165 + $0x114] sm:$0xff]
      %v2349 = vld [vmem:[%s165 + $0x11c] sm:$0xff]
      %v2350 = vld [vmem:[%s165 + $0x124] sm:$0xff]
      %v2351 = vld [vmem:[%s165 + $0x12c] sm:$0xff]
      %v2352 = vld [vmem:[%s165 + $0x134] sm:$0xff]
      %v2353 = vld [vmem:[%s165 + $0x13c] sm:$0xff]
      %v2354 = vld [vmem:[%s165 + $0x144] sm:$0xff]
      %v2355 = vld [vmem:[%s165 + $0x14c] sm:$0xff]
      %v2356 = vld [vmem:[%s165 + $0x154] sm:$0xff]
      %v2357 = vld [vmem:[%s165 + $0x15c] sm:$0xff]
      %v2358 = vld [vmem:[%s165 + $0x164] sm:$0xf]
      %v2359 = vpack.c.bf16 %v2319, %v2318
      %v2360 = vpack.c.bf16 %v2321, %v2320
      %v2361 = vpack.c.bf16 %v2323, %v2322
      %v2362 = vpack.c.bf16 %v2325, %v2324
      %v2363 = vpack.c.bf16 %v2327, %v2326
      %v2364 = vpack.c.bf16 %v2329, %v2328
      %v2365 = vpack.c.bf16 %v2331, %v2330
      %v2366 = vpack.c.bf16 %v2333, %v2332
      %v2367 = vpack.c.bf16 %v2335, %v2334
      %v2368 = vpack.c.bf16 %v2337, %v2336
      %v2369 = vpack.c.bf16 %v2339, %v2338
      %v2370 = vpack.c.bf16 %v2341, %v2340
      %v2371 = vpack.c.bf16 %v2343, %v2342
      %v2372 = vpack.c.bf16 %v2345, %v2344
      %v2373 = vpack.c.bf16 %v2347, %v2346
      %v2374 = vpack.c.bf16 %v2349, %v2348
      %v2375 = vpack.c.bf16 %v2351, %v2350
      %v2376 = vpack.c.bf16 %v2353, %v2352
      %v2377 = vpack.c.bf16 %v2355, %v2354
      %v2378 = vpack.c.bf16 %v2357, %v2356
      %v2379 = vpack.c.bf16 %v2358, %v2358
      %v2380 = vld [vmem:[%s1 + $0x18] sm:$0xf]
      %v2381 = vpack.c.bf16 %v2380, %v2380
      %v2383 = vsel %vm300, %v2359, 0
      %v2386 = vsel %vm300, %v2360, 0
      %v2389 = vsel %vm300, %v2361, 0
      %v2392 = vsel %vm300, %v2362, 0
      %v2395 = vsel %vm300, %v2363, 0
      %v2398 = vsel %vm300, %v2364, 0
      %v2401 = vsel %vm300, %v2365, 0
      %v2404 = vsel %vm300, %v2366, 0
      %v2407 = vsel %vm300, %v2367, 0
      %v2410 = vsel %vm300, %v2368, 0
      %v2413 = vsel %vm300, %v2369, 0
      %v2416 = vsel %vm300, %v2370, 0
      %v2419 = vsel %vm300, %v2371, 0
      %v2422 = vsel %vm300, %v2372, 0
      %v2425 = vsel %vm300, %v2373, 0
      %v2428 = vsel %vm300, %v2374, 0
      %v2431 = vsel %vm300, %v2375, 0
      %v2434 = vsel %vm300, %v2376, 0
      %v2437 = vsel %vm300, %v2377, 0
      %v2440 = vsel %vm300, %v2378, 0
      %v2443 = vsel %vm300, %v2379, 0
      %v2446 = vsel %vm364, %v2381, 0
      %2448 = vmatprep.subr.bf16.mxu0 0
      %2449 = vmatpush1.bf16.msra.mxu0 0
      %2450 = vmatprep.subr.bf16.mxu0 0
      %2451 = vmatpush1.bf16.msra.mxu0 0
      %2452 = vmatprep.subr.bf16.mxu0 0
      %2453 = vmatpush1.bf16.msra.mxu0 0
      %2454 = vmatprep.subr.bf16.mxu0 0
      %2455 = vmatpush1.bf16.msra.mxu0 0
      %2456 = vmatprep.subr.bf16.mxu0 0
      %2457 = vmatpush1.bf16.msra.mxu0 0
      %2458 = vmatprep.subr.bf16.mxu0 0
      %2459 = vmatpush1.bf16.msra.mxu0 0
      %2460 = vmatprep.subr.bf16.mxu0 0
      %2461 = vmatpush1.bf16.msra.mxu0 0
      %2462 = vmatprep.subr.bf16.mxu0 0
      %2463 = vmatpush1.bf16.msra.mxu0 %v2446
      %2464 = vmatprep.subr.bf16.mxu0 0
      %2465 = vmatpush2.bf16.msra.mxu0 0
      %2466 = vmatprep.subr.bf16.mxu0 0
      %2467 = vmatpush2.bf16.msra.mxu0 0
      %2468 = vmatprep.subr.bf16.mxu0 0
      %2469 = vmatpush2.bf16.msra.mxu0 0
      %2470 = vmatprep.subr.bf16.mxu0 0
      %2471 = vmatpush2.bf16.msra.mxu0 0
      %2472 = vmatprep.subr.bf16.mxu0 0
      %2473 = vmatpush2.bf16.msra.mxu0 0
      %2474 = vmatprep.subr.bf16.mxu0 0
      %2475 = vmatpush2.bf16.msra.mxu0 0
      %2476 = vmatprep.subr.bf16.mxu0 0
      %2477 = vmatpush2.bf16.msra.mxu0 0
      %2478 = vmatprep.subr.bf16.mxu0 0
      %2479 = vmatpush2.bf16.msra.mxu0 0
      %2480 = vmatprep.mubr.bf16.mxu0 0
      %2481 = vmatmul.mubr.bf16.gmra.mxu0 %v2383
      %v2482 = vpop.f32.mrf.mxu0
      %v2483 = vadd.f32 0.0, %v2482
      %v2484 = vpop.f32.mrf.mxu0
      %v2485 = vpop.f32.mrf.mxu0
      %v2486 = vadd.f32 0.0, %v2485
      %v2487 = vpop.f32.mrf.mxu0
      %2488 = vmatprep.mubr.bf16.mxu0 0
      %2489 = vmatmul.mubr.bf16.gmra.mxu0 %v2386
      %v2490 = vpop.f32.mrf.mxu0
      %v2491 = vadd.f32 0.0, %v2490
      %v2492 = vpop.f32.mrf.mxu0
      %v2493 = vpop.f32.mrf.mxu0
      %v2494 = vadd.f32 0.0, %v2493
      %v2495 = vpop.f32.mrf.mxu0
      %2496 = vmatprep.mubr.bf16.mxu0 0
      %2497 = vmatmul.mubr.bf16.gmra.mxu0 %v2389
      %v2498 = vpop.f32.mrf.mxu0
      %v2499 = vadd.f32 0.0, %v2498
      %v2500 = vpop.f32.mrf.mxu0
      %v2501 = vpop.f32.mrf.mxu0
      %v2502 = vadd.f32 0.0, %v2501
      %v2503 = vpop.f32.mrf.mxu0
      %2504 = vmatprep.mubr.bf16.mxu0 0
      %2505 = vmatmul.mubr.bf16.gmra.mxu0 %v2392
      %v2506 = vpop.f32.mrf.mxu0
      %v2507 = vadd.f32 0.0, %v2506
      %v2508 = vpop.f32.mrf.mxu0
      %v2509 = vpop.f32.mrf.mxu0
      %v2510 = vadd.f32 0.0, %v2509
      %v2511 = vpop.f32.mrf.mxu0
      %2512 = vmatprep.mubr.bf16.mxu0 0
      %2513 = vmatmul.mubr.bf16.gmra.mxu0 %v2395
      %v2514 = vpop.f32.mrf.mxu0
      %v2515 = vadd.f32 0.0, %v2514
      %v2516 = vpop.f32.mrf.mxu0
      %v2517 = vpop.f32.mrf.mxu0
      %v2518 = vadd.f32 0.0, %v2517
      %v2519 = vpop.f32.mrf.mxu0
      %2520 = vmatprep.mubr.bf16.mxu0 0
      %2521 = vmatmul.mubr.bf16.gmra.mxu0 %v2398
      %v2522 = vpop.f32.mrf.mxu0
      %v2523 = vadd.f32 0.0, %v2522
      %v2524 = vpop.f32.mrf.mxu0
      %v2525 = vpop.f32.mrf.mxu0
      %v2526 = vadd.f32 0.0, %v2525
      %v2527 = vpop.f32.mrf.mxu0
      %2528 = vmatprep.mubr.bf16.mxu0 0
      %2529 = vmatmul.mubr.bf16.gmra.mxu0 %v2401
      %v2530 = vpop.f32.mrf.mxu0
      %v2531 = vadd.f32 0.0, %v2530
      %v2532 = vpop.f32.mrf.mxu0
      %v2533 = vpop.f32.mrf.mxu0
      %v2534 = vadd.f32 0.0, %v2533
      %v2535 = vpop.f32.mrf.mxu0
      %2536 = vmatprep.mubr.bf16.mxu0 0
      %2537 = vmatmul.mubr.bf16.gmra.mxu0 %v2404
      %v2538 = vpop.f32.mrf.mxu0
      %v2539 = vadd.f32 0.0, %v2538
      %v2540 = vpop.f32.mrf.mxu0
      %v2541 = vpop.f32.mrf.mxu0
      %v2542 = vadd.f32 0.0, %v2541
      %v2543 = vpop.f32.mrf.mxu0
      %2544 = vmatprep.mubr.bf16.mxu0 0
      %2545 = vmatmul.mubr.bf16.gmra.mxu0 %v2407
      %v2546 = vpop.f32.mrf.mxu0
      %v2547 = vadd.f32 0.0, %v2546
      %v2548 = vpop.f32.mrf.mxu0
      %v2549 = vpop.f32.mrf.mxu0
      %v2550 = vadd.f32 0.0, %v2549
      %v2551 = vpop.f32.mrf.mxu0
      %2552 = vmatprep.mubr.bf16.mxu0 0
      %2553 = vmatmul.mubr.bf16.gmra.mxu0 %v2410
      %v2554 = vpop.f32.mrf.mxu0
      %v2555 = vadd.f32 0.0, %v2554
      %v2556 = vpop.f32.mrf.mxu0
      %v2557 = vpop.f32.mrf.mxu0
      %v2558 = vadd.f32 0.0, %v2557
      %v2559 = vpop.f32.mrf.mxu0
      %2560 = vmatprep.mubr.bf16.mxu0 0
      %2561 = vmatmul.mubr.bf16.gmra.mxu0 %v2413
      %v2562 = vpop.f32.mrf.mxu0
      %v2563 = vadd.f32 0.0, %v2562
      %v2564 = vpop.f32.mrf.mxu0
      %v2565 = vpop.f32.mrf.mxu0
      %v2566 = vadd.f32 0.0, %v2565
      %v2567 = vpop.f32.mrf.mxu0
      %2568 = vmatprep.mubr.bf16.mxu0 0
      %2569 = vmatmul.mubr.bf16.gmra.mxu0 %v2416
      %v2570 = vpop.f32.mrf.mxu0
      %v2571 = vadd.f32 0.0, %v2570
      %v2572 = vpop.f32.mrf.mxu0
      %v2573 = vpop.f32.mrf.mxu0
      %v2574 = vadd.f32 0.0, %v2573
      %v2575 = vpop.f32.mrf.mxu0
      %2576 = vmatprep.mubr.bf16.mxu0 0
      %2577 = vmatmul.mubr.bf16.gmra.mxu0 %v2419
      %v2578 = vpop.f32.mrf.mxu0
      %v2579 = vadd.f32 0.0, %v2578
      %v2580 = vpop.f32.mrf.mxu0
      %v2581 = vpop.f32.mrf.mxu0
      %v2582 = vadd.f32 0.0, %v2581
      %v2583 = vpop.f32.mrf.mxu0
      %2584 = vmatprep.mubr.bf16.mxu0 0
      %2585 = vmatmul.mubr.bf16.gmra.mxu0 %v2422
      %v2586 = vpop.f32.mrf.mxu0
      %v2587 = vadd.f32 0.0, %v2586
      %v2588 = vpop.f32.mrf.mxu0
      %v2589 = vpop.f32.mrf.mxu0
      %v2590 = vadd.f32 0.0, %v2589
      %v2591 = vpop.f32.mrf.mxu0
      %2592 = vmatprep.mubr.bf16.mxu0 0
      %2593 = vmatmul.mubr.bf16.gmra.mxu0 %v2425
      %v2594 = vpop.f32.mrf.mxu0
      %v2595 = vadd.f32 0.0, %v2594
      %v2596 = vpop.f32.mrf.mxu0
      %v2597 = vpop.f32.mrf.mxu0
      %v2598 = vadd.f32 0.0, %v2597
      %v2599 = vpop.f32.mrf.mxu0
      %2600 = vmatprep.mubr.bf16.mxu0 0
      %2601 = vmatmul.mubr.bf16.gmra.mxu0 %v2428
      %v2602 = vpop.f32.mrf.mxu0
      %v2603 = vadd.f32 0.0, %v2602
      %v2604 = vpop.f32.mrf.mxu0
      %v2605 = vpop.f32.mrf.mxu0
      %v2606 = vadd.f32 0.0, %v2605
      %v2607 = vpop.f32.mrf.mxu0
      %2608 = vmatprep.mubr.bf16.mxu0 0
      %2609 = vmatmul.mubr.bf16.gmra.mxu0 %v2431
      %v2610 = vpop.f32.mrf.mxu0
      %v2611 = vadd.f32 0.0, %v2610
      %v2612 = vpop.f32.mrf.mxu0
      %v2613 = vpop.f32.mrf.mxu0
      %v2614 = vadd.f32 0.0, %v2613
      %v2615 = vpop.f32.mrf.mxu0
      %2616 = vmatprep.mubr.bf16.mxu0 0
      %2617 = vmatmul.mubr.bf16.gmra.mxu0 %v2434
      %v2618 = vpop.f32.mrf.mxu0
      %v2619 = vadd.f32 0.0, %v2618
      %v2620 = vpop.f32.mrf.mxu0
      %v2621 = vpop.f32.mrf.mxu0
      %v2622 = vadd.f32 0.0, %v2621
      %v2623 = vpop.f32.mrf.mxu0
      %2624 = vmatprep.mubr.bf16.mxu0 0
      %2625 = vmatmul.mubr.bf16.gmra.mxu0 %v2437
      %v2626 = vpop.f32.mrf.mxu0
      %v2627 = vadd.f32 0.0, %v2626
      %v2628 = vpop.f32.mrf.mxu0
      %v2629 = vpop.f32.mrf.mxu0
      %v2630 = vadd.f32 0.0, %v2629
      %v2631 = vpop.f32.mrf.mxu0
      %2632 = vmatprep.mubr.bf16.mxu0 0
      %2633 = vmatmul.mubr.bf16.gmra.mxu0 %v2440
      %v2634 = vpop.f32.mrf.mxu0
      %v2635 = vadd.f32 0.0, %v2634
      %v2636 = vpop.f32.mrf.mxu0
      %v2637 = vpop.f32.mrf.mxu0
      %v2638 = vadd.f32 0.0, %v2637
      %v2639 = vpop.f32.mrf.mxu0
      %2640 = vmatprep.mubr.bf16.mxu0 0
      %2641 = vmatmul.mubr.bf16.gmra.mxu0 %v2443
      %v2642 = vpop.f32.mrf.mxu0
      %v2643 = vadd.f32 0.0, %v2642
      %v2644 = vpop.f32.mrf.mxu0
      %v2645 = vpop.f32.mrf.mxu0
      %v2646 = vpop.f32.mrf.mxu0
      %2647 = vdwg.mxu0
      %v2648 = vadd.f32 %v2277, %v2483
      %v2649 = vadd.f32 %v2278, %v2486
      %v2650 = vadd.f32 %v2279, %v2491
      %v2651 = vadd.f32 %v2280, %v2494
      %v2652 = vadd.f32 %v2281, %v2499
      %v2653 = vadd.f32 %v2282, %v2502
      %v2654 = vadd.f32 %v2283, %v2507
      %v2655 = vadd.f32 %v2284, %v2510
      %v2656 = vadd.f32 %v2285, %v2515
      %v2657 = vadd.f32 %v2286, %v2518
      %v2658 = vadd.f32 %v2287, %v2523
      %v2659 = vadd.f32 %v2288, %v2526
      %v2660 = vadd.f32 %v2289, %v2531
      %v2661 = vadd.f32 %v2290, %v2534
      %v2662 = vadd.f32 %v2291, %v2539
      %v2663 = vadd.f32 %v2292, %v2542
      %v2664 = vadd.f32 %v2293, %v2547
      %v2665 = vadd.f32 %v2294, %v2550
      %v2666 = vadd.f32 %v2295, %v2555
      %v2667 = vadd.f32 %v2296, %v2558
      %v2668 = vadd.f32 %v2297, %v2563
      %v2669 = vadd.f32 %v2298, %v2566
      %v2670 = vadd.f32 %v2299, %v2571
      %v2671 = vadd.f32 %v2300, %v2574
      %v2672 = vadd.f32 %v2301, %v2579
      %v2673 = vadd.f32 %v2302, %v2582
      %v2674 = vadd.f32 %v2303, %v2587
      %v2675 = vadd.f32 %v2304, %v2590
      %v2676 = vadd.f32 %v2305, %v2595
      %v2677 = vadd.f32 %v2306, %v2598
      %v2678 = vadd.f32 %v2307, %v2603
      %v2679 = vadd.f32 %v2308, %v2606
      %v2680 = vadd.f32 %v2309, %v2611
      %v2681 = vadd.f32 %v2310, %v2614
      %v2682 = vadd.f32 %v2311, %v2619
      %v2683 = vadd.f32 %v2312, %v2622
      %v2684 = vadd.f32 %v2313, %v2627
      %v2685 = vadd.f32 %v2314, %v2630
      %v2686 = vadd.f32 %v2315, %v2635
      %v2687 = vadd.f32 %v2316, %v2638
      %v2688 = vadd.f32 %v2317, %v2643
      %v2689 = vld [vmem:[%s165 + $0x25] sm:$0xff]
      %v2690 = vld [vmem:[%s165 + $0x2d] sm:$0xff]
      %v2691 = vld [vmem:[%s165 + $0x35] sm:$0xff]
      %v2692 = vld [vmem:[%s165 + $0x3d] sm:$0xff]
      %v2693 = vld [vmem:[%s165 + $0x45] sm:$0xff]
      %v2694 = vld [vmem:[%s165 + $0x4d] sm:$0xff]
      %v2695 = vld [vmem:[%s165 + $0x55] sm:$0xff]
      %v2696 = vld [vmem:[%s165 + $0x5d] sm:$0xff]
      %v2697 = vld [vmem:[%s165 + $0x65] sm:$0xff]
      %v2698 = vld [vmem:[%s165 + $0x6d] sm:$0xff]
      %v2699 = vld [vmem:[%s165 + $0x75] sm:$0xff]
      %v2700 = vld [vmem:[%s165 + $0x7d] sm:$0xff]
      %v2701 = vld [vmem:[%s165 + $0x85] sm:$0xff]
      %v2702 = vld [vmem:[%s165 + $0x8d] sm:$0xff]
      %v2703 = vld [vmem:[%s165 + $0x95] sm:$0xff]
      %v2704 = vld [vmem:[%s165 + $0x9d] sm:$0xff]
      %v2705 = vld [vmem:[%s165 + $0xa5] sm:$0xff]
      %v2706 = vld [vmem:[%s165 + $0xad] sm:$0xff]
      %v2707 = vld [vmem:[%s165 + $0xb5] sm:$0xff]
      %v2708 = vld [vmem:[%s165 + $0xbd] sm:$0xff]
      %v2709 = vld [vmem:[%s165 + $0xc5] sm:$0xff]
      %v2710 = vld [vmem:[%s165 + $0xcd] sm:$0xff]
      %v2711 = vld [vmem:[%s165 + $0xd5] sm:$0xff]
      %v2712 = vld [vmem:[%s165 + $0xdd] sm:$0xff]
      %v2713 = vld [vmem:[%s165 + $0xe5] sm:$0xff]
      %v2714 = vld [vmem:[%s165 + $0xed] sm:$0xff]
      %v2715 = vld [vmem:[%s165 + $0xf5] sm:$0xff]
      %v2716 = vld [vmem:[%s165 + $0xfd] sm:$0xff]
      %v2717 = vld [vmem:[%s165 + $0x105] sm:$0xff]
      %v2718 = vld [vmem:[%s165 + $0x10d] sm:$0xff]
      %v2719 = vld [vmem:[%s165 + $0x115] sm:$0xff]
      %v2720 = vld [vmem:[%s165 + $0x11d] sm:$0xff]
      %v2721 = vld [vmem:[%s165 + $0x125] sm:$0xff]
      %v2722 = vld [vmem:[%s165 + $0x12d] sm:$0xff]
      %v2723 = vld [vmem:[%s165 + $0x135] sm:$0xff]
      %v2724 = vld [vmem:[%s165 + $0x13d] sm:$0xff]
      %v2725 = vld [vmem:[%s165 + $0x145] sm:$0xff]
      %v2726 = vld [vmem:[%s165 + $0x14d] sm:$0xff]
      %v2727 = vld [vmem:[%s165 + $0x155] sm:$0xff]
      %v2728 = vld [vmem:[%s165 + $0x15d] sm:$0xff]
      %v2729 = vld [vmem:[%s165 + $0x165] sm:$0xf]
      %v2730 = vpack.c.bf16 %v2690, %v2689
      %v2731 = vpack.c.bf16 %v2692, %v2691
      %v2732 = vpack.c.bf16 %v2694, %v2693
      %v2733 = vpack.c.bf16 %v2696, %v2695
      %v2734 = vpack.c.bf16 %v2698, %v2697
      %v2735 = vpack.c.bf16 %v2700, %v2699
      %v2736 = vpack.c.bf16 %v2702, %v2701
      %v2737 = vpack.c.bf16 %v2704, %v2703
      %v2738 = vpack.c.bf16 %v2706, %v2705
      %v2739 = vpack.c.bf16 %v2708, %v2707
      %v2740 = vpack.c.bf16 %v2710, %v2709
      %v2741 = vpack.c.bf16 %v2712, %v2711
      %v2742 = vpack.c.bf16 %v2714, %v2713
      %v2743 = vpack.c.bf16 %v2716, %v2715
      %v2744 = vpack.c.bf16 %v2718, %v2717
      %v2745 = vpack.c.bf16 %v2720, %v2719
      %v2746 = vpack.c.bf16 %v2722, %v2721
      %v2747 = vpack.c.bf16 %v2724, %v2723
      %v2748 = vpack.c.bf16 %v2726, %v2725
      %v2749 = vpack.c.bf16 %v2728, %v2727
      %v2750 = vpack.c.bf16 %v2729, %v2729
      %v2751 = vld [vmem:[%s1 + $0x1c] sm:$0xf]
      %v2752 = vpack.c.bf16 %v2751, %v2751
      %v2754 = vsel %vm300, %v2730, 0
      %v2757 = vsel %vm300, %v2731, 0
      %v2760 = vsel %vm300, %v2732, 0
      %v2763 = vsel %vm300, %v2733, 0
      %v2766 = vsel %vm300, %v2734, 0
      %v2769 = vsel %vm300, %v2735, 0
      %v2772 = vsel %vm300, %v2736, 0
      %v2775 = vsel %vm300, %v2737, 0
      %v2778 = vsel %vm300, %v2738, 0
      %v2781 = vsel %vm300, %v2739, 0
      %v2784 = vsel %vm300, %v2740, 0
      %v2787 = vsel %vm300, %v2741, 0
      %v2790 = vsel %vm300, %v2742, 0
      %v2793 = vsel %vm300, %v2743, 0
      %v2796 = vsel %vm300, %v2744, 0
      %v2799 = vsel %vm300, %v2745, 0
      %v2802 = vsel %vm300, %v2746, 0
      %v2805 = vsel %vm300, %v2747, 0
      %v2808 = vsel %vm300, %v2748, 0
      %v2811 = vsel %vm300, %v2749, 0
      %v2814 = vsel %vm300, %v2750, 0
      %v2817 = vsel %vm364, %v2752, 0
      %2819 = vmatprep.subr.bf16.mxu0 0
      %2820 = vmatpush1.bf16.msra.mxu0 0
      %2821 = vmatprep.subr.bf16.mxu0 0
      %2822 = vmatpush1.bf16.msra.mxu0 0
      %2823 = vmatprep.subr.bf16.mxu0 0
      %2824 = vmatpush1.bf16.msra.mxu0 0
      %2825 = vmatprep.subr.bf16.mxu0 0
      %2826 = vmatpush1.bf16.msra.mxu0 0
      %2827 = vmatprep.subr.bf16.mxu0 0
      %2828 = vmatpush1.bf16.msra.mxu0 0
      %2829 = vmatprep.subr.bf16.mxu0 0
      %2830 = vmatpush1.bf16.msra.mxu0 0
      %2831 = vmatprep.subr.bf16.mxu0 0
      %2832 = vmatpush1.bf16.msra.mxu0 0
      %2833 = vmatprep.subr.bf16.mxu0 0
      %2834 = vmatpush1.bf16.msra.mxu0 %v2817
      %2835 = vmatprep.subr.bf16.mxu0 0
      %2836 = vmatpush2.bf16.msra.mxu0 0
      %2837 = vmatprep.subr.bf16.mxu0 0
      %2838 = vmatpush2.bf16.msra.mxu0 0
      %2839 = vmatprep.subr.bf16.mxu0 0
      %2840 = vmatpush2.bf16.msra.mxu0 0
      %2841 = vmatprep.subr.bf16.mxu0 0
      %2842 = vmatpush2.bf16.msra.mxu0 0
      %2843 = vmatprep.subr.bf16.mxu0 0
      %2844 = vmatpush2.bf16.msra.mxu0 0
      %2845 = vmatprep.subr.bf16.mxu0 0
      %2846 = vmatpush2.bf16.msra.mxu0 0
      %2847 = vmatprep.subr.bf16.mxu0 0
      %2848 = vmatpush2.bf16.msra.mxu0 0
      %2849 = vmatprep.subr.bf16.mxu0 0
      %2850 = vmatpush2.bf16.msra.mxu0 0
      %2851 = vmatprep.mubr.bf16.mxu0 0
      %2852 = vmatmul.mubr.bf16.gmra.mxu0 %v2754
      %v2853 = vpop.f32.mrf.mxu0
      %v2854 = vadd.f32 0.0, %v2853
      %v2855 = vpop.f32.mrf.mxu0
      %v2856 = vpop.f32.mrf.mxu0
      %v2857 = vadd.f32 0.0, %v2856
      %v2858 = vpop.f32.mrf.mxu0
      %2859 = vmatprep.mubr.bf16.mxu0 0
      %2860 = vmatmul.mubr.bf16.gmra.mxu0 %v2757
      %v2861 = vpop.f32.mrf.mxu0
      %v2862 = vadd.f32 0.0, %v2861
      %v2863 = vpop.f32.mrf.mxu0
      %v2864 = vpop.f32.mrf.mxu0
      %v2865 = vadd.f32 0.0, %v2864
      %v2866 = vpop.f32.mrf.mxu0
      %2867 = vmatprep.mubr.bf16.mxu0 0
      %2868 = vmatmul.mubr.bf16.gmra.mxu0 %v2760
      %v2869 = vpop.f32.mrf.mxu0
      %v2870 = vadd.f32 0.0, %v2869
      %v2871 = vpop.f32.mrf.mxu0
      %v2872 = vpop.f32.mrf.mxu0
      %v2873 = vadd.f32 0.0, %v2872
      %v2874 = vpop.f32.mrf.mxu0
      %2875 = vmatprep.mubr.bf16.mxu0 0
      %2876 = vmatmul.mubr.bf16.gmra.mxu0 %v2763
      %v2877 = vpop.f32.mrf.mxu0
      %v2878 = vadd.f32 0.0, %v2877
      %v2879 = vpop.f32.mrf.mxu0
      %v2880 = vpop.f32.mrf.mxu0
      %v2881 = vadd.f32 0.0, %v2880
      %v2882 = vpop.f32.mrf.mxu0
      %2883 = vmatprep.mubr.bf16.mxu0 0
      %2884 = vmatmul.mubr.bf16.gmra.mxu0 %v2766
      %v2885 = vpop.f32.mrf.mxu0
      %v2886 = vadd.f32 0.0, %v2885
      %v2887 = vpop.f32.mrf.mxu0
      %v2888 = vpop.f32.mrf.mxu0
      %v2889 = vadd.f32 0.0, %v2888
      %v2890 = vpop.f32.mrf.mxu0
      %2891 = vmatprep.mubr.bf16.mxu0 0
      %2892 = vmatmul.mubr.bf16.gmra.mxu0 %v2769
      %v2893 = vpop.f32.mrf.mxu0
      %v2894 = vadd.f32 0.0, %v2893
      %v2895 = vpop.f32.mrf.mxu0
      %v2896 = vpop.f32.mrf.mxu0
      %v2897 = vadd.f32 0.0, %v2896
      %v2898 = vpop.f32.mrf.mxu0
      %2899 = vmatprep.mubr.bf16.mxu0 0
      %2900 = vmatmul.mubr.bf16.gmra.mxu0 %v2772
      %v2901 = vpop.f32.mrf.mxu0
      %v2902 = vadd.f32 0.0, %v2901
      %v2903 = vpop.f32.mrf.mxu0
      %v2904 = vpop.f32.mrf.mxu0
      %v2905 = vadd.f32 0.0, %v2904
      %v2906 = vpop.f32.mrf.mxu0
      %2907 = vmatprep.mubr.bf16.mxu0 0
      %2908 = vmatmul.mubr.bf16.gmra.mxu0 %v2775
      %v2909 = vpop.f32.mrf.mxu0
      %v2910 = vadd.f32 0.0, %v2909
      %v2911 = vpop.f32.mrf.mxu0
      %v2912 = vpop.f32.mrf.mxu0
      %v2913 = vadd.f32 0.0, %v2912
      %v2914 = vpop.f32.mrf.mxu0
      %2915 = vmatprep.mubr.bf16.mxu0 0
      %2916 = vmatmul.mubr.bf16.gmra.mxu0 %v2778
      %v2917 = vpop.f32.mrf.mxu0
      %v2918 = vadd.f32 0.0, %v2917
      %v2919 = vpop.f32.mrf.mxu0
      %v2920 = vpop.f32.mrf.mxu0
      %v2921 = vadd.f32 0.0, %v2920
      %v2922 = vpop.f32.mrf.mxu0
      %2923 = vmatprep.mubr.bf16.mxu0 0
      %2924 = vmatmul.mubr.bf16.gmra.mxu0 %v2781
      %v2925 = vpop.f32.mrf.mxu0
      %v2926 = vadd.f32 0.0, %v2925
      %v2927 = vpop.f32.mrf.mxu0
      %v2928 = vpop.f32.mrf.mxu0
      %v2929 = vadd.f32 0.0, %v2928
      %v2930 = vpop.f32.mrf.mxu0
      %2931 = vmatprep.mubr.bf16.mxu0 0
      %2932 = vmatmul.mubr.bf16.gmra.mxu0 %v2784
      %v2933 = vpop.f32.mrf.mxu0
      %v2934 = vadd.f32 0.0, %v2933
      %v2935 = vpop.f32.mrf.mxu0
      %v2936 = vpop.f32.mrf.mxu0
      %v2937 = vadd.f32 0.0, %v2936
      %v2938 = vpop.f32.mrf.mxu0
      %2939 = vmatprep.mubr.bf16.mxu0 0
      %2940 = vmatmul.mubr.bf16.gmra.mxu0 %v2787
      %v2941 = vpop.f32.mrf.mxu0
      %v2942 = vadd.f32 0.0, %v2941
      %v2943 = vpop.f32.mrf.mxu0
      %v2944 = vpop.f32.mrf.mxu0
      %v2945 = vadd.f32 0.0, %v2944
      %v2946 = vpop.f32.mrf.mxu0
      %2947 = vmatprep.mubr.bf16.mxu0 0
      %2948 = vmatmul.mubr.bf16.gmra.mxu0 %v2790
      %v2949 = vpop.f32.mrf.mxu0
      %v2950 = vadd.f32 0.0, %v2949
      %v2951 = vpop.f32.mrf.mxu0
      %v2952 = vpop.f32.mrf.mxu0
      %v2953 = vadd.f32 0.0, %v2952
      %v2954 = vpop.f32.mrf.mxu0
      %2955 = vmatprep.mubr.bf16.mxu0 0
      %2956 = vmatmul.mubr.bf16.gmra.mxu0 %v2793
      %v2957 = vpop.f32.mrf.mxu0
      %v2958 = vadd.f32 0.0, %v2957
      %v2959 = vpop.f32.mrf.mxu0
      %v2960 = vpop.f32.mrf.mxu0
      %v2961 = vadd.f32 0.0, %v2960
      %v2962 = vpop.f32.mrf.mxu0
      %2963 = vmatprep.mubr.bf16.mxu0 0
      %2964 = vmatmul.mubr.bf16.gmra.mxu0 %v2796
      %v2965 = vpop.f32.mrf.mxu0
      %v2966 = vadd.f32 0.0, %v2965
      %v2967 = vpop.f32.mrf.mxu0
      %v2968 = vpop.f32.mrf.mxu0
      %v2969 = vadd.f32 0.0, %v2968
      %v2970 = vpop.f32.mrf.mxu0
      %2971 = vmatprep.mubr.bf16.mxu0 0
      %2972 = vmatmul.mubr.bf16.gmra.mxu0 %v2799
      %v2973 = vpop.f32.mrf.mxu0
      %v2974 = vadd.f32 0.0, %v2973
      %v2975 = vpop.f32.mrf.mxu0
      %v2976 = vpop.f32.mrf.mxu0
      %v2977 = vadd.f32 0.0, %v2976
      %v2978 = vpop.f32.mrf.mxu0
      %2979 = vmatprep.mubr.bf16.mxu0 0
      %2980 = vmatmul.mubr.bf16.gmra.mxu0 %v2802
      %v2981 = vpop.f32.mrf.mxu0
      %v2982 = vadd.f32 0.0, %v2981
      %v2983 = vpop.f32.mrf.mxu0
      %v2984 = vpop.f32.mrf.mxu0
      %v2985 = vadd.f32 0.0, %v2984
      %v2986 = vpop.f32.mrf.mxu0
      %2987 = vmatprep.mubr.bf16.mxu0 0
      %2988 = vmatmul.mubr.bf16.gmra.mxu0 %v2805
      %v2989 = vpop.f32.mrf.mxu0
      %v2990 = vadd.f32 0.0, %v2989
      %v2991 = vpop.f32.mrf.mxu0
      %v2992 = vpop.f32.mrf.mxu0
      %v2993 = vadd.f32 0.0, %v2992
      %v2994 = vpop.f32.mrf.mxu0
      %2995 = vmatprep.mubr.bf16.mxu0 0
      %2996 = vmatmul.mubr.bf16.gmra.mxu0 %v2808
      %v2997 = vpop.f32.mrf.mxu0
      %v2998 = vadd.f32 0.0, %v2997
      %v2999 = vpop.f32.mrf.mxu0
      %v3000 = vpop.f32.mrf.mxu0
      %v3001 = vadd.f32 0.0, %v3000
      %v3002 = vpop.f32.mrf.mxu0
      %3003 = vmatprep.mubr.bf16.mxu0 0
      %3004 = vmatmul.mubr.bf16.gmra.mxu0 %v2811
      %v3005 = vpop.f32.mrf.mxu0
      %v3006 = vadd.f32 0.0, %v3005
      %v3007 = vpop.f32.mrf.mxu0
      %v3008 = vpop.f32.mrf.mxu0
      %v3009 = vadd.f32 0.0, %v3008
      %v3010 = vpop.f32.mrf.mxu0
      %3011 = vmatprep.mubr.bf16.mxu0 0
      %3012 = vmatmul.mubr.bf16.gmra.mxu0 %v2814
      %v3013 = vpop.f32.mrf.mxu0
      %v3014 = vadd.f32 0.0, %v3013
      %v3015 = vpop.f32.mrf.mxu0
      %v3016 = vpop.f32.mrf.mxu0
      %v3017 = vpop.f32.mrf.mxu0
      %3018 = vdwg.mxu0
      %v3019 = vadd.f32 %v2648, %v2854
      %v3020 = vadd.f32 %v2649, %v2857
      %v3021 = vadd.f32 %v2650, %v2862
      %v3022 = vadd.f32 %v2651, %v2865
      %v3023 = vadd.f32 %v2652, %v2870
      %v3024 = vadd.f32 %v2653, %v2873
      %v3025 = vadd.f32 %v2654, %v2878
      %v3026 = vadd.f32 %v2655, %v2881
      %v3027 = vadd.f32 %v2656, %v2886
      %v3028 = vadd.f32 %v2657, %v2889
      %v3029 = vadd.f32 %v2658, %v2894
      %v3030 = vadd.f32 %v2659, %v2897
      %v3031 = vadd.f32 %v2660, %v2902
      %v3032 = vadd.f32 %v2661, %v2905
      %v3033 = vadd.f32 %v2662, %v2910
      %v3034 = vadd.f32 %v2663, %v2913
      %v3035 = vadd.f32 %v2664, %v2918
      %v3036 = vadd.f32 %v2665, %v2921
      %v3037 = vadd.f32 %v2666, %v2926
      %v3038 = vadd.f32 %v2667, %v2929
      %v3039 = vadd.f32 %v2668, %v2934
      %v3040 = vadd.f32 %v2669, %v2937
      %v3041 = vadd.f32 %v2670, %v2942
      %v3042 = vadd.f32 %v2671, %v2945
      %v3043 = vadd.f32 %v2672, %v2950
      %v3044 = vadd.f32 %v2673, %v2953
      %v3045 = vadd.f32 %v2674, %v2958
      %v3046 = vadd.f32 %v2675, %v2961
      %v3047 = vadd.f32 %v2676, %v2966
      %v3048 = vadd.f32 %v2677, %v2969
      %v3049 = vadd.f32 %v2678, %v2974
      %v3050 = vadd.f32 %v2679, %v2977
      %v3051 = vadd.f32 %v2680, %v2982
      %v3052 = vadd.f32 %v2681, %v2985
      %v3053 = vadd.f32 %v2682, %v2990
      %v3054 = vadd.f32 %v2683, %v2993
      %v3055 = vadd.f32 %v2684, %v2998
      %v3056 = vadd.f32 %v2685, %v3001
      %v3057 = vadd.f32 %v2686, %v3006
      %v3058 = vadd.f32 %v2687, %v3009
      %v3059 = vadd.f32 %v2688, %v3014
      %v3060 = vld [vmem:[%s165 + $0x26] sm:$0xff]
      %v3061 = vld [vmem:[%s165 + $0x2e] sm:$0xff]
      %v3062 = vld [vmem:[%s165 + $0x36] sm:$0xff]
      %v3063 = vld [vmem:[%s165 + $0x3e] sm:$0xff]
      %v3064 = vld [vmem:[%s165 + $0x46] sm:$0xff]
      %v3065 = vld [vmem:[%s165 + $0x4e] sm:$0xff]
      %v3066 = vld [vmem:[%s165 + $0x56] sm:$0xff]
      %v3067 = vld [vmem:[%s165 + $0x5e] sm:$0xff]
      %v3068 = vld [vmem:[%s165 + $0x66] sm:$0xff]
      %v3069 = vld [vmem:[%s165 + $0x6e] sm:$0xff]
      %v3070 = vld [vmem:[%s165 + $0x76] sm:$0xff]
      %v3071 = vld [vmem:[%s165 + $0x7e] sm:$0xff]
      %v3072 = vld [vmem:[%s165 + $0x86] sm:$0xff]
      %v3073 = vld [vmem:[%s165 + $0x8e] sm:$0xff]
      %v3074 = vld [vmem:[%s165 + $0x96] sm:$0xff]
      %v3075 = vld [vmem:[%s165 + $0x9e] sm:$0xff]
      %v3076 = vld [vmem:[%s165 + $0xa6] sm:$0xff]
      %v3077 = vld [vmem:[%s165 + $0xae] sm:$0xff]
      %v3078 = vld [vmem:[%s165 + $0xb6] sm:$0xff]
      %v3079 = vld [vmem:[%s165 + $0xbe] sm:$0xff]
      %v3080 = vld [vmem:[%s165 + $0xc6] sm:$0xff]
      %v3081 = vld [vmem:[%s165 + $0xce] sm:$0xff]
      %v3082 = vld [vmem:[%s165 + $0xd6] sm:$0xff]
      %v3083 = vld [vmem:[%s165 + $0xde] sm:$0xff]
      %v3084 = vld [vmem:[%s165 + $0xe6] sm:$0xff]
      %v3085 = vld [vmem:[%s165 + $0xee] sm:$0xff]
      %v3086 = vld [vmem:[%s165 + $0xf6] sm:$0xff]
      %v3087 = vld [vmem:[%s165 + $0xfe] sm:$0xff]
      %v3088 = vld [vmem:[%s165 + $0x106] sm:$0xff]
      %v3089 = vld [vmem:[%s165 + $0x10e] sm:$0xff]
      %v3090 = vld [vmem:[%s165 + $0x116] sm:$0xff]
      %v3091 = vld [vmem:[%s165 + $0x11e] sm:$0xff]
      %v3092 = vld [vmem:[%s165 + $0x126] sm:$0xff]
      %v3093 = vld [vmem:[%s165 + $0x12e] sm:$0xff]
      %v3094 = vld [vmem:[%s165 + $0x136] sm:$0xff]
      %v3095 = vld [vmem:[%s165 + $0x13e] sm:$0xff]
      %v3096 = vld [vmem:[%s165 + $0x146] sm:$0xff]
      %v3097 = vld [vmem:[%s165 + $0x14e] sm:$0xff]
      %v3098 = vld [vmem:[%s165 + $0x156] sm:$0xff]
      %v3099 = vld [vmem:[%s165 + $0x15e] sm:$0xff]
      %v3100 = vld [vmem:[%s165 + $0x166] sm:$0xf]
      %v3101 = vpack.c.bf16 %v3061, %v3060
      %v3102 = vpack.c.bf16 %v3063, %v3062
      %v3103 = vpack.c.bf16 %v3065, %v3064
      %v3104 = vpack.c.bf16 %v3067, %v3066
      %v3105 = vpack.c.bf16 %v3069, %v3068
      %v3106 = vpack.c.bf16 %v3071, %v3070
      %v3107 = vpack.c.bf16 %v3073, %v3072
      %v3108 = vpack.c.bf16 %v3075, %v3074
      %v3109 = vpack.c.bf16 %v3077, %v3076
      %v3110 = vpack.c.bf16 %v3079, %v3078
      %v3111 = vpack.c.bf16 %v3081, %v3080
      %v3112 = vpack.c.bf16 %v3083, %v3082
      %v3113 = vpack.c.bf16 %v3085, %v3084
      %v3114 = vpack.c.bf16 %v3087, %v3086
      %v3115 = vpack.c.bf16 %v3089, %v3088
      %v3116 = vpack.c.bf16 %v3091, %v3090
      %v3117 = vpack.c.bf16 %v3093, %v3092
      %v3118 = vpack.c.bf16 %v3095, %v3094
      %v3119 = vpack.c.bf16 %v3097, %v3096
      %v3120 = vpack.c.bf16 %v3099, %v3098
      %v3121 = vpack.c.bf16 %v3100, %v3100
      %v3122 = vld [vmem:[%s1 + $0x20] sm:$0xf]
      %v3123 = vpack.c.bf16 %v3122, %v3122
      %v3125 = vsel %vm300, %v3101, 0
      %v3128 = vsel %vm300, %v3102, 0
      %v3131 = vsel %vm300, %v3103, 0
      %v3134 = vsel %vm300, %v3104, 0
      %v3137 = vsel %vm300, %v3105, 0
      %v3140 = vsel %vm300, %v3106, 0
      %v3143 = vsel %vm300, %v3107, 0
      %v3146 = vsel %vm300, %v3108, 0
      %v3149 = vsel %vm300, %v3109, 0
      %v3152 = vsel %vm300, %v3110, 0
      %v3155 = vsel %vm300, %v3111, 0
      %v3158 = vsel %vm300, %v3112, 0
      %v3161 = vsel %vm300, %v3113, 0
      %v3164 = vsel %vm300, %v3114, 0
      %v3167 = vsel %vm300, %v3115, 0
      %v3170 = vsel %vm300, %v3116, 0
      %v3173 = vsel %vm300, %v3117, 0
      %v3176 = vsel %vm300, %v3118, 0
      %v3179 = vsel %vm300, %v3119, 0
      %v3182 = vsel %vm300, %v3120, 0
      %v3185 = vsel %vm300, %v3121, 0
      %v3188 = vsel %vm364, %v3123, 0
      %3190 = vmatprep.subr.bf16.mxu0 0
      %3191 = vmatpush1.bf16.msra.mxu0 0
      %3192 = vmatprep.subr.bf16.mxu0 0
      %3193 = vmatpush1.bf16.msra.mxu0 0
      %3194 = vmatprep.subr.bf16.mxu0 0
      %3195 = vmatpush1.bf16.msra.mxu0 0
      %3196 = vmatprep.subr.bf16.mxu0 0
      %3197 = vmatpush1.bf16.msra.mxu0 0
      %3198 = vmatprep.subr.bf16.mxu0 0
      %3199 = vmatpush1.bf16.msra.mxu0 0
      %3200 = vmatprep.subr.bf16.mxu0 0
      %3201 = vmatpush1.bf16.msra.mxu0 0
      %3202 = vmatprep.subr.bf16.mxu0 0
      %3203 = vmatpush1.bf16.msra.mxu0 0
      %3204 = vmatprep.subr.bf16.mxu0 0
      %3205 = vmatpush1.bf16.msra.mxu0 %v3188
      %3206 = vmatprep.subr.bf16.mxu0 0
      %3207 = vmatpush2.bf16.msra.mxu0 0
      %3208 = vmatprep.subr.bf16.mxu0 0
      %3209 = vmatpush2.bf16.msra.mxu0 0
      %3210 = vmatprep.subr.bf16.mxu0 0
      %3211 = vmatpush2.bf16.msra.mxu0 0
      %3212 = vmatprep.subr.bf16.mxu0 0
      %3213 = vmatpush2.bf16.msra.mxu0 0
      %3214 = vmatprep.subr.bf16.mxu0 0
      %3215 = vmatpush2.bf16.msra.mxu0 0
      %3216 = vmatprep.subr.bf16.mxu0 0
      %3217 = vmatpush2.bf16.msra.mxu0 0
      %3218 = vmatprep.subr.bf16.mxu0 0
      %3219 = vmatpush2.bf16.msra.mxu0 0
      %3220 = vmatprep.subr.bf16.mxu0 0
      %3221 = vmatpush2.bf16.msra.mxu0 0
      %3222 = vmatprep.mubr.bf16.mxu0 0
      %3223 = vmatmul.mubr.bf16.gmra.mxu0 %v3125
      %v3224 = vpop.f32.mrf.mxu0
      %v3225 = vadd.f32 0.0, %v3224
      %v3226 = vpop.f32.mrf.mxu0
      %v3227 = vpop.f32.mrf.mxu0
      %v3228 = vadd.f32 0.0, %v3227
      %v3229 = vpop.f32.mrf.mxu0
      %3230 = vmatprep.mubr.bf16.mxu0 0
      %3231 = vmatmul.mubr.bf16.gmra.mxu0 %v3128
      %v3232 = vpop.f32.mrf.mxu0
      %v3233 = vadd.f32 0.0, %v3232
      %v3234 = vpop.f32.mrf.mxu0
      %v3235 = vpop.f32.mrf.mxu0
      %v3236 = vadd.f32 0.0, %v3235
      %v3237 = vpop.f32.mrf.mxu0
      %3238 = vmatprep.mubr.bf16.mxu0 0
      %3239 = vmatmul.mubr.bf16.gmra.mxu0 %v3131
      %v3240 = vpop.f32.mrf.mxu0
      %v3241 = vadd.f32 0.0, %v3240
      %v3242 = vpop.f32.mrf.mxu0
      %v3243 = vpop.f32.mrf.mxu0
      %v3244 = vadd.f32 0.0, %v3243
      %v3245 = vpop.f32.mrf.mxu0
      %3246 = vmatprep.mubr.bf16.mxu0 0
      %3247 = vmatmul.mubr.bf16.gmra.mxu0 %v3134
      %v3248 = vpop.f32.mrf.mxu0
      %v3249 = vadd.f32 0.0, %v3248
      %v3250 = vpop.f32.mrf.mxu0
      %v3251 = vpop.f32.mrf.mxu0
      %v3252 = vadd.f32 0.0, %v3251
      %v3253 = vpop.f32.mrf.mxu0
      %3254 = vmatprep.mubr.bf16.mxu0 0
      %3255 = vmatmul.mubr.bf16.gmra.mxu0 %v3137
      %v3256 = vpop.f32.mrf.mxu0
      %v3257 = vadd.f32 0.0, %v3256
      %v3258 = vpop.f32.mrf.mxu0
      %v3259 = vpop.f32.mrf.mxu0
      %v3260 = vadd.f32 0.0, %v3259
      %v3261 = vpop.f32.mrf.mxu0
      %3262 = vmatprep.mubr.bf16.mxu0 0
      %3263 = vmatmul.mubr.bf16.gmra.mxu0 %v3140
      %v3264 = vpop.f32.mrf.mxu0
      %v3265 = vadd.f32 0.0, %v3264
      %v3266 = vpop.f32.mrf.mxu0
      %v3267 = vpop.f32.mrf.mxu0
      %v3268 = vadd.f32 0.0, %v3267
      %v3269 = vpop.f32.mrf.mxu0
      %3270 = vmatprep.mubr.bf16.mxu0 0
      %3271 = vmatmul.mubr.bf16.gmra.mxu0 %v3143
      %v3272 = vpop.f32.mrf.mxu0
      %v3273 = vadd.f32 0.0, %v3272
      %v3274 = vpop.f32.mrf.mxu0
      %v3275 = vpop.f32.mrf.mxu0
      %v3276 = vadd.f32 0.0, %v3275
      %v3277 = vpop.f32.mrf.mxu0
      %3278 = vmatprep.mubr.bf16.mxu0 0
      %3279 = vmatmul.mubr.bf16.gmra.mxu0 %v3146
      %v3280 = vpop.f32.mrf.mxu0
      %v3281 = vadd.f32 0.0, %v3280
      %v3282 = vpop.f32.mrf.mxu0
      %v3283 = vpop.f32.mrf.mxu0
      %v3284 = vadd.f32 0.0, %v3283
      %v3285 = vpop.f32.mrf.mxu0
      %3286 = vmatprep.mubr.bf16.mxu0 0
      %3287 = vmatmul.mubr.bf16.gmra.mxu0 %v3149
      %v3288 = vpop.f32.mrf.mxu0
      %v3289 = vadd.f32 0.0, %v3288
      %v3290 = vpop.f32.mrf.mxu0
      %v3291 = vpop.f32.mrf.mxu0
      %v3292 = vadd.f32 0.0, %v3291
      %v3293 = vpop.f32.mrf.mxu0
      %3294 = vmatprep.mubr.bf16.mxu0 0
      %3295 = vmatmul.mubr.bf16.gmra.mxu0 %v3152
      %v3296 = vpop.f32.mrf.mxu0
      %v3297 = vadd.f32 0.0, %v3296
      %v3298 = vpop.f32.mrf.mxu0
      %v3299 = vpop.f32.mrf.mxu0
      %v3300 = vadd.f32 0.0, %v3299
      %v3301 = vpop.f32.mrf.mxu0
      %3302 = vmatprep.mubr.bf16.mxu0 0
      %3303 = vmatmul.mubr.bf16.gmra.mxu0 %v3155
      %v3304 = vpop.f32.mrf.mxu0
      %v3305 = vadd.f32 0.0, %v3304
      %v3306 = vpop.f32.mrf.mxu0
      %v3307 = vpop.f32.mrf.mxu0
      %v3308 = vadd.f32 0.0, %v3307
      %v3309 = vpop.f32.mrf.mxu0
      %3310 = vmatprep.mubr.bf16.mxu0 0
      %3311 = vmatmul.mubr.bf16.gmra.mxu0 %v3158
      %v3312 = vpop.f32.mrf.mxu0
      %v3313 = vadd.f32 0.0, %v3312
      %v3314 = vpop.f32.mrf.mxu0
      %v3315 = vpop.f32.mrf.mxu0
      %v3316 = vadd.f32 0.0, %v3315
      %v3317 = vpop.f32.mrf.mxu0
      %3318 = vmatprep.mubr.bf16.mxu0 0
      %3319 = vmatmul.mubr.bf16.gmra.mxu0 %v3161
      %v3320 = vpop.f32.mrf.mxu0
      %v3321 = vadd.f32 0.0, %v3320
      %v3322 = vpop.f32.mrf.mxu0
      %v3323 = vpop.f32.mrf.mxu0
      %v3324 = vadd.f32 0.0, %v3323
      %v3325 = vpop.f32.mrf.mxu0
      %3326 = vmatprep.mubr.bf16.mxu0 0
      %3327 = vmatmul.mubr.bf16.gmra.mxu0 %v3164
      %v3328 = vpop.f32.mrf.mxu0
      %v3329 = vadd.f32 0.0, %v3328
      %v3330 = vpop.f32.mrf.mxu0
      %v3331 = vpop.f32.mrf.mxu0
      %v3332 = vadd.f32 0.0, %v3331
      %v3333 = vpop.f32.mrf.mxu0
      %3334 = vmatprep.mubr.bf16.mxu0 0
      %3335 = vmatmul.mubr.bf16.gmra.mxu0 %v3167
      %v3336 = vpop.f32.mrf.mxu0
      %v3337 = vadd.f32 0.0, %v3336
      %v3338 = vpop.f32.mrf.mxu0
      %v3339 = vpop.f32.mrf.mxu0
      %v3340 = vadd.f32 0.0, %v3339
      %v3341 = vpop.f32.mrf.mxu0
      %3342 = vmatprep.mubr.bf16.mxu0 0
      %3343 = vmatmul.mubr.bf16.gmra.mxu0 %v3170
      %v3344 = vpop.f32.mrf.mxu0
      %v3345 = vadd.f32 0.0, %v3344
      %v3346 = vpop.f32.mrf.mxu0
      %v3347 = vpop.f32.mrf.mxu0
      %v3348 = vadd.f32 0.0, %v3347
      %v3349 = vpop.f32.mrf.mxu0
      %3350 = vmatprep.mubr.bf16.mxu0 0
      %3351 = vmatmul.mubr.bf16.gmra.mxu0 %v3173
      %v3352 = vpop.f32.mrf.mxu0
      %v3353 = vadd.f32 0.0, %v3352
      %v3354 = vpop.f32.mrf.mxu0
      %v3355 = vpop.f32.mrf.mxu0
      %v3356 = vadd.f32 0.0, %v3355
      %v3357 = vpop.f32.mrf.mxu0
      %3358 = vmatprep.mubr.bf16.mxu0 0
      %3359 = vmatmul.mubr.bf16.gmra.mxu0 %v3176
      %v3360 = vpop.f32.mrf.mxu0
      %v3361 = vadd.f32 0.0, %v3360
      %v3362 = vpop.f32.mrf.mxu0
      %v3363 = vpop.f32.mrf.mxu0
      %v3364 = vadd.f32 0.0, %v3363
      %v3365 = vpop.f32.mrf.mxu0
      %3366 = vmatprep.mubr.bf16.mxu0 0
      %3367 = vmatmul.mubr.bf16.gmra.mxu0 %v3179
      %v3368 = vpop.f32.mrf.mxu0
      %v3369 = vadd.f32 0.0, %v3368
      %v3370 = vpop.f32.mrf.mxu0
      %v3371 = vpop.f32.mrf.mxu0
      %v3372 = vadd.f32 0.0, %v3371
      %v3373 = vpop.f32.mrf.mxu0
      %3374 = vmatprep.mubr.bf16.mxu0 0
      %3375 = vmatmul.mubr.bf16.gmra.mxu0 %v3182
      %v3376 = vpop.f32.mrf.mxu0
      %v3377 = vadd.f32 0.0, %v3376
      %v3378 = vpop.f32.mrf.mxu0
      %v3379 = vpop.f32.mrf.mxu0
      %v3380 = vadd.f32 0.0, %v3379
      %v3381 = vpop.f32.mrf.mxu0
      %3382 = vmatprep.mubr.bf16.mxu0 0
      %3383 = vmatmul.mubr.bf16.gmra.mxu0 %v3185
      %v3384 = vpop.f32.mrf.mxu0
      %v3385 = vadd.f32 0.0, %v3384
      %v3386 = vpop.f32.mrf.mxu0
      %v3387 = vpop.f32.mrf.mxu0
      %v3388 = vpop.f32.mrf.mxu0
      %3389 = vdwg.mxu0
      %v3390 = vadd.f32 %v3019, %v3225
      %v3391 = vadd.f32 %v3020, %v3228
      %v3392 = vadd.f32 %v3021, %v3233
      %v3393 = vadd.f32 %v3022, %v3236
      %v3394 = vadd.f32 %v3023, %v3241
      %v3395 = vadd.f32 %v3024, %v3244
      %v3396 = vadd.f32 %v3025, %v3249
      %v3397 = vadd.f32 %v3026, %v3252
      %v3398 = vadd.f32 %v3027, %v3257
      %v3399 = vadd.f32 %v3028, %v3260
      %v3400 = vadd.f32 %v3029, %v3265
      %v3401 = vadd.f32 %v3030, %v3268
      %v3402 = vadd.f32 %v3031, %v3273
      %v3403 = vadd.f32 %v3032, %v3276
      %v3404 = vadd.f32 %v3033, %v3281
      %v3405 = vadd.f32 %v3034, %v3284
      %v3406 = vadd.f32 %v3035, %v3289
      %v3407 = vadd.f32 %v3036, %v3292
      %v3408 = vadd.f32 %v3037, %v3297
      %v3409 = vadd.f32 %v3038, %v3300
      %v3410 = vadd.f32 %v3039, %v3305
      %v3411 = vadd.f32 %v3040, %v3308
      %v3412 = vadd.f32 %v3041, %v3313
      %v3413 = vadd.f32 %v3042, %v3316
      %v3414 = vadd.f32 %v3043, %v3321
      %v3415 = vadd.f32 %v3044, %v3324
      %v3416 = vadd.f32 %v3045, %v3329
      %v3417 = vadd.f32 %v3046, %v3332
      %v3418 = vadd.f32 %v3047, %v3337
      %v3419 = vadd.f32 %v3048, %v3340
      %v3420 = vadd.f32 %v3049, %v3345
      %v3421 = vadd.f32 %v3050, %v3348
      %v3422 = vadd.f32 %v3051, %v3353
      %v3423 = vadd.f32 %v3052, %v3356
      %v3424 = vadd.f32 %v3053, %v3361
      %v3425 = vadd.f32 %v3054, %v3364
      %v3426 = vadd.f32 %v3055, %v3369
      %v3427 = vadd.f32 %v3056, %v3372
      %v3428 = vadd.f32 %v3057, %v3377
      %v3429 = vadd.f32 %v3058, %v3380
      %v3430 = vadd.f32 %v3059, %v3385
      %v3431 = vld [vmem:[%s2] sm:$0x1]
      %v3433 = vlaneseq
      %v3434 = vshrl.u32 %v3433, 7
      %v3435 = vsub.s32 0, %v3434
      %v3436 = vrot.slane %v3431, %v3435
      %v3438 = vadd.f32 %v3390, %v3436
      %v3439 = vadd.f32 %v3391, %v3436
      %v3440 = vadd.f32 %v3392, %v3436
      %v3441 = vadd.f32 %v3393, %v3436
      %v3442 = vadd.f32 %v3394, %v3436
      %v3443 = vadd.f32 %v3395, %v3436
      %v3444 = vadd.f32 %v3396, %v3436
      %v3445 = vadd.f32 %v3397, %v3436
      %v3446 = vadd.f32 %v3398, %v3436
      %v3447 = vadd.f32 %v3399, %v3436
      %v3448 = vadd.f32 %v3400, %v3436
      %v3449 = vadd.f32 %v3401, %v3436
      %v3450 = vadd.f32 %v3402, %v3436
      %v3451 = vadd.f32 %v3403, %v3436
      %v3452 = vadd.f32 %v3404, %v3436
      %v3453 = vadd.f32 %v3405, %v3436
      %v3454 = vadd.f32 %v3406, %v3436
      %v3455 = vadd.f32 %v3407, %v3436
      %v3456 = vadd.f32 %v3408, %v3436
      %v3457 = vadd.f32 %v3409, %v3436
      %v3458 = vadd.f32 %v3410, %v3436
      %v3459 = vadd.f32 %v3411, %v3436
      %v3460 = vadd.f32 %v3412, %v3436
      %v3461 = vadd.f32 %v3413, %v3436
      %v3462 = vadd.f32 %v3414, %v3436
      %v3463 = vadd.f32 %v3415, %v3436
      %v3464 = vadd.f32 %v3416, %v3436
      %v3465 = vadd.f32 %v3417, %v3436
      %v3466 = vadd.f32 %v3418, %v3436
      %v3467 = vadd.f32 %v3419, %v3436
      %v3468 = vadd.f32 %v3420, %v3436
      %v3469 = vadd.f32 %v3421, %v3436
      %v3470 = vadd.f32 %v3422, %v3436
      %v3471 = vadd.f32 %v3423, %v3436
      %v3472 = vadd.f32 %v3424, %v3436
      %v3473 = vadd.f32 %v3425, %v3436
      %v3474 = vadd.f32 %v3426, %v3436
      %v3475 = vadd.f32 %v3427, %v3436
      %v3476 = vadd.f32 %v3428, %v3436
      %v3477 = vadd.f32 %v3429, %v3436
      %v3478 = vadd.f32 %v3430, %v3436
      %v3479 = vmax.f32 %v3438, 0.0
      %v3480 = vmax.f32 %v3439, 0.0
      %v3481 = vmax.f32 %v3440, 0.0
      %v3482 = vmax.f32 %v3441, 0.0
      %v3483 = vmax.f32 %v3442, 0.0
      %v3484 = vmax.f32 %v3443, 0.0
      %v3485 = vmax.f32 %v3444, 0.0
      %v3486 = vmax.f32 %v3445, 0.0
      %v3487 = vmax.f32 %v3446, 0.0
      %v3488 = vmax.f32 %v3447, 0.0
      %v3489 = vmax.f32 %v3448, 0.0
      %v3490 = vmax.f32 %v3449, 0.0
      %v3491 = vmax.f32 %v3450, 0.0
      %v3492 = vmax.f32 %v3451, 0.0
      %v3493 = vmax.f32 %v3452, 0.0
      %v3494 = vmax.f32 %v3453, 0.0
      %v3495 = vmax.f32 %v3454, 0.0
      %v3496 = vmax.f32 %v3455, 0.0
      %v3497 = vmax.f32 %v3456, 0.0
      %v3498 = vmax.f32 %v3457, 0.0
      %v3499 = vmax.f32 %v3458, 0.0
      %v3500 = vmax.f32 %v3459, 0.0
      %v3501 = vmax.f32 %v3460, 0.0
      %v3502 = vmax.f32 %v3461, 0.0
      %v3503 = vmax.f32 %v3462, 0.0
      %v3504 = vmax.f32 %v3463, 0.0
      %v3505 = vmax.f32 %v3464, 0.0
      %v3506 = vmax.f32 %v3465, 0.0
      %v3507 = vmax.f32 %v3466, 0.0
      %v3508 = vmax.f32 %v3467, 0.0
      %v3509 = vmax.f32 %v3468, 0.0
      %v3510 = vmax.f32 %v3469, 0.0
      %v3511 = vmax.f32 %v3470, 0.0
      %v3512 = vmax.f32 %v3471, 0.0
      %v3513 = vmax.f32 %v3472, 0.0
      %v3514 = vmax.f32 %v3473, 0.0
      %v3515 = vmax.f32 %v3474, 0.0
      %v3516 = vmax.f32 %v3475, 0.0
      %v3517 = vmax.f32 %v3476, 0.0
      %v3518 = vmax.f32 %v3477, 0.0
      %v3519 = vmax.f32 %v3478, 0.0
      %vm3520 = vcmask 261120
      %3521 = vst.msk [vmem:[%s170] sm:$0xff] %vm3520, %v3479
      %3522 = vst.msk [vmem:[%s170 + $0x8] sm:$0xff] %vm3520, %v3480
      %3523 = vst.msk [vmem:[%s170 + $0x10] sm:$0xff] %vm3520, %v3481
      %3524 = vst.msk [vmem:[%s170 + $0x18] sm:$0xff] %vm3520, %v3482
      %3525 = vst.msk [vmem:[%s170 + $0x20] sm:$0xff] %vm3520, %v3483
      %3526 = vst.msk [vmem:[%s170 + $0x28] sm:$0xff] %vm3520, %v3484
      %3527 = vst.msk [vmem:[%s170 + $0x30] sm:$0xff] %vm3520, %v3485
      %3528 = vst.msk [vmem:[%s170 + $0x38] sm:$0xff] %vm3520, %v3486
      %3529 = vst.msk [vmem:[%s170 + $0x40] sm:$0xff] %vm3520, %v3487
      %3530 = vst.msk [vmem:[%s170 + $0x48] sm:$0xff] %vm3520, %v3488
      %3531 = vst.msk [vmem:[%s170 + $0x50] sm:$0xff] %vm3520, %v3489
      %3532 = vst.msk [vmem:[%s170 + $0x58] sm:$0xff] %vm3520, %v3490
      %3533 = vst.msk [vmem:[%s170 + $0x60] sm:$0xff] %vm3520, %v3491
      %3534 = vst.msk [vmem:[%s170 + $0x68] sm:$0xff] %vm3520, %v3492
      %3535 = vst.msk [vmem:[%s170 + $0x70] sm:$0xff] %vm3520, %v3493
      %3536 = vst.msk [vmem:[%s170 + $0x78] sm:$0xff] %vm3520, %v3494
      %3537 = vst.msk [vmem:[%s170 + $0x80] sm:$0xff] %vm3520, %v3495
      %3538 = vst.msk [vmem:[%s170 + $0x88] sm:$0xff] %vm3520, %v3496
      %3539 = vst.msk [vmem:[%s170 + $0x90] sm:$0xff] %vm3520, %v3497
      %3540 = vst.msk [vmem:[%s170 + $0x98] sm:$0xff] %vm3520, %v3498
      %3541 = vst.msk [vmem:[%s170 + $0xa0] sm:$0xff] %vm3520, %v3499
      %3542 = vst.msk [vmem:[%s170 + $0xa8] sm:$0xff] %vm3520, %v3500
      %3543 = vst.msk [vmem:[%s170 + $0xb0] sm:$0xff] %vm3520, %v3501
      %3544 = vst.msk [vmem:[%s170 + $0xb8] sm:$0xff] %vm3520, %v3502
      %3545 = vst.msk [vmem:[%s170 + $0xc0] sm:$0xff] %vm3520, %v3503
      %3546 = vst.msk [vmem:[%s170 + $0xc8] sm:$0xff] %vm3520, %v3504
      %3547 = vst.msk [vmem:[%s170 + $0xd0] sm:$0xff] %vm3520, %v3505
      %3548 = vst.msk [vmem:[%s170 + $0xd8] sm:$0xff] %vm3520, %v3506
      %3549 = vst.msk [vmem:[%s170 + $0xe0] sm:$0xff] %vm3520, %v3507
      %3550 = vst.msk [vmem:[%s170 + $0xe8] sm:$0xff] %vm3520, %v3508
      %3551 = vst.msk [vmem:[%s170 + $0xf0] sm:$0xff] %vm3520, %v3509
      %3552 = vst.msk [vmem:[%s170 + $0xf8] sm:$0xff] %vm3520, %v3510
      %3553 = vst.msk [vmem:[%s170 + $0x100] sm:$0xff] %vm3520, %v3511
      %3554 = vst.msk [vmem:[%s170 + $0x108] sm:$0xff] %vm3520, %v3512
      %3555 = vst.msk [vmem:[%s170 + $0x110] sm:$0xff] %vm3520, %v3513
      %3556 = vst.msk [vmem:[%s170 + $0x118] sm:$0xff] %vm3520, %v3514
      %3557 = vst.msk [vmem:[%s170 + $0x120] sm:$0xff] %vm3520, %v3515
      %3558 = vst.msk [vmem:[%s170 + $0x128] sm:$0xff] %vm3520, %v3516
      %3559 = vst.msk [vmem:[%s170 + $0x130] sm:$0xff] %vm3520, %v3517
      %3560 = vst.msk [vmem:[%s170 + $0x138] sm:$0xff] %vm3520, %v3518
      %vm3561 = vcmask 257024
      %3562 = vst.msk [vmem:[%s170 + $0x140] sm:$0xf] %vm3561, %v3519
      %p3563 = scmp.lt.s32.totalorder %s14, 1
      %s3564 = scalar_select %p3563, %s14, 1
      %s3565 = smul.addr %s3564, 41
      %s3566 = smul.addr %s3565, 8
      %s3567 = scalar_lea.vmem %s3, %s3566
      // Predicated region
      $region33: #{tpu_custom_call.1} parent=31 // pred_check
        %p3568 = pneg %p100
      $region34: #{tpu_custom_call.1} parent=31 // pred_check_branch
        %3570 = sbr.rel (%p3568) target = $region36
      $region35: #{tpu_custom_call.1} parent=31 // pred_region
        _
      $region36: #{tpu_custom_call.1} parent=31 // pred_fallthru
        _
    $region32: #{tpu_custom_call.1} parent=5 // pred_fallthru
      _
    %p3571 = scmp.le.s32.totalorder 2, %s9
    // Predicated region
    $region37: #{tpu_custom_call.1} parent=5 // pred_check
      %p3572 = pneg %p3571
    $region38: #{tpu_custom_call.1} parent=5 // pred_check_branch
      %3574 = sbr.rel (%p3572) target = $region40
    $region39: #{tpu_custom_call.1} parent=5 // pred_region
      %s3575 = ssub.s32 %s9, 2
      // Predicated region
      $region41: #{tpu_custom_call.1} parent=39 // pred_check
        %p3576 = pneg %p106
      $region42: #{tpu_custom_call.1} parent=39 // pred_check_branch
        %3578 = sbr.rel (%p3576) target = $region44
      $region43: #{tpu_custom_call.1} parent=39 // pred_region
        %p3579 = scmp.lt.s32.totalorder %s15, 1
        %s3580 = scalar_select %p3579, %s15, 1
        %s3581 = smul.addr %s3580, 41
        %s3582 = smul.addr %s3581, 8
        %s3583 = scalar_lea.vmem %s3, %s3582
      $region44: #{tpu_custom_call.1} parent=39 // pred_fallthru
        _
    $region40: #{tpu_custom_call.1} parent=5 // pred_fallthru
      _
  $region6: #{tpu_custom_call.1} parent=0 // loop_footer
    %s13 = sadd.s32 1, %s9
  $region7: #{tpu_custom_call.1} parent=0 // loop_footer_branch
    %8 = sbr.rel target = $region3
  $region8: #{tpu_custom_call.1} parent=0 // loop_exit
    _

</llo_original>
